<compile_context>
chip_gen: v7x
topology: tpu7x:2x2x1
jax: 0.10.0
libtpu: 0.0.40
codegen_flags: <defaults>
</compile_context>

<pallas_src>
import functools
import math

import jax
import jax.numpy as jnp
from jax.experimental import pallas as pl
from jax.experimental.pallas import tpu as pltpu

LN_EPS = 1e-5  # matches torch.nn.LayerNorm default


def _layer_norm(x, g, b):
    mu = jnp.mean(x, axis=-1, keepdims=True)
    c = x - mu
    var = jnp.mean(c * c, axis=-1, keepdims=True)
    return c * jax.lax.rsqrt(var + LN_EPS) * g + b


def _vmem_limit(nbytes):
    # Never below the 32 MiB scoped default (what the toy sizes need anyway).
    return int(min(100 * 1024 * 1024, max(32 * 1024 * 1024, nbytes)))


def _pick_batch_tile(B, S, row_target=512):
    """Largest batch tile that (a) keeps ~row_target token rows per grid step,
    (b) divides B exactly, and (c) leaves >= 2 grid tiles so both v7x
    TensorCores get work."""
    bt = max(1, min(B, row_target // max(S, 1)))
    while bt > 1 and (B % bt != 0 or B // bt < 2):
        bt -= 1
    return bt


# ----------------------------------------------------------------------------
# Fused encoder kernel: grid = (batch_tiles, layers).
# The residual stream stays resident in VMEM scratch across the layer axis.
# ----------------------------------------------------------------------------
def encoder_layers_kernel(x_ref, bias_ref,
                          wq_ref, bq_ref, wk_ref, bk_ref, wv_ref, bv_ref,
                          wo_ref, bo_ref, g1_ref, be1_ref,
                          w1_ref, b1_ref, w2_ref, b2_ref, g2_ref, be2_ref,
                          o_ref, h_ref, *, heads):
    layer = pl.program_id(1)

    # Layer 0: load the (token + positional) embedding block into the resident
    # activation scratch for this batch tile.
    @pl.when(layer == 0)
    def _():
        h_ref[...] = x_ref[...]

    bt, S, D = h_ref.shape
    dh = D // heads
    rows = bt * S

    x = h_ref[...]                               # (bt, S, D) f32 residual stream
    x2 = x.reshape(rows, D)                      # flatten token rows (free)
    xb = x2.astype(jnp.bfloat16)                 # bf16 MXU operand, f32 accumulate
    bias = bias_ref[...]                         # (bt, 1, S) additive -1e9 key mask

    # ---------------- multi-head attention ----------------
    # Head-major weights: each head is a contiguous (D, dh) tile -> full K=D
    # projections and no masked lane slicing of q/k/v. 1/sqrt(dh) is already
    # folded into wq/bq.
    ctxs = []
    for h in range(heads):                       # static unroll over heads
        q = jnp.dot(xb, wq_ref[0, h], preferred_element_type=jnp.float32) + bq_ref[0, h]
        k = jnp.dot(xb, wk_ref[0, h], preferred_element_type=jnp.float32) + bk_ref[0, h]
        v = jnp.dot(xb, wv_ref[0, h], preferred_element_type=jnp.float32) + bv_ref[0, h]
        q3 = q.reshape(bt, S, dh).astype(jnp.bfloat16)
        k3 = k.reshape(bt, S, dh).astype(jnp.bfloat16)
        v3 = v.reshape(bt, S, dh).astype(jnp.bfloat16)

        # contract last dims directly (no explicit transpose of K)
        s = jnp.einsum('bqe,bke->bqk', q3, k3,
                       preferred_element_type=jnp.float32)      # (bt, S, S) f32
        s = s + bias                                            # mask padded keys
        s = s - jnp.max(s, axis=-1, keepdims=True)
        p = jnp.exp(s)
        p = p * pl.reciprocal(jnp.sum(p, axis=-1, keepdims=True), approx=True)
        ctx = jnp.einsum('bqk,bke->bqe', p.astype(jnp.bfloat16), v3,
                         preferred_element_type=jnp.float32)    # (bt, S, dh)
        ctxs.append(ctx.reshape(rows, dh))

    # Single full-width (K = D) output projection over the concatenated heads.
    ctx_all = jnp.concatenate(ctxs, axis=-1).astype(jnp.bfloat16)   # (rows, D)
    attn = jnp.dot(ctx_all, wo_ref[0], preferred_element_type=jnp.float32) + bo_ref[0]

    x1 = _layer_norm(x2 + attn, g1_ref[0], be1_ref[0])          # f32

    # ---------------- feed-forward ----------------
    hmid = jnp.dot(x1.astype(jnp.bfloat16), w1_ref[0],
                   preferred_element_type=jnp.float32) + b1_ref[0]
    hmid = jnp.maximum(hmid, 0.0)
    ff = jnp.dot(hmid.astype(jnp.bfloat16), w2_ref[0],
                 preferred_element_type=jnp.float32) + b2_ref[0]
    x_out = _layer_norm(x1 + ff, g2_ref[0], be2_ref[0])

    h_ref[...] = x_out.reshape(bt, S, D)

    # Write the HBM output block only after the last layer for this batch tile.
    @pl.when(layer == pl.num_programs(1) - 1)
    def _():
        o_ref[...] = h_ref[...]


def run_encoder(x, source_mask, params, heads, *, row_target=512):
    B, S, D = x.shape
    L = params["wo"].shape[0]
    H = params["wq"].shape[1]
    dh = params["wq"].shape[3]
    Di = params["w1"].shape[2]
    assert H == heads and H * dh == D

    bt = _pick_batch_tile(B, S, row_target)
    nb = B // bt

    # Additive key-mask bias, computed ONCE outside the kernel.
    bias = ((source_mask.astype(jnp.float32) - 1.0) * 1e9).reshape(B, 1, S)

    act_map = lambda b, l: (b, 0, 0)
    lyr3 = lambda b, l: (l, 0, 0)
    lyr4 = lambda b, l: (l, 0, 0, 0)

    in_specs = [
        pl.BlockSpec((bt, S, D), act_map),        # embeddings (resident over l)
        pl.BlockSpec((bt, 1, S), act_map),        # additive key-mask bias
        pl.BlockSpec((1, H, D, dh), lyr4),        # wq (scaled by 1/sqrt(dh))
        pl.BlockSpec((1, H, 1, dh), lyr4),        # bq
        pl.BlockSpec((1, H, D, dh), lyr4),        # wk
        pl.BlockSpec((1, H, 1, dh), lyr4),        # bk
        pl.BlockSpec((1, H, D, dh), lyr4),        # wv
        pl.BlockSpec((1, H, 1, dh), lyr4),        # bv
        pl.BlockSpec((1, D, D), lyr3),            # wo
        pl.BlockSpec((1, 1, D), lyr3),            # bo
        pl.BlockSpec((1, 1, D), lyr3),            # ln1 gamma
        pl.BlockSpec((1, 1, D), lyr3),            # ln1 beta
        pl.BlockSpec((1, D, Di), lyr3),           # ffn w1
        pl.BlockSpec((1, 1, Di), lyr3),           # ffn b1
        pl.BlockSpec((1, Di, D), lyr3),           # ffn w2
        pl.BlockSpec((1, 1, D), lyr3),            # ffn b2
        pl.BlockSpec((1, 1, D), lyr3),            # ln2 gamma
        pl.BlockSpec((1, 1, D), lyr3),            # ln2 beta
    ]
    out_spec = pl.BlockSpec((bt, S, D), act_map)

    # Size the scoped VMEM request from the per-layer weight footprint
    # (bf16, double-buffered across the layer axis) plus activation tiles.
    wbytes = (4 * D * D + 2 * D * Di) * 2
    act = bt * S * D * 4
    vmem = _vmem_limit(4 * wbytes + 12 * act + (2 << 20))

    kern = functools.partial(encoder_layers_kernel, heads=heads)
    return pl.pallas_call(
        kern,
        out_shape=jax.ShapeDtypeStruct((B, S, D), jnp.float32),
        grid=(nb, L),
        in_specs=in_specs,
        out_specs=out_spec,
        scratch_shapes=[pltpu.VMEM((bt, S, D), jnp.float32)],
        compiler_params=pltpu.CompilerParams(
            dimension_semantics=("parallel", "arbitrary"),
            vmem_limit_bytes=vmem),
    )(x, bias,
      params["wq"], params["bq"], params["wk"], params["bk"],
      params["wv"], params["bv"], params["wo"], params["bo"],
      params["g1"], params["be1"], params["w1"], params["b1"],
      params["w2"], params["b2"], params["g2"], params["be2"])


# ----------------------------------------------------------------------------
# rec head: (rows, D) @ (D, V) + b, tiled over rows and over the vocab axis
# so the weight streams through VMEM and the output stays lane-dense.
# ----------------------------------------------------------------------------
def rec_kernel(x_ref, w_ref, b_ref, o_ref):
    o_ref[...] = (jnp.dot(x_ref[...], w_ref[...],
                          preferred_element_type=jnp.float32) + b_ref[...])


def run_rec(x2, w, b, *, row_tile=512, vocab_tile=2048):
    rows, D = x2.shape
    V = w.shape[1]

    tr = min(row_tile, rows)
    while rows % tr != 0:
        tr -= 1
    tv = min(vocab_tile, V)
    if tv < V and tv % 128 != 0:      # tiny vocab: just take the whole axis
        tv = V
    grid = (rows // tr, pl.cdiv(V, tv))

    vmem = _vmem_limit(4 * D * tv * 2 + 4 * tr * tv * 4 + tr * D * 4 + (2 << 20))
    return pl.pallas_call(
        rec_kernel,
        out_shape=jax.ShapeDtypeStruct((rows, V), jnp.float32),
        grid=grid,
        in_specs=[
            pl.BlockSpec((tr, D), lambda i, j: (i, 0)),   # activations (resident over j)
            pl.BlockSpec((D, tv), lambda i, j: (0, j)),   # vocab-tiled weights
            pl.BlockSpec((1, tv), lambda i, j: (0, j)),   # bias tile
        ],
        out_specs=pl.BlockSpec((tr, tv), lambda i, j: (i, j)),  # lane-dense (V last)
        compiler_params=pltpu.CompilerParams(
            dimension_semantics=("parallel", "parallel"),
            vmem_limit_bytes=vmem),
    )(x2, w, b)


# ----------------------------------------------------------------------------
# Parameter init (stacked per-layer, head-major, mixed precision) + forward.
# ----------------------------------------------------------------------------
def init_params(key, vocab_size, emb_dim, layers, heads, num_pos, pad_id):
    D, H = emb_dim, heads
    dh = D // H
    Di = 4 * D
    ks = jax.random.split(key, 3 + layers)

    def dense(k, shape, scale=0.02):
        return jax.random.normal(k, shape, jnp.float32) * scale

    tok = dense(ks[0], (vocab_size, D)).at[pad_id].set(0.0)   # padding_idx row zeroed
    pos = dense(ks[1], (num_pos, D))
    rec_w = dense(ks[2], (D, vocab_size))
    rec_b = jnp.zeros((1, vocab_size), jnp.float32)

    def head_major(w):  # (D, D) -> (H, D, dh); head h == w[:, h*dh:(h+1)*dh]
        return jnp.transpose(w.reshape(D, H, dh), (1, 0, 2))

    names = ("wq", "bq", "wk", "bk", "wv", "bv", "wo", "bo",
             "g1", "be1", "w1", "b1", "w2", "b2", "g2", "be2")
    stacks = {n: [] for n in names}
    qscale = 1.0 / math.sqrt(dh)   # fold 1/sqrt(dh) into the Q projection
    for i in range(layers):
        lk = jax.random.split(ks[3 + i], 6)
        stacks["wq"].append(head_major(dense(lk[0], (D, D))) * qscale)
        stacks["bq"].append(jnp.zeros((H, 1, dh), jnp.float32))   # (already * qscale)
        stacks["wk"].append(head_major(dense(lk[1], (D, D))))
        stacks["bk"].append(jnp.zeros((H, 1, dh), jnp.float32))
        stacks["wv"].append(head_major(dense(lk[2], (D, D))))
        stacks["bv"].append(jnp.zeros((H, 1, dh), jnp.float32))
        stacks["wo"].append(dense(lk[3], (D, D)))
        stacks["bo"].append(jnp.zeros((1, D), jnp.float32))
        stacks["g1"].append(jnp.ones((1, D), jnp.float32))
        stacks["be1"].append(jnp.zeros((1, D), jnp.float32))
        stacks["w1"].append(dense(lk[4], (D, Di)))
        stacks["b1"].append(jnp.zeros((1, Di), jnp.float32))
        stacks["w2"].append(dense(lk[5], (Di, D)))
        stacks["b2"].append(jnp.zeros((1, D), jnp.float32))
        stacks["g2"].append(jnp.ones((1, D), jnp.float32))
        stacks["be2"].append(jnp.zeros((1, D), jnp.float32))

    params = {k: jnp.stack(v) for k, v in stacks.items()}
    # Matmul weights in bf16 (half the HBM/VMEM traffic); biases / LayerNorm
    # parameters stay f32 (added to f32 accumulators).
    for k in ("wq", "wk", "wv", "wo", "w1", "w2"):
        params[k] = params[k].astype(jnp.bfloat16)
    params.update(tok=tok, pos=pos,
                  rec_w=rec_w.astype(jnp.bfloat16), rec_b=rec_b)
    return params


def recommendation_transformer_forward(params, source, source_mask, heads):
    B, S = source.shape
    # Embedding lookups (gather) stay in plain JAX.
    x = params["tok"][source] + params["pos"][jnp.arange(S)][None, :, :]
    x = x.astype(jnp.float32)

    enc = run_encoder(x, source_mask, params, heads)            # (B, S, D) f32
    D = enc.shape[-1]
    logits = run_rec(enc.reshape(B * S, D).astype(jnp.bfloat16),
                     params["rec_w"], params["rec_b"])          # (B*S, V) f32
    logits = logits.reshape(B, S, -1)
    # Keep V lane-dense inside the kernel; permute(0, 2, 1) is left to XLA.
    return jnp.transpose(logits, (0, 2, 1))                     # (B, V, S)


if __name__ == "__main__":
    vocab_size = 50
    heads = 4
    layers = 2
    emb_dim = 32
    pad_id = 0
    num_pos = 16
    B, S = 2, 8

    key = jax.random.PRNGKey(0)
    k_param, k_src = jax.random.split(key)
    params = init_params(k_param, vocab_size, emb_dim, layers, heads, num_pos, pad_id)

    source = jax.random.randint(k_src, (B, S), 1, vocab_size)
    source = source.at[1, 6:].set(pad_id)                 # some padding in batch 1
    source_mask = (source != pad_id).astype(jnp.float32)  # (B, S), 1 = valid

    out = recommendation_transformer_forward(params, source, source_mask, heads)
    out = jax.block_until_ready(out)
    assert out.shape == (B, vocab_size, S), out.shape
    assert bool(jnp.all(jnp.isfinite(out)))
    print("KERNEL_OK")
</pallas_src>

<mosaic_0001>
module attributes {stable_mosaic.version = 11 : i64} {
  func.func @encoder_layers_kernel(%arg0: i32, %arg1: i32, %arg2: memref<1x8x32xf32, #tpu.memory_space<vmem>>, %arg3: memref<1x1x8xf32, #tpu.memory_space<vmem>>, %arg4: memref<1x4x32x8xbf16, #tpu.memory_space<vmem>>, %arg5: memref<1x4x1x8xf32, #tpu.memory_space<vmem>>, %arg6: memref<1x4x32x8xbf16, #tpu.memory_space<vmem>>, %arg7: memref<1x4x1x8xf32, #tpu.memory_space<vmem>>, %arg8: memref<1x4x32x8xbf16, #tpu.memory_space<vmem>>, %arg9: memref<1x4x1x8xf32, #tpu.memory_space<vmem>>, %arg10: memref<1x32x32xbf16, #tpu.memory_space<vmem>>, %arg11: memref<1x1x32xf32, #tpu.memory_space<vmem>>, %arg12: memref<1x1x32xf32, #tpu.memory_space<vmem>>, %arg13: memref<1x1x32xf32, #tpu.memory_space<vmem>>, %arg14: memref<1x32x128xbf16, #tpu.memory_space<vmem>>, %arg15: memref<1x1x128xf32, #tpu.memory_space<vmem>>, %arg16: memref<1x128x32xbf16, #tpu.memory_space<vmem>>, %arg17: memref<1x1x32xf32, #tpu.memory_space<vmem>>, %arg18: memref<1x1x32xf32, #tpu.memory_space<vmem>>, %arg19: memref<1x1x32xf32, #tpu.memory_space<vmem>>, %arg20: memref<1x8x32xf32, #tpu.memory_space<vmem>>, %arg21: memref<1x8x32xf32, #tpu.memory_space<vmem>>) attributes {dimension_semantics = [#tpu.dimension_semantics<parallel>, #tpu.dimension_semantics<arbitrary>], iteration_bounds = array<i64: 2, 2>, scalar_prefetch = 0 : i64, scratch_operands = 1 : i64, tpu.core_type = #tpu.core_type<tc>, window_params = [{transform_indices = @transform_0, window_bounds = array<i64: 1, 8, 32>}, {transform_indices = @transform_1, window_bounds = array<i64: 1, 1, 8>}, {transform_indices = @transform_2, window_bounds = array<i64: 1, 4, 32, 8>}, {transform_indices = @transform_3, window_bounds = array<i64: 1, 4, 1, 8>}, {transform_indices = @transform_4, window_bounds = array<i64: 1, 4, 32, 8>}, {transform_indices = @transform_5, window_bounds = array<i64: 1, 4, 1, 8>}, {transform_indices = @transform_6, window_bounds = array<i64: 1, 4, 32, 8>}, {transform_indices = @transform_7, window_bounds = array<i64: 1, 4, 1, 8>}, {transform_indices = @transform_8, window_bounds = array<i64: 1, 32, 32>}, {transform_indices = @transform_9, window_bounds = array<i64: 1, 1, 32>}, {transform_indices = @transform_10, window_bounds = array<i64: 1, 1, 32>}, {transform_indices = @transform_11, window_bounds = array<i64: 1, 1, 32>}, {transform_indices = @transform_12, window_bounds = array<i64: 1, 32, 128>}, {transform_indices = @transform_13, window_bounds = array<i64: 1, 1, 128>}, {transform_indices = @transform_14, window_bounds = array<i64: 1, 128, 32>}, {transform_indices = @transform_15, window_bounds = array<i64: 1, 1, 32>}, {transform_indices = @transform_16, window_bounds = array<i64: 1, 1, 32>}, {transform_indices = @transform_17, window_bounds = array<i64: 1, 1, 32>}, {transform_indices = @transform_18, window_bounds = array<i64: 1, 8, 32>}]} {
    %c0_i32 = arith.constant 0 : i32
    %0 = arith.cmpi eq, %arg1, %c0_i32 : i32
    %1 = arith.extui %0 : i1 to i32
    %c0_i32_0 = arith.constant 0 : i32
    %2 = arith.cmpi ne, %1, %c0_i32_0 : i32
    scf.if %2 {
      %c0_174 = arith.constant 0 : index
      %c0_175 = arith.constant 0 : index
      %c0_176 = arith.constant 0 : index
      %261 = vector.load %arg2[%c0_174, %c0_175, %c0_176] : memref<1x8x32xf32, #tpu.memory_space<vmem>>, vector<1x8x32xf32>
      %c0_177 = arith.constant 0 : index
      %c0_178 = arith.constant 0 : index
      %c0_179 = arith.constant 0 : index
      %262 = vector.load %arg21[%c0_177, %c0_178, %c0_179] : memref<1x8x32xf32, #tpu.memory_space<vmem>>, vector<1x8x32xf32>
      tpu.vector_store %arg21[%c0_177, %c0_178, %c0_179], %261 {strides = array<i32>} : memref<1x8x32xf32, #tpu.memory_space<vmem>>, vector<1x8x32xf32>,
    } else {
    }
    %c0 = arith.constant 0 : index
    %c0_1 = arith.constant 0 : index
    %c0_2 = arith.constant 0 : index
    %3 = vector.load %arg21[%c0, %c0_1, %c0_2] : memref<1x8x32xf32, #tpu.memory_space<vmem>>, vector<1x8x32xf32>
    %4 = vector.shape_cast %3 : vector<1x8x32xf32> to vector<8x32xf32>
    %5 = arith.truncf %4 : vector<8x32xf32> to vector<8x32xbf16>
    %c0_3 = arith.constant 0 : index
    %c0_4 = arith.constant 0 : index
    %c0_5 = arith.constant 0 : index
    %6 = vector.load %arg3[%c0_3, %c0_4, %c0_5] : memref<1x1x8xf32, #tpu.memory_space<vmem>>, vector<1x1x8xf32>
    %c0_6 = arith.constant 0 : index
    %c0_7 = arith.constant 0 : index
    %c0_8 = arith.constant 0 : index
    %c0_9 = arith.constant 0 : index
    %7 = vector.load %arg4[%c0_6, %c0_7, %c0_8, %c0_9] : memref<1x4x32x8xbf16, #tpu.memory_space<vmem>>, vector<1x1x32x8xbf16>
    %8 = vector.shape_cast %7 : vector<1x1x32x8xbf16> to vector<32x8xbf16>
    %cst = arith.constant dense<0.000000e+00> : vector<8x8xf32>
    %9 = tpu.matmul %5, %8, %cst {dimension_numbers = #tpu.dot_dimension_numbers<[1], [0], [0], [1], [0, 0, 1, 1], [], []>} : vector<8x32xbf16>, vector<32x8xbf16>, vector<8x8xf32> -> vector<8x8xf32>
    %c0_10 = arith.constant 0 : index
    %c0_11 = arith.constant 0 : index
    %c0_12 = arith.constant 0 : index
    %c0_13 = arith.constant 0 : index
    %10 = vector.load %arg5[%c0_10, %c0_11, %c0_12, %c0_13] : memref<1x4x1x8xf32, #tpu.memory_space<vmem>>, vector<1x1x1x8xf32>
    %11 = vector.shape_cast %10 : vector<1x1x1x8xf32> to vector<1x8xf32>
    %12 = vector.broadcast %11 : vector<1x8xf32> to vector<8x8xf32>
    %13 = arith.addf %9, %12 : vector<8x8xf32>
    %c0_14 = arith.constant 0 : index
    %c0_15 = arith.constant 0 : index
    %c0_16 = arith.constant 0 : index
    %c0_17 = arith.constant 0 : index
    %14 = vector.load %arg6[%c0_14, %c0_15, %c0_16, %c0_17] : memref<1x4x32x8xbf16, #tpu.memory_space<vmem>>, vector<1x1x32x8xbf16>
    %15 = vector.shape_cast %14 : vector<1x1x32x8xbf16> to vector<32x8xbf16>
    %cst_18 = arith.constant dense<0.000000e+00> : vector<8x8xf32>
    %16 = tpu.matmul %5, %15, %cst_18 {dimension_numbers = #tpu.dot_dimension_numbers<[1], [0], [0], [1], [0, 0, 1, 1], [], []>} : vector<8x32xbf16>, vector<32x8xbf16>, vector<8x8xf32> -> vector<8x8xf32>
    %c0_19 = arith.constant 0 : index
    %c0_20 = arith.constant 0 : index
    %c0_21 = arith.constant 0 : index
    %c0_22 = arith.constant 0 : index
    %17 = vector.load %arg7[%c0_19, %c0_20, %c0_21, %c0_22] : memref<1x4x1x8xf32, #tpu.memory_space<vmem>>, vector<1x1x1x8xf32>
    %18 = vector.shape_cast %17 : vector<1x1x1x8xf32> to vector<1x8xf32>
    %19 = vector.broadcast %18 : vector<1x8xf32> to vector<8x8xf32>
    %20 = arith.addf %16, %19 : vector<8x8xf32>
    %c0_23 = arith.constant 0 : index
    %c0_24 = arith.constant 0 : index
    %c0_25 = arith.constant 0 : index
    %c0_26 = arith.constant 0 : index
    %21 = vector.load %arg8[%c0_23, %c0_24, %c0_25, %c0_26] : memref<1x4x32x8xbf16, #tpu.memory_space<vmem>>, vector<1x1x32x8xbf16>
    %22 = vector.shape_cast %21 : vector<1x1x32x8xbf16> to vector<32x8xbf16>
    %cst_27 = arith.constant dense<0.000000e+00> : vector<8x8xf32>
    %23 = tpu.matmul %5, %22, %cst_27 {dimension_numbers = #tpu.dot_dimension_numbers<[1], [0], [0], [1], [0, 0, 1, 1], [], []>} : vector<8x32xbf16>, vector<32x8xbf16>, vector<8x8xf32> -> vector<8x8xf32>
    %c0_28 = arith.constant 0 : index
    %c0_29 = arith.constant 0 : index
    %c0_30 = arith.constant 0 : index
    %c0_31 = arith.constant 0 : index
    %24 = vector.load %arg9[%c0_28, %c0_29, %c0_30, %c0_31] : memref<1x4x1x8xf32, #tpu.memory_space<vmem>>, vector<1x1x1x8xf32>
    %25 = vector.shape_cast %24 : vector<1x1x1x8xf32> to vector<1x8xf32>
    %26 = vector.broadcast %25 : vector<1x8xf32> to vector<8x8xf32>
    %27 = arith.addf %23, %26 : vector<8x8xf32>
    %28 = vector.shape_cast %13 : vector<8x8xf32> to vector<1x8x8xf32>
    %29 = arith.truncf %28 : vector<1x8x8xf32> to vector<1x8x8xbf16>
    %30 = vector.shape_cast %20 : vector<8x8xf32> to vector<1x8x8xf32>
    %31 = arith.truncf %30 : vector<1x8x8xf32> to vector<1x8x8xbf16>
    %32 = vector.shape_cast %27 : vector<8x8xf32> to vector<1x8x8xf32>
    %33 = arith.truncf %32 : vector<1x8x8xf32> to vector<1x8x8xbf16>
    "tpu.trace_start"() <{level = 10 : i32, message = "bqe,bke->bqk"}> : () -> ()
    %cst_32 = arith.constant dense<0.000000e+00> : vector<1x8x8xf32>
    %34 = tpu.matmul %29, %31, %cst_32 {dimension_numbers = #tpu.dot_dimension_numbers<[2], [2], [1], [1], [0, 0, 0, 1, 1, 1], [0], [0]>} : vector<1x8x8xbf16>, vector<1x8x8xbf16>, vector<1x8x8xf32> -> vector<1x8x8xf32>
    "tpu.trace_stop"() : () -> ()
    %35 = vector.broadcast %6 : vector<1x1x8xf32> to vector<1x8x8xf32>
    %36 = arith.addf %34, %35 : vector<1x8x8xf32>
    %cst_33 = arith.constant dense<0xFF800000> : vector<1x8xf32>
    %37 = vector.multi_reduction <maximumf>, %36, %cst_33 [2] : vector<1x8x8xf32> to vector<1x8xf32>
    %38 = vector.shape_cast %37 : vector<1x8xf32> to vector<1x8x1xf32>
    %39 = vector.broadcast %38 : vector<1x8x1xf32> to vector<1x8x8xf32>
    %40 = arith.subf %36, %39 : vector<1x8x8xf32>
    %41 = math.exp %40 : vector<1x8x8xf32>
    %cst_34 = arith.constant dense<0.000000e+00> : vector<1x8xf32>
    %42 = vector.multi_reduction <add>, %41, %cst_34 [2] : vector<1x8x8xf32> to vector<1x8xf32>
    %43 = vector.shape_cast %42 : vector<1x8xf32> to vector<1x8x1xf32>
    %44 = tpu.reciprocal %43 {approx = true} : vector<1x8x1xf32> -> vector<1x8x1xf32>
    %45 = vector.broadcast %44 : vector<1x8x1xf32> to vector<1x8x8xf32>
    %46 = arith.mulf %41, %45 : vector<1x8x8xf32>
    %47 = arith.truncf %46 : vector<1x8x8xf32> to vector<1x8x8xbf16>
    "tpu.trace_start"() <{level = 10 : i32, message = "bqk,bke->bqe"}> : () -> ()
    %cst_35 = arith.constant dense<0.000000e+00> : vector<1x8x8xf32>
    %48 = tpu.matmul %47, %33, %cst_35 {dimension_numbers = #tpu.dot_dimension_numbers<[2], [1], [1], [2], [0, 0, 0, 1, 1, 2], [0], [0]>} : vector<1x8x8xbf16>, vector<1x8x8xbf16>, vector<1x8x8xf32> -> vector<1x8x8xf32>
    "tpu.trace_stop"() : () -> ()
    %49 = vector.shape_cast %48 : vector<1x8x8xf32> to vector<8x8xf32>
    %c0_36 = arith.constant 0 : index
    %c1 = arith.constant 1 : index
    %c0_37 = arith.constant 0 : index
    %c0_38 = arith.constant 0 : index
    %50 = vector.load %arg4[%c0_36, %c1, %c0_37, %c0_38] : memref<1x4x32x8xbf16, #tpu.memory_space<vmem>>, vector<1x1x32x8xbf16>
    %51 = vector.shape_cast %50 : vector<1x1x32x8xbf16> to vector<32x8xbf16>
    %cst_39 = arith.constant dense<0.000000e+00> : vector<8x8xf32>
    %52 = tpu.matmul %5, %51, %cst_39 {dimension_numbers = #tpu.dot_dimension_numbers<[1], [0], [0], [1], [0, 0, 1, 1], [], []>} : vector<8x32xbf16>, vector<32x8xbf16>, vector<8x8xf32> -> vector<8x8xf32>
    %c0_40 = arith.constant 0 : index
    %c1_41 = arith.constant 1 : index
    %c0_42 = arith.constant 0 : index
    %c0_43 = arith.constant 0 : index
    %53 = vector.load %arg5[%c0_40, %c1_41, %c0_42, %c0_43] : memref<1x4x1x8xf32, #tpu.memory_space<vmem>>, vector<1x1x1x8xf32>
    %54 = vector.shape_cast %53 : vector<1x1x1x8xf32> to vector<1x8xf32>
    %55 = vector.broadcast %54 : vector<1x8xf32> to vector<8x8xf32>
    %56 = arith.addf %52, %55 : vector<8x8xf32>
    %c0_44 = arith.constant 0 : index
    %c1_45 = arith.constant 1 : index
    %c0_46 = arith.constant 0 : index
    %c0_47 = arith.constant 0 : index
    %57 = vector.load %arg6[%c0_44, %c1_45, %c0_46, %c0_47] : memref<1x4x32x8xbf16, #tpu.memory_space<vmem>>, vector<1x1x32x8xbf16>
    %58 = vector.shape_cast %57 : vector<1x1x32x8xbf16> to vector<32x8xbf16>
    %cst_48 = arith.constant dense<0.000000e+00> : vector<8x8xf32>
    %59 = tpu.matmul %5, %58, %cst_48 {dimension_numbers = #tpu.dot_dimension_numbers<[1], [0], [0], [1], [0, 0, 1, 1], [], []>} : vector<8x32xbf16>, vector<32x8xbf16>, vector<8x8xf32> -> vector<8x8xf32>
    %c0_49 = arith.constant 0 : index
    %c1_50 = arith.constant 1 : index
    %c0_51 = arith.constant 0 : index
    %c0_52 = arith.constant 0 : index
    %60 = vector.load %arg7[%c0_49, %c1_50, %c0_51, %c0_52] : memref<1x4x1x8xf32, #tpu.memory_space<vmem>>, vector<1x1x1x8xf32>
    %61 = vector.shape_cast %60 : vector<1x1x1x8xf32> to vector<1x8xf32>
    %62 = vector.broadcast %61 : vector<1x8xf32> to vector<8x8xf32>
    %63 = arith.addf %59, %62 : vector<8x8xf32>
    %c0_53 = arith.constant 0 : index
    %c1_54 = arith.constant 1 : index
    %c0_55 = arith.constant 0 : index
    %c0_56 = arith.constant 0 : index
    %64 = vector.load %arg8[%c0_53, %c1_54, %c0_55, %c0_56] : memref<1x4x32x8xbf16, #tpu.memory_space<vmem>>, vector<1x1x32x8xbf16>
    %65 = vector.shape_cast %64 : vector<1x1x32x8xbf16> to vector<32x8xbf16>
    %cst_57 = arith.constant dense<0.000000e+00> : vector<8x8xf32>
    %66 = tpu.matmul %5, %65, %cst_57 {dimension_numbers = #tpu.dot_dimension_numbers<[1], [0], [0], [1], [0, 0, 1, 1], [], []>} : vector<8x32xbf16>, vector<32x8xbf16>, vector<8x8xf32> -> vector<8x8xf32>
    %c0_58 = arith.constant 0 : index
    %c1_59 = arith.constant 1 : index
    %c0_60 = arith.constant 0 : index
    %c0_61 = arith.constant 0 : index
    %67 = vector.load %arg9[%c0_58, %c1_59, %c0_60, %c0_61] : memref<1x4x1x8xf32, #tpu.memory_space<vmem>>, vector<1x1x1x8xf32>
    %68 = vector.shape_cast %67 : vector<1x1x1x8xf32> to vector<1x8xf32>
    %69 = vector.broadcast %68 : vector<1x8xf32> to vector<8x8xf32>
    %70 = arith.addf %66, %69 : vector<8x8xf32>
    %71 = vector.shape_cast %56 : vector<8x8xf32> to vector<1x8x8xf32>
    %72 = arith.truncf %71 : vector<1x8x8xf32> to vector<1x8x8xbf16>
    %73 = vector.shape_cast %63 : vector<8x8xf32> to vector<1x8x8xf32>
    %74 = arith.truncf %73 : vector<1x8x8xf32> to vector<1x8x8xbf16>
    %75 = vector.shape_cast %70 : vector<8x8xf32> to vector<1x8x8xf32>
    %76 = arith.truncf %75 : vector<1x8x8xf32> to vector<1x8x8xbf16>
    "tpu.trace_start"() <{level = 10 : i32, message = "bqe,bke->bqk"}> : () -> ()
    %cst_62 = arith.constant dense<0.000000e+00> : vector<1x8x8xf32>
    %77 = tpu.matmul %72, %74, %cst_62 {dimension_numbers = #tpu.dot_dimension_numbers<[2], [2], [1], [1], [0, 0, 0, 1, 1, 1], [0], [0]>} : vector<1x8x8xbf16>, vector<1x8x8xbf16>, vector<1x8x8xf32> -> vector<1x8x8xf32>
    "tpu.trace_stop"() : () -> ()
    %78 = vector.broadcast %6 : vector<1x1x8xf32> to vector<1x8x8xf32>
    %79 = arith.addf %77, %78 : vector<1x8x8xf32>
    %cst_63 = arith.constant dense<0xFF800000> : vector<1x8xf32>
    %80 = vector.multi_reduction <maximumf>, %79, %cst_63 [2] : vector<1x8x8xf32> to vector<1x8xf32>
    %81 = vector.shape_cast %80 : vector<1x8xf32> to vector<1x8x1xf32>
    %82 = vector.broadcast %81 : vector<1x8x1xf32> to vector<1x8x8xf32>
    %83 = arith.subf %79, %82 : vector<1x8x8xf32>
    %84 = math.exp %83 : vector<1x8x8xf32>
    %cst_64 = arith.constant dense<0.000000e+00> : vector<1x8xf32>
    %85 = vector.multi_reduction <add>, %84, %cst_64 [2] : vector<1x8x8xf32> to vector<1x8xf32>
    %86 = vector.shape_cast %85 : vector<1x8xf32> to vector<1x8x1xf32>
    %87 = tpu.reciprocal %86 {approx = true} : vector<1x8x1xf32> -> vector<1x8x1xf32>
    %88 = vector.broadcast %87 : vector<1x8x1xf32> to vector<1x8x8xf32>
    %89 = arith.mulf %84, %88 : vector<1x8x8xf32>
    %90 = arith.truncf %89 : vector<1x8x8xf32> to vector<1x8x8xbf16>
    "tpu.trace_start"() <{level = 10 : i32, message = "bqk,bke->bqe"}> : () -> ()
    %cst_65 = arith.constant dense<0.000000e+00> : vector<1x8x8xf32>
    %91 = tpu.matmul %90, %76, %cst_65 {dimension_numbers = #tpu.dot_dimension_numbers<[2], [1], [1], [2], [0, 0, 0, 1, 1, 2], [0], [0]>} : vector<1x8x8xbf16>, vector<1x8x8xbf16>, vector<1x8x8xf32> -> vector<1x8x8xf32>
    "tpu.trace_stop"() : () -> ()
    %92 = vector.shape_cast %91 : vector<1x8x8xf32> to vector<8x8xf32>
    %c0_66 = arith.constant 0 : index
    %c2 = arith.constant 2 : index
    %c0_67 = arith.constant 0 : index
    %c0_68 = arith.constant 0 : index
    %93 = vector.load %arg4[%c0_66, %c2, %c0_67, %c0_68] : memref<1x4x32x8xbf16, #tpu.memory_space<vmem>>, vector<1x1x32x8xbf16>
    %94 = vector.shape_cast %93 : vector<1x1x32x8xbf16> to vector<32x8xbf16>
    %cst_69 = arith.constant dense<0.000000e+00> : vector<8x8xf32>
    %95 = tpu.matmul %5, %94, %cst_69 {dimension_numbers = #tpu.dot_dimension_numbers<[1], [0], [0], [1], [0, 0, 1, 1], [], []>} : vector<8x32xbf16>, vector<32x8xbf16>, vector<8x8xf32> -> vector<8x8xf32>
    %c0_70 = arith.constant 0 : index
    %c2_71 = arith.constant 2 : index
    %c0_72 = arith.constant 0 : index
    %c0_73 = arith.constant 0 : index
    %96 = vector.load %arg5[%c0_70, %c2_71, %c0_72, %c0_73] : memref<1x4x1x8xf32, #tpu.memory_space<vmem>>, vector<1x1x1x8xf32>
    %97 = vector.shape_cast %96 : vector<1x1x1x8xf32> to vector<1x8xf32>
    %98 = vector.broadcast %97 : vector<1x8xf32> to vector<8x8xf32>
    %99 = arith.addf %95, %98 : vector<8x8xf32>
    %c0_74 = arith.constant 0 : index
    %c2_75 = arith.constant 2 : index
    %c0_76 = arith.constant 0 : index
    %c0_77 = arith.constant 0 : index
    %100 = vector.load %arg6[%c0_74, %c2_75, %c0_76, %c0_77] : memref<1x4x32x8xbf16, #tpu.memory_space<vmem>>, vector<1x1x32x8xbf16>
    %101 = vector.shape_cast %100 : vector<1x1x32x8xbf16> to vector<32x8xbf16>
    %cst_78 = arith.constant dense<0.000000e+00> : vector<8x8xf32>
    %102 = tpu.matmul %5, %101, %cst_78 {dimension_numbers = #tpu.dot_dimension_numbers<[1], [0], [0], [1], [0, 0, 1, 1], [], []>} : vector<8x32xbf16>, vector<32x8xbf16>, vector<8x8xf32> -> vector<8x8xf32>
    %c0_79 = arith.constant 0 : index
    %c2_80 = arith.constant 2 : index
    %c0_81 = arith.constant 0 : index
    %c0_82 = arith.constant 0 : index
    %103 = vector.load %arg7[%c0_79, %c2_80, %c0_81, %c0_82] : memref<1x4x1x8xf32, #tpu.memory_space<vmem>>, vector<1x1x1x8xf32>
    %104 = vector.shape_cast %103 : vector<1x1x1x8xf32> to vector<1x8xf32>
    %105 = vector.broadcast %104 : vector<1x8xf32> to vector<8x8xf32>
    %106 = arith.addf %102, %105 : vector<8x8xf32>
    %c0_83 = arith.constant 0 : index
    %c2_84 = arith.constant 2 : index
    %c0_85 = arith.constant 0 : index
    %c0_86 = arith.constant 0 : index
    %107 = vector.load %arg8[%c0_83, %c2_84, %c0_85, %c0_86] : memref<1x4x32x8xbf16, #tpu.memory_space<vmem>>, vector<1x1x32x8xbf16>
    %108 = vector.shape_cast %107 : vector<1x1x32x8xbf16> to vector<32x8xbf16>
    %cst_87 = arith.constant dense<0.000000e+00> : vector<8x8xf32>
    %109 = tpu.matmul %5, %108, %cst_87 {dimension_numbers = #tpu.dot_dimension_numbers<[1], [0], [0], [1], [0, 0, 1, 1], [], []>} : vector<8x32xbf16>, vector<32x8xbf16>, vector<8x8xf32> -> vector<8x8xf32>
    %c0_88 = arith.constant 0 : index
    %c2_89 = arith.constant 2 : index
    %c0_90 = arith.constant 0 : index
    %c0_91 = arith.constant 0 : index
    %110 = vector.load %arg9[%c0_88, %c2_89, %c0_90, %c0_91] : memref<1x4x1x8xf32, #tpu.memory_space<vmem>>, vector<1x1x1x8xf32>
    %111 = vector.shape_cast %110 : vector<1x1x1x8xf32> to vector<1x8xf32>
    %112 = vector.broadcast %111 : vector<1x8xf32> to vector<8x8xf32>
    %113 = arith.addf %109, %112 : vector<8x8xf32>
    %114 = vector.shape_cast %99 : vector<8x8xf32> to vector<1x8x8xf32>
    %115 = arith.truncf %114 : vector<1x8x8xf32> to vector<1x8x8xbf16>
    %116 = vector.shape_cast %106 : vector<8x8xf32> to vector<1x8x8xf32>
    %117 = arith.truncf %116 : vector<1x8x8xf32> to vector<1x8x8xbf16>
    %118 = vector.shape_cast %113 : vector<8x8xf32> to vector<1x8x8xf32>
    %119 = arith.truncf %118 : vector<1x8x8xf32> to vector<1x8x8xbf16>
    "tpu.trace_start"() <{level = 10 : i32, message = "bqe,bke->bqk"}> : () -> ()
    %cst_92 = arith.constant dense<0.000000e+00> : vector<1x8x8xf32>
    %120 = tpu.matmul %115, %117, %cst_92 {dimension_numbers = #tpu.dot_dimension_numbers<[2], [2], [1], [1], [0, 0, 0, 1, 1, 1], [0], [0]>} : vector<1x8x8xbf16>, vector<1x8x8xbf16>, vector<1x8x8xf32> -> vector<1x8x8xf32>
    "tpu.trace_stop"() : () -> ()
    %121 = vector.broadcast %6 : vector<1x1x8xf32> to vector<1x8x8xf32>
    %122 = arith.addf %120, %121 : vector<1x8x8xf32>
    %cst_93 = arith.constant dense<0xFF800000> : vector<1x8xf32>
    %123 = vector.multi_reduction <maximumf>, %122, %cst_93 [2] : vector<1x8x8xf32> to vector<1x8xf32>
    %124 = vector.shape_cast %123 : vector<1x8xf32> to vector<1x8x1xf32>
    %125 = vector.broadcast %124 : vector<1x8x1xf32> to vector<1x8x8xf32>
    %126 = arith.subf %122, %125 : vector<1x8x8xf32>
    %127 = math.exp %126 : vector<1x8x8xf32>
    %cst_94 = arith.constant dense<0.000000e+00> : vector<1x8xf32>
    %128 = vector.multi_reduction <add>, %127, %cst_94 [2] : vector<1x8x8xf32> to vector<1x8xf32>
    %129 = vector.shape_cast %128 : vector<1x8xf32> to vector<1x8x1xf32>
    %130 = tpu.reciprocal %129 {approx = true} : vector<1x8x1xf32> -> vector<1x8x1xf32>
    %131 = vector.broadcast %130 : vector<1x8x1xf32> to vector<1x8x8xf32>
    %132 = arith.mulf %127, %131 : vector<1x8x8xf32>
    %133 = arith.truncf %132 : vector<1x8x8xf32> to vector<1x8x8xbf16>
    "tpu.trace_start"() <{level = 10 : i32, message = "bqk,bke->bqe"}> : () -> ()
    %cst_95 = arith.constant dense<0.000000e+00> : vector<1x8x8xf32>
    %134 = tpu.matmul %133, %119, %cst_95 {dimension_numbers = #tpu.dot_dimension_numbers<[2], [1], [1], [2], [0, 0, 0, 1, 1, 2], [0], [0]>} : vector<1x8x8xbf16>, vector<1x8x8xbf16>, vector<1x8x8xf32> -> vector<1x8x8xf32>
    "tpu.trace_stop"() : () -> ()
    %135 = vector.shape_cast %134 : vector<1x8x8xf32> to vector<8x8xf32>
    %c0_96 = arith.constant 0 : index
    %c3 = arith.constant 3 : index
    %c0_97 = arith.constant 0 : index
    %c0_98 = arith.constant 0 : index
    %136 = vector.load %arg4[%c0_96, %c3, %c0_97, %c0_98] : memref<1x4x32x8xbf16, #tpu.memory_space<vmem>>, vector<1x1x32x8xbf16>
    %137 = vector.shape_cast %136 : vector<1x1x32x8xbf16> to vector<32x8xbf16>
    %cst_99 = arith.constant dense<0.000000e+00> : vector<8x8xf32>
    %138 = tpu.matmul %5, %137, %cst_99 {dimension_numbers = #tpu.dot_dimension_numbers<[1], [0], [0], [1], [0, 0, 1, 1], [], []>} : vector<8x32xbf16>, vector<32x8xbf16>, vector<8x8xf32> -> vector<8x8xf32>
    %c0_100 = arith.constant 0 : index
    %c3_101 = arith.constant 3 : index
    %c0_102 = arith.constant 0 : index
    %c0_103 = arith.constant 0 : index
    %139 = vector.load %arg5[%c0_100, %c3_101, %c0_102, %c0_103] : memref<1x4x1x8xf32, #tpu.memory_space<vmem>>, vector<1x1x1x8xf32>
    %140 = vector.shape_cast %139 : vector<1x1x1x8xf32> to vector<1x8xf32>
    %141 = vector.broadcast %140 : vector<1x8xf32> to vector<8x8xf32>
    %142 = arith.addf %138, %141 : vector<8x8xf32>
    %c0_104 = arith.constant 0 : index
    %c3_105 = arith.constant 3 : index
    %c0_106 = arith.constant 0 : index
    %c0_107 = arith.constant 0 : index
    %143 = vector.load %arg6[%c0_104, %c3_105, %c0_106, %c0_107] : memref<1x4x32x8xbf16, #tpu.memory_space<vmem>>, vector<1x1x32x8xbf16>
    %144 = vector.shape_cast %143 : vector<1x1x32x8xbf16> to vector<32x8xbf16>
    %cst_108 = arith.constant dense<0.000000e+00> : vector<8x8xf32>
    %145 = tpu.matmul %5, %144, %cst_108 {dimension_numbers = #tpu.dot_dimension_numbers<[1], [0], [0], [1], [0, 0, 1, 1], [], []>} : vector<8x32xbf16>, vector<32x8xbf16>, vector<8x8xf32> -> vector<8x8xf32>
    %c0_109 = arith.constant 0 : index
    %c3_110 = arith.constant 3 : index
    %c0_111 = arith.constant 0 : index
    %c0_112 = arith.constant 0 : index
    %146 = vector.load %arg7[%c0_109, %c3_110, %c0_111, %c0_112] : memref<1x4x1x8xf32, #tpu.memory_space<vmem>>, vector<1x1x1x8xf32>
    %147 = vector.shape_cast %146 : vector<1x1x1x8xf32> to vector<1x8xf32>
    %148 = vector.broadcast %147 : vector<1x8xf32> to vector<8x8xf32>
    %149 = arith.addf %145, %148 : vector<8x8xf32>
    %c0_113 = arith.constant 0 : index
    %c3_114 = arith.constant 3 : index
    %c0_115 = arith.constant 0 : index
    %c0_116 = arith.constant 0 : index
    %150 = vector.load %arg8[%c0_113, %c3_114, %c0_115, %c0_116] : memref<1x4x32x8xbf16, #tpu.memory_space<vmem>>, vector<1x1x32x8xbf16>
    %151 = vector.shape_cast %150 : vector<1x1x32x8xbf16> to vector<32x8xbf16>
    %cst_117 = arith.constant dense<0.000000e+00> : vector<8x8xf32>
    %152 = tpu.matmul %5, %151, %cst_117 {dimension_numbers = #tpu.dot_dimension_numbers<[1], [0], [0], [1], [0, 0, 1, 1], [], []>} : vector<8x32xbf16>, vector<32x8xbf16>, vector<8x8xf32> -> vector<8x8xf32>
    %c0_118 = arith.constant 0 : index
    %c3_119 = arith.constant 3 : index
    %c0_120 = arith.constant 0 : index
    %c0_121 = arith.constant 0 : index
    %153 = vector.load %arg9[%c0_118, %c3_119, %c0_120, %c0_121] : memref<1x4x1x8xf32, #tpu.memory_space<vmem>>, vector<1x1x1x8xf32>
    %154 = vector.shape_cast %153 : vector<1x1x1x8xf32> to vector<1x8xf32>
    %155 = vector.broadcast %154 : vector<1x8xf32> to vector<8x8xf32>
    %156 = arith.addf %152, %155 : vector<8x8xf32>
    %157 = vector.shape_cast %142 : vector<8x8xf32> to vector<1x8x8xf32>
    %158 = arith.truncf %157 : vector<1x8x8xf32> to vector<1x8x8xbf16>
    %159 = vector.shape_cast %149 : vector<8x8xf32> to vector<1x8x8xf32>
    %160 = arith.truncf %159 : vector<1x8x8xf32> to vector<1x8x8xbf16>
    %161 = vector.shape_cast %156 : vector<8x8xf32> to vector<1x8x8xf32>
    %162 = arith.truncf %161 : vector<1x8x8xf32> to vector<1x8x8xbf16>
    "tpu.trace_start"() <{level = 10 : i32, message = "bqe,bke->bqk"}> : () -> ()
    %cst_122 = arith.constant dense<0.000000e+00> : vector<1x8x8xf32>
    %163 = tpu.matmul %158, %160, %cst_122 {dimension_numbers = #tpu.dot_dimension_numbers<[2], [2], [1], [1], [0, 0, 0, 1, 1, 1], [0], [0]>} : vector<1x8x8xbf16>, vector<1x8x8xbf16>, vector<1x8x8xf32> -> vector<1x8x8xf32>
    "tpu.trace_stop"() : () -> ()
    %164 = vector.broadcast %6 : vector<1x1x8xf32> to vector<1x8x8xf32>
    %165 = arith.addf %163, %164 : vector<1x8x8xf32>
    %cst_123 = arith.constant dense<0xFF800000> : vector<1x8xf32>
    %166 = vector.multi_reduction <maximumf>, %165, %cst_123 [2] : vector<1x8x8xf32> to vector<1x8xf32>
    %167 = vector.shape_cast %166 : vector<1x8xf32> to vector<1x8x1xf32>
    %168 = vector.broadcast %167 : vector<1x8x1xf32> to vector<1x8x8xf32>
    %169 = arith.subf %165, %168 : vector<1x8x8xf32>
    %170 = math.exp %169 : vector<1x8x8xf32>
    %cst_124 = arith.constant dense<0.000000e+00> : vector<1x8xf32>
    %171 = vector.multi_reduction <add>, %170, %cst_124 [2] : vector<1x8x8xf32> to vector<1x8xf32>
    %172 = vector.shape_cast %171 : vector<1x8xf32> to vector<1x8x1xf32>
    %173 = tpu.reciprocal %172 {approx = true} : vector<1x8x1xf32> -> vector<1x8x1xf32>
    %174 = vector.broadcast %173 : vector<1x8x1xf32> to vector<1x8x8xf32>
    %175 = arith.mulf %170, %174 : vector<1x8x8xf32>
    %176 = arith.truncf %175 : vector<1x8x8xf32> to vector<1x8x8xbf16>
    "tpu.trace_start"() <{level = 10 : i32, message = "bqk,bke->bqe"}> : () -> ()
    %cst_125 = arith.constant dense<0.000000e+00> : vector<1x8x8xf32>
    %177 = tpu.matmul %176, %162, %cst_125 {dimension_numbers = #tpu.dot_dimension_numbers<[2], [1], [1], [2], [0, 0, 0, 1, 1, 2], [0], [0]>} : vector<1x8x8xbf16>, vector<1x8x8xbf16>, vector<1x8x8xf32> -> vector<1x8x8xf32>
    "tpu.trace_stop"() : () -> ()
    %178 = vector.shape_cast %177 : vector<1x8x8xf32> to vector<8x8xf32>
    %179 = tpu.concatenate %49, %92, %135, %178 in 1 : vector<8x8xf32>, vector<8x8xf32>, vector<8x8xf32>, vector<8x8xf32> -> vector<8x32xf32>
    %180 = arith.truncf %179 : vector<8x32xf32> to vector<8x32xbf16>
    %c0_126 = arith.constant 0 : index
    %c0_127 = arith.constant 0 : index
    %c0_128 = arith.constant 0 : index
    %181 = vector.load %arg10[%c0_126, %c0_127, %c0_128] : memref<1x32x32xbf16, #tpu.memory_space<vmem>>, vector<1x32x32xbf16>
    %182 = vector.shape_cast %181 : vector<1x32x32xbf16> to vector<32x32xbf16>
    %cst_129 = arith.constant dense<0.000000e+00> : vector<8x32xf32>
    %183 = tpu.matmul %180, %182, %cst_129 {dimension_numbers = #tpu.dot_dimension_numbers<[1], [0], [0], [1], [0, 0, 1, 1], [], []>} : vector<8x32xbf16>, vector<32x32xbf16>, vector<8x32xf32> -> vector<8x32xf32>
    %c0_130 = arith.constant 0 : index
    %c0_131 = arith.constant 0 : index
    %c0_132 = arith.constant 0 : index
    %184 = vector.load %arg11[%c0_130, %c0_131, %c0_132] : memref<1x1x32xf32, #tpu.memory_space<vmem>>, vector<1x1x32xf32>
    %185 = vector.shape_cast %184 : vector<1x1x32xf32> to vector<1x32xf32>
    %186 = vector.broadcast %185 : vector<1x32xf32> to vector<8x32xf32>
    %187 = arith.addf %183, %186 : vector<8x32xf32>
    %188 = arith.addf %4, %187 : vector<8x32xf32>
    %c0_133 = arith.constant 0 : index
    %c0_134 = arith.constant 0 : index
    %c0_135 = arith.constant 0 : index
    %189 = vector.load %arg12[%c0_133, %c0_134, %c0_135] : memref<1x1x32xf32, #tpu.memory_space<vmem>>, vector<1x1x32xf32>
    %190 = vector.shape_cast %189 : vector<1x1x32xf32> to vector<1x32xf32>
    %c0_136 = arith.constant 0 : index
    %c0_137 = arith.constant 0 : index
    %c0_138 = arith.constant 0 : index
    %191 = vector.load %arg13[%c0_136, %c0_137, %c0_138] : memref<1x1x32xf32, #tpu.memory_space<vmem>>, vector<1x1x32xf32>
    %192 = vector.shape_cast %191 : vector<1x1x32xf32> to vector<1x32xf32>
    %cst_139 = arith.constant dense<0.000000e+00> : vector<8xf32>
    %193 = vector.multi_reduction <add>, %188, %cst_139 [1] : vector<8x32xf32> to vector<8xf32>
    %194 = vector.shape_cast %193 : vector<8xf32> to vector<8x1xf32>
    %cst_140 = arith.constant 3.200000e+01 : f32
    %195 = vector.broadcast %cst_140 : f32 to vector<8x1xf32>
    %196 = arith.divf %194, %195 : vector<8x1xf32>
    %197 = vector.broadcast %196 : vector<8x1xf32> to vector<8x32xf32>
    %198 = arith.subf %188, %197 : vector<8x32xf32>
    %199 = arith.mulf %198, %198 : vector<8x32xf32>
    %cst_141 = arith.constant dense<0.000000e+00> : vector<8xf32>
    %200 = vector.multi_reduction <add>, %199, %cst_141 [1] : vector<8x32xf32> to vector<8xf32>
    %201 = vector.shape_cast %200 : vector<8xf32> to vector<8x1xf32>
    %cst_142 = arith.constant 3.200000e+01 : f32
    %202 = vector.broadcast %cst_142 : f32 to vector<8x1xf32>
    %203 = arith.divf %201, %202 : vector<8x1xf32>
    %cst_143 = arith.constant 9.99999974E-6 : f32
    %204 = vector.broadcast %cst_143 : f32 to vector<8x1xf32>
    %205 = arith.addf %203, %204 : vector<8x1xf32>
    %206 = math.rsqrt %205 : vector<8x1xf32>
    %207 = vector.broadcast %206 : vector<8x1xf32> to vector<8x32xf32>
    %208 = arith.mulf %198, %207 : vector<8x32xf32>
    %209 = vector.broadcast %190 : vector<1x32xf32> to vector<8x32xf32>
    %210 = arith.mulf %208, %209 : vector<8x32xf32>
    %211 = vector.broadcast %192 : vector<1x32xf32> to vector<8x32xf32>
    %212 = arith.addf %210, %211 : vector<8x32xf32>
    %213 = arith.truncf %212 : vector<8x32xf32> to vector<8x32xbf16>
    %c0_144 = arith.constant 0 : index
    %c0_145 = arith.constant 0 : index
    %c0_146 = arith.constant 0 : index
    %214 = vector.load %arg14[%c0_144, %c0_145, %c0_146] : memref<1x32x128xbf16, #tpu.memory_space<vmem>>, vector<1x32x128xbf16>
    %215 = vector.shape_cast %214 : vector<1x32x128xbf16> to vector<32x128xbf16>
    %cst_147 = arith.constant dense<0.000000e+00> : vector<8x128xf32>
    %216 = tpu.matmul %213, %215, %cst_147 {dimension_numbers = #tpu.dot_dimension_numbers<[1], [0], [0], [1], [0, 0, 1, 1], [], []>} : vector<8x32xbf16>, vector<32x128xbf16>, vector<8x128xf32> -> vector<8x128xf32>
    %c0_148 = arith.constant 0 : index
    %c0_149 = arith.constant 0 : index
    %c0_150 = arith.constant 0 : index
    %217 = vector.load %arg15[%c0_148, %c0_149, %c0_150] : memref<1x1x128xf32, #tpu.memory_space<vmem>>, vector<1x1x128xf32>
    %218 = vector.shape_cast %217 : vector<1x1x128xf32> to vector<1x128xf32>
    %219 = vector.broadcast %218 : vector<1x128xf32> to vector<8x128xf32>
    %220 = arith.addf %216, %219 : vector<8x128xf32>
    %cst_151 = arith.constant 0.000000e+00 : f32
    %221 = vector.broadcast %cst_151 : f32 to vector<8x128xf32>
    %222 = arith.maximumf %220, %221 : vector<8x128xf32>
    %223 = arith.truncf %222 : vector<8x128xf32> to vector<8x128xbf16>
    %c0_152 = arith.constant 0 : index
    %c0_153 = arith.constant 0 : index
    %c0_154 = arith.constant 0 : index
    %224 = vector.load %arg16[%c0_152, %c0_153, %c0_154] : memref<1x128x32xbf16, #tpu.memory_space<vmem>>, vector<1x128x32xbf16>
    %225 = vector.shape_cast %224 : vector<1x128x32xbf16> to vector<128x32xbf16>
    %cst_155 = arith.constant dense<0.000000e+00> : vector<8x32xf32>
    %226 = tpu.matmul %223, %225, %cst_155 {dimension_numbers = #tpu.dot_dimension_numbers<[1], [0], [0], [1], [0, 0, 1, 1], [], []>} : vector<8x128xbf16>, vector<128x32xbf16>, vector<8x32xf32> -> vector<8x32xf32>
    %c0_156 = arith.constant 0 : index
    %c0_157 = arith.constant 0 : index
    %c0_158 = arith.constant 0 : index
    %227 = vector.load %arg17[%c0_156, %c0_157, %c0_158] : memref<1x1x32xf32, #tpu.memory_space<vmem>>, vector<1x1x32xf32>
    %228 = vector.shape_cast %227 : vector<1x1x32xf32> to vector<1x32xf32>
    %229 = vector.broadcast %228 : vector<1x32xf32> to vector<8x32xf32>
    %230 = arith.addf %226, %229 : vector<8x32xf32>
    %231 = arith.addf %212, %230 : vector<8x32xf32>
    %c0_159 = arith.constant 0 : index
    %c0_160 = arith.constant 0 : index
    %c0_161 = arith.constant 0 : index
    %232 = vector.load %arg18[%c0_159, %c0_160, %c0_161] : memref<1x1x32xf32, #tpu.memory_space<vmem>>, vector<1x1x32xf32>
    %233 = vector.shape_cast %232 : vector<1x1x32xf32> to vector<1x32xf32>
    %c0_162 = arith.constant 0 : index
    %c0_163 = arith.constant 0 : index
    %c0_164 = arith.constant 0 : index
    %234 = vector.load %arg19[%c0_162, %c0_163, %c0_164] : memref<1x1x32xf32, #tpu.memory_space<vmem>>, vector<1x1x32xf32>
    %235 = vector.shape_cast %234 : vector<1x1x32xf32> to vector<1x32xf32>
    %cst_165 = arith.constant dense<0.000000e+00> : vector<8xf32>
    %236 = vector.multi_reduction <add>, %231, %cst_165 [1] : vector<8x32xf32> to vector<8xf32>
    %237 = vector.shape_cast %236 : vector<8xf32> to vector<8x1xf32>
    %cst_166 = arith.constant 3.200000e+01 : f32
    %238 = vector.broadcast %cst_166 : f32 to vector<8x1xf32>
    %239 = arith.divf %237, %238 : vector<8x1xf32>
    %240 = vector.broadcast %239 : vector<8x1xf32> to vector<8x32xf32>
    %241 = arith.subf %231, %240 : vector<8x32xf32>
    %242 = arith.mulf %241, %241 : vector<8x32xf32>
    %cst_167 = arith.constant dense<0.000000e+00> : vector<8xf32>
    %243 = vector.multi_reduction <add>, %242, %cst_167 [1] : vector<8x32xf32> to vector<8xf32>
    %244 = vector.shape_cast %243 : vector<8xf32> to vector<8x1xf32>
    %cst_168 = arith.constant 3.200000e+01 : f32
    %245 = vector.broadcast %cst_168 : f32 to vector<8x1xf32>
    %246 = arith.divf %244, %245 : vector<8x1xf32>
    %cst_169 = arith.constant 9.99999974E-6 : f32
    %247 = vector.broadcast %cst_169 : f32 to vector<8x1xf32>
    %248 = arith.addf %246, %247 : vector<8x1xf32>
    %249 = math.rsqrt %248 : vector<8x1xf32>
    %250 = vector.broadcast %249 : vector<8x1xf32> to vector<8x32xf32>
    %251 = arith.mulf %241, %250 : vector<8x32xf32>
    %252 = vector.broadcast %233 : vector<1x32xf32> to vector<8x32xf32>
    %253 = arith.mulf %251, %252 : vector<8x32xf32>
    %254 = vector.broadcast %235 : vector<1x32xf32> to vector<8x32xf32>
    %255 = arith.addf %253, %254 : vector<8x32xf32>
    %256 = vector.shape_cast %255 : vector<8x32xf32> to vector<1x8x32xf32>
    %c0_170 = arith.constant 0 : index
    %c0_171 = arith.constant 0 : index
    %c0_172 = arith.constant 0 : index
    %257 = vector.load %arg21[%c0_170, %c0_171, %c0_172] : memref<1x8x32xf32, #tpu.memory_space<vmem>>, vector<1x8x32xf32>
    tpu.vector_store %arg21[%c0_170, %c0_171, %c0_172], %256 {strides = array<i32>} : memref<1x8x32xf32, #tpu.memory_space<vmem>>, vector<1x8x32xf32>,
    %c1_i32 = arith.constant 1 : i32
    %258 = arith.cmpi eq, %arg1, %c1_i32 : i32
    %259 = arith.extui %258 : i1 to i32
    %c0_i32_173 = arith.constant 0 : i32
    %260 = arith.cmpi ne, %259, %c0_i32_173 : i32
    scf.if %260 {
      %c0_174 = arith.constant 0 : index
      %c0_175 = arith.constant 0 : index
      %c0_176 = arith.constant 0 : index
      %261 = vector.load %arg21[%c0_174, %c0_175, %c0_176] : memref<1x8x32xf32, #tpu.memory_space<vmem>>, vector<1x8x32xf32>
      %c0_177 = arith.constant 0 : index
      %c0_178 = arith.constant 0 : index
      %c0_179 = arith.constant 0 : index
      %262 = vector.load %arg20[%c0_177, %c0_178, %c0_179] : memref<1x8x32xf32, #tpu.memory_space<vmem>>, vector<1x8x32xf32>
      tpu.vector_store %arg20[%c0_177, %c0_178, %c0_179], %261 {strides = array<i32>} : memref<1x8x32xf32, #tpu.memory_space<vmem>>, vector<1x8x32xf32>,
    } else {
    }
    return
  }
  func.func @transform_0(%arg0: i32, %arg1: i32) -> (i32, i32, i32) {
    %c0_i32 = arith.constant 0 : i32
    %c0_i32_0 = arith.constant 0 : i32
    %c0_i32_1 = arith.constant 0 : i32
    return %arg0, %c0_i32, %c0_i32_0 : i32, i32, i32
  }
  func.func @transform_1(%arg0: i32, %arg1: i32) -> (i32, i32, i32) {
    %c0_i32 = arith.constant 0 : i32
    %c0_i32_0 = arith.constant 0 : i32
    %c0_i32_1 = arith.constant 0 : i32
    return %arg0, %c0_i32, %c0_i32_0 : i32, i32, i32
  }
  func.func @transform_2(%arg0: i32, %arg1: i32) -> (i32, i32, i32, i32) {
    %c0_i32 = arith.constant 0 : i32
    %c0_i32_0 = arith.constant 0 : i32
    %c0_i32_1 = arith.constant 0 : i32
    %c0_i32_2 = arith.constant 0 : i32
    return %arg1, %c0_i32, %c0_i32_0, %c0_i32_1 : i32, i32, i32, i32
  }
  func.func @transform_3(%arg0: i32, %arg1: i32) -> (i32, i32, i32, i32) {
    %c0_i32 = arith.constant 0 : i32
    %c0_i32_0 = arith.constant 0 : i32
    %c0_i32_1 = arith.constant 0 : i32
    %c0_i32_2 = arith.constant 0 : i32
    return %arg1, %c0_i32, %c0_i32_0, %c0_i32_1 : i32, i32, i32, i32
  }
  func.func @transform_4(%arg0: i32, %arg1: i32) -> (i32, i32, i32, i32) {
    %c0_i32 = arith.constant 0 : i32
    %c0_i32_0 = arith.constant 0 : i32
    %c0_i32_1 = arith.constant 0 : i32
    %c0_i32_2 = arith.constant 0 : i32
    return %arg1, %c0_i32, %c0_i32_0, %c0_i32_1 : i32, i32, i32, i32
  }
  func.func @transform_5(%arg0: i32, %arg1: i32) -> (i32, i32, i32, i32) {
    %c0_i32 = arith.constant 0 : i32
    %c0_i32_0 = arith.constant 0 : i32
    %c0_i32_1 = arith.constant 0 : i32
    %c0_i32_2 = arith.constant 0 : i32
    return %arg1, %c0_i32, %c0_i32_0, %c0_i32_1 : i32, i32, i32, i32
  }
  func.func @transform_6(%arg0: i32, %arg1: i32) -> (i32, i32, i32, i32) {
    %c0_i32 = arith.constant 0 : i32
    %c0_i32_0 = arith.constant 0 : i32
    %c0_i32_1 = arith.constant 0 : i32
    %c0_i32_2 = arith.constant 0 : i32
    return %arg1, %c0_i32, %c0_i32_0, %c0_i32_1 : i32, i32, i32, i32
  }
  func.func @transform_7(%arg0: i32, %arg1: i32) -> (i32, i32, i32, i32) {
    %c0_i32 = arith.constant 0 : i32
    %c0_i32_0 = arith.constant 0 : i32
    %c0_i32_1 = arith.constant 0 : i32
    %c0_i32_2 = arith.constant 0 : i32
    return %arg1, %c0_i32, %c0_i32_0, %c0_i32_1 : i32, i32, i32, i32
  }
  func.func @transform_8(%arg0: i32, %arg1: i32) -> (i32, i32, i32) {
    %c0_i32 = arith.constant 0 : i32
    %c0_i32_0 = arith.constant 0 : i32
    %c0_i32_1 = arith.constant 0 : i32
    return %arg1, %c0_i32, %c0_i32_0 : i32, i32, i32
  }
  func.func @transform_9(%arg0: i32, %arg1: i32) -> (i32, i32, i32) {
    %c0_i32 = arith.constant 0 : i32
    %c0_i32_0 = arith.constant 0 : i32
    %c0_i32_1 = arith.constant 0 : i32
    return %arg1, %c0_i32, %c0_i32_0 : i32, i32, i32
  }
  func.func @transform_10(%arg0: i32, %arg1: i32) -> (i32, i32, i32) {
    %c0_i32 = arith.constant 0 : i32
    %c0_i32_0 = arith.constant 0 : i32
    %c0_i32_1 = arith.constant 0 : i32
    return %arg1, %c0_i32, %c0_i32_0 : i32, i32, i32
  }
  func.func @transform_11(%arg0: i32, %arg1: i32) -> (i32, i32, i32) {
    %c0_i32 = arith.constant 0 : i32
    %c0_i32_0 = arith.constant 0 : i32
    %c0_i32_1 = arith.constant 0 : i32
    return %arg1, %c0_i32, %c0_i32_0 : i32, i32, i32
  }
  func.func @transform_12(%arg0: i32, %arg1: i32) -> (i32, i32, i32) {
    %c0_i32 = arith.constant 0 : i32
    %c0_i32_0 = arith.constant 0 : i32
    %c0_i32_1 = arith.constant 0 : i32
    return %arg1, %c0_i32, %c0_i32_0 : i32, i32, i32
  }
  func.func @transform_13(%arg0: i32, %arg1: i32) -> (i32, i32, i32) {
    %c0_i32 = arith.constant 0 : i32
    %c0_i32_0 = arith.constant 0 : i32
    %c0_i32_1 = arith.constant 0 : i32
    return %arg1, %c0_i32, %c0_i32_0 : i32, i32, i32
  }
  func.func @transform_14(%arg0: i32, %arg1: i32) -> (i32, i32, i32) {
    %c0_i32 = arith.constant 0 : i32
    %c0_i32_0 = arith.constant 0 : i32
    %c0_i32_1 = arith.constant 0 : i32
    return %arg1, %c0_i32, %c0_i32_0 : i32, i32, i32
  }
  func.func @transform_15(%arg0: i32, %arg1: i32) -> (i32, i32, i32) {
    %c0_i32 = arith.constant 0 : i32
    %c0_i32_0 = arith.constant 0 : i32
    %c0_i32_1 = arith.constant 0 : i32
    return %arg1, %c0_i32, %c0_i32_0 : i32, i32, i32
  }
  func.func @transform_16(%arg0: i32, %arg1: i32) -> (i32, i32, i32) {
    %c0_i32 = arith.constant 0 : i32
    %c0_i32_0 = arith.constant 0 : i32
    %c0_i32_1 = arith.constant 0 : i32
    return %arg1, %c0_i32, %c0_i32_0 : i32, i32, i32
  }
  func.func @transform_17(%arg0: i32, %arg1: i32) -> (i32, i32, i32) {
    %c0_i32 = arith.constant 0 : i32
    %c0_i32_0 = arith.constant 0 : i32
    %c0_i32_1 = arith.constant 0 : i32
    return %arg1, %c0_i32, %c0_i32_0 : i32, i32, i32
  }
  func.func @transform_18(%arg0: i32, %arg1: i32) -> (i32, i32, i32) {
    %c0_i32 = arith.constant 0 : i32
    %c0_i32_0 = arith.constant 0 : i32
    %c0_i32_1 = arith.constant 0 : i32
    return %arg0, %c0_i32, %c0_i32_0 : i32, i32, i32
  }
}

</mosaic_0001>

<llo_original>
// kernel: tpu_custom_call.1
$region0: #{tpu_custom_call.1}
  #allocation0 [shape = 'u32[]', space=smem, size = 0x4, offset = 0x4, fixed_abs, tag = 'smem constant byte address 0x4 - core index']
  #allocation1 [shape = 'u32[144,128]{1,0:T(1,128)}', space=vmem, size = 0x12000, scoped, tag = 'internal scratch']
  #allocation2 [shape = 'f32[1,8,32]{2,1,0:T(8,128)}', space=vmem, size = 0x1000, scoped, tag = 'scratch operand']
  %s0 = inlined_call_operand.vmem [shape: f32[2,8,32], index: 0, kind: input, shape index: {}]
  %s1 = inlined_call_operand.vmem [shape: f32[2,1,8], index: 1, kind: input, shape index: {}]
  %s2 = inlined_call_operand.vmem [shape: bf16[2,4,32,8], index: 2, kind: input, shape index: {}]
  %s3 = inlined_call_operand.vmem [shape: f32[2,4,1,8], index: 3, kind: input, shape index: {}]
  %s4 = inlined_call_operand.vmem [shape: bf16[2,4,32,8], index: 4, kind: input, shape index: {}]
  %s5 = inlined_call_operand.vmem [shape: f32[2,4,1,8], index: 5, kind: input, shape index: {}]
  %s6 = inlined_call_operand.vmem [shape: bf16[2,4,32,8], index: 6, kind: input, shape index: {}]
  %s7 = inlined_call_operand.vmem [shape: f32[2,4,1,8], index: 7, kind: input, shape index: {}]
  %s8 = inlined_call_operand.vmem [shape: bf16[2,32,32], index: 8, kind: input, shape index: {}]
  %s9 = inlined_call_operand.vmem [shape: f32[2,1,32], index: 9, kind: input, shape index: {}]
  %s10 = inlined_call_operand.vmem [shape: f32[2,1,32], index: 10, kind: input, shape index: {}]
  %s11 = inlined_call_operand.vmem [shape: f32[2,1,32], index: 11, kind: input, shape index: {}]
  %s12 = inlined_call_operand.vmem [shape: bf16[2,32,128], index: 12, kind: input, shape index: {}]
  %s13 = inlined_call_operand.vmem [shape: f32[2,1,128], index: 13, kind: input, shape index: {}]
  %s14 = inlined_call_operand.vmem [shape: bf16[2,128,32], index: 14, kind: input, shape index: {}]
  %s15 = inlined_call_operand.vmem [shape: f32[2,1,32], index: 15, kind: input, shape index: {}]
  %s16 = inlined_call_operand.vmem [shape: f32[2,1,32], index: 16, kind: input, shape index: {}]
  %s17 = inlined_call_operand.vmem [shape: f32[2,1,32], index: 17, kind: input, shape index: {}]
  %s18 = inlined_call_operand.hbm [shape: f32[2,8,32], index: 18, kind: output, shape index: {}]
  %s19 = sld [smem:[#allocation0]]
  $region113: #{tpu_custom_call.1} parent=0
    _
  %s21 = ssub.s32 1, %s19
  %s22 = scalar_select 0, %s21, %s19
  $region1: #{tpu_custom_call.1} parent=0
    #allocation3 [shape = 'u8[8192]{0}', space=vmem, size = 0x2000, scoped, tag = 'output window, operand 0']
    #allocation4 [shape = 's32[2]{0}', space=sflag, size = 0x8, scoped, tag = 'scoped memory for tpu_custom_call.1']
    %23 = vsyncpa [#allocation4], 0
    %s24 = scalar_lea.sflag [#allocation4], 1
    %25 = vsyncpa %s24, 0
    loop: start=0, step=1, limit=6
    $region2: #{tpu_custom_call.1} parent=1 // loop_pre_header
      _
    $region3: #{tpu_custom_call.1} parent=1 // loop_header
      %s27 = sphi 0, %s31
      %p28 = scmp.ge.s32.totalorder %s27, 6
      %s34 = sphi 0, %s46
      %s35 = sphi 0, %s42
      %s36 = sphi 0, %s34
      %s37 = sphi 0, %s35
      %s38 = sphi 0, %s36
      %s39 = sphi 0, %s37
      %s49 = sphi 0, %s51
      %s52 = sphi 0, %s49
      %s53 = sphi 0, %s52
      %s69 = sphi 0, %s53
      %s75 = sphi 0, %s77
      %s78 = sphi 0, %s75
      %s79 = sphi 0, %s78
      %s95 = sphi 0, %s79
      %s101 = sphi 0, %s103
      %s104 = sphi 0, %s101
      %s105 = sphi 0, %s104
      %s121 = sphi 0, %s105
      %s127 = sphi 0, %s129
      %s130 = sphi 0, %s127
      %s131 = sphi 0, %s130
      %s147 = sphi 0, %s131
      %s153 = sphi 0, %s155
      %s156 = sphi 0, %s153
      %s157 = sphi 0, %s156
      %s173 = sphi 0, %s157
      %s179 = sphi 0, %s181
      %s182 = sphi 0, %s179
      %s183 = sphi 0, %s182
      %s199 = sphi 0, %s183
      %s205 = sphi 0, %s207
      %s208 = sphi 0, %s205
      %s209 = sphi 0, %s208
      %s225 = sphi 0, %s209
      %s231 = sphi 0, %s233
      %s234 = sphi 0, %s231
      %s235 = sphi 0, %s234
      %s251 = sphi 0, %s235
      %s257 = sphi 0, %s259
      %s260 = sphi 0, %s257
      %s261 = sphi 0, %s260
      %s277 = sphi 0, %s261
      %s283 = sphi 0, %s285
      %s286 = sphi 0, %s283
      %s287 = sphi 0, %s286
      %s303 = sphi 0, %s287
      %s309 = sphi 0, %s311
      %s312 = sphi 0, %s309
      %s313 = sphi 0, %s312
      %s329 = sphi 0, %s313
      %s335 = sphi 0, %s337
      %s338 = sphi 0, %s335
      %s339 = sphi 0, %s338
      %s355 = sphi 0, %s339
      %s361 = sphi 0, %s363
      %s364 = sphi 0, %s361
      %s365 = sphi 0, %s364
      %s381 = sphi 0, %s365
      %s387 = sphi 0, %s389
      %s390 = sphi 0, %s387
      %s391 = sphi 0, %s390
      %s407 = sphi 0, %s391
      %s413 = sphi 0, %s415
      %s416 = sphi 0, %s413
      %s417 = sphi 0, %s416
      %s433 = sphi 0, %s417
      %s439 = sphi 0, %s441
      %s442 = sphi 0, %s439
      %s443 = sphi 0, %s442
      %s459 = sphi 0, %s443
      %s465 = sphi 0, %s467
      %s468 = sphi 0, %s465
      %s469 = sphi 0, %s468
      %s485 = sphi 0, %s469
      %s491 = sphi 0, %s493
      %s494 = sphi 0, %s491
      %s495 = sphi 0, %s494
      %s511 = sphi 0, %s495
      %s517 = sphi 0, %s519
      %s520 = sphi 0, %s517
      %s521 = sphi 0, %s520
      %s537 = sphi 0, %s521
    $region4: #{tpu_custom_call.1} parent=1 // loop_header_branch
      %30 = sbr.rel (%p28) target = $region8
    $region5: #{tpu_custom_call.1} parent=1 // loop_body
      %s32 = ssub.s32 %s27, 1
      %s33 = ssub.s32 %s27, 2
      %s40 = sadd.s32 1, %s35
      %p41 = scmp.ge.s32.totalorder %s40, 2
      %s42 = scalar_select %p41, 0, %s40
      %s43 = sadd.s32 1, %s34
      %s44 = scalar_select %p41, %s43, %s34
      %p45 = scmp.ge.s32.totalorder %s44, 2
      %s46 = scalar_select %p45, 0, %s44
      %s47 = ssub.s32 %s34, %s46
      %p48 = scmp.eq.s32.totalorder %s47, 0
      %s50 = sadd.s32 %s49, 1
      %s51 = scalar_select %p48, %s49, %s50
      %p54 = pneg %p48
      %p55 = scmp.eq.s32.totalorder %s27, 3
      %p56 = por %p54, %p55
      %p57 = scmp.ne.s32.totalorder %s49, %s52
      %p58 = scmp.eq.s32.totalorder %s27, 0
      %p59 = por %p57, %p58
      %p60 = scmp.ne.s32.totalorder %s49, %s52
      %p61 = scmp.eq.s32.totalorder %s32, 3
      %p62 = por %p60, %p61
      %p63 = scmp.ne.s32.totalorder %s52, %s53
      %p64 = scmp.eq.s32.totalorder %s32, 0
      %p65 = por %p63, %p64
      %p66 = scmp.ne.s32.totalorder %s52, %s53
      %p67 = scmp.eq.s32.totalorder %s33, 3
      %p68 = por %p66, %p67
      %p70 = scmp.ne.s32.totalorder %s53, %s69
      %p71 = scmp.eq.s32.totalorder %s33, 0
      %p72 = por %p70, %p71
      %s73 = ssub.s32 %s34, %s46
      %p74 = scmp.eq.s32.totalorder %s73, 0
      %s76 = sadd.s32 %s75, 1
      %s77 = scalar_select %p74, %s75, %s76
      %p80 = pneg %p74
      %p81 = scmp.eq.s32.totalorder %s27, 3
      %p82 = por %p80, %p81
      %p83 = scmp.ne.s32.totalorder %s75, %s78
      %p84 = scmp.eq.s32.totalorder %s27, 0
      %p85 = por %p83, %p84
      %p86 = scmp.ne.s32.totalorder %s75, %s78
      %p87 = scmp.eq.s32.totalorder %s32, 3
      %p88 = por %p86, %p87
      %p89 = scmp.ne.s32.totalorder %s78, %s79
      %p90 = scmp.eq.s32.totalorder %s32, 0
      %p91 = por %p89, %p90
      %p92 = scmp.ne.s32.totalorder %s78, %s79
      %p93 = scmp.eq.s32.totalorder %s33, 3
      %p94 = por %p92, %p93
      %p96 = scmp.ne.s32.totalorder %s79, %s95
      %p97 = scmp.eq.s32.totalorder %s33, 0
      %p98 = por %p96, %p97
      %s99 = ssub.s32 %s35, %s42
      %p100 = scmp.eq.s32.totalorder %s99, 0
      %s102 = sadd.s32 %s101, 1
      %s103 = scalar_select %p100, %s101, %s102
      %p106 = pneg %p100
      %p107 = scmp.eq.s32.totalorder %s27, 3
      %p108 = por %p106, %p107
      %p109 = scmp.ne.s32.totalorder %s101, %s104
      %p110 = scmp.eq.s32.totalorder %s27, 0
      %p111 = por %p109, %p110
      %p112 = scmp.ne.s32.totalorder %s101, %s104
      %p113 = scmp.eq.s32.totalorder %s32, 3
      %p114 = por %p112, %p113
      %p115 = scmp.ne.s32.totalorder %s104, %s105
      %p116 = scmp.eq.s32.totalorder %s32, 0
      %p117 = por %p115, %p116
      %p118 = scmp.ne.s32.totalorder %s104, %s105
      %p119 = scmp.eq.s32.totalorder %s33, 3
      %p120 = por %p118, %p119
      %p122 = scmp.ne.s32.totalorder %s105, %s121
      %p123 = scmp.eq.s32.totalorder %s33, 0
      %p124 = por %p122, %p123
      %s125 = ssub.s32 %s35, %s42
      %p126 = scmp.eq.s32.totalorder %s125, 0
      %s128 = sadd.s32 %s127, 1
      %s129 = scalar_select %p126, %s127, %s128
      %p132 = pneg %p126
      %p133 = scmp.eq.s32.totalorder %s27, 3
      %p134 = por %p132, %p133
      %p135 = scmp.ne.s32.totalorder %s127, %s130
      %p136 = scmp.eq.s32.totalorder %s27, 0
      %p137 = por %p135, %p136
      %p138 = scmp.ne.s32.totalorder %s127, %s130
      %p139 = scmp.eq.s32.totalorder %s32, 3
      %p140 = por %p138, %p139
      %p141 = scmp.ne.s32.totalorder %s130, %s131
      %p142 = scmp.eq.s32.totalorder %s32, 0
      %p143 = por %p141, %p142
      %p144 = scmp.ne.s32.totalorder %s130, %s131
      %p145 = scmp.eq.s32.totalorder %s33, 3
      %p146 = por %p144, %p145
      %p148 = scmp.ne.s32.totalorder %s131, %s147
      %p149 = scmp.eq.s32.totalorder %s33, 0
      %p150 = por %p148, %p149
      %s151 = ssub.s32 %s35, %s42
      %p152 = scmp.eq.s32.totalorder %s151, 0
      %s154 = sadd.s32 %s153, 1
      %s155 = scalar_select %p152, %s153, %s154
      %p158 = pneg %p152
      %p159 = scmp.eq.s32.totalorder %s27, 3
      %p160 = por %p158, %p159
      %p161 = scmp.ne.s32.totalorder %s153, %s156
      %p162 = scmp.eq.s32.totalorder %s27, 0
      %p163 = por %p161, %p162
      %p164 = scmp.ne.s32.totalorder %s153, %s156
      %p165 = scmp.eq.s32.totalorder %s32, 3
      %p166 = por %p164, %p165
      %p167 = scmp.ne.s32.totalorder %s156, %s157
      %p168 = scmp.eq.s32.totalorder %s32, 0
      %p169 = por %p167, %p168
      %p170 = scmp.ne.s32.totalorder %s156, %s157
      %p171 = scmp.eq.s32.totalorder %s33, 3
      %p172 = por %p170, %p171
      %p174 = scmp.ne.s32.totalorder %s157, %s173
      %p175 = scmp.eq.s32.totalorder %s33, 0
      %p176 = por %p174, %p175
      %s177 = ssub.s32 %s35, %s42
      %p178 = scmp.eq.s32.totalorder %s177, 0
      %s180 = sadd.s32 %s179, 1
      %s181 = scalar_select %p178, %s179, %s180
      %p184 = pneg %p178
      %p185 = scmp.eq.s32.totalorder %s27, 3
      %p186 = por %p184, %p185
      %p187 = scmp.ne.s32.totalorder %s179, %s182
      %p188 = scmp.eq.s32.totalorder %s27, 0
      %p189 = por %p187, %p188
      %p190 = scmp.ne.s32.totalorder %s179, %s182
      %p191 = scmp.eq.s32.totalorder %s32, 3
      %p192 = por %p190, %p191
      %p193 = scmp.ne.s32.totalorder %s182, %s183
      %p194 = scmp.eq.s32.totalorder %s32, 0
      %p195 = por %p193, %p194
      %p196 = scmp.ne.s32.totalorder %s182, %s183
      %p197 = scmp.eq.s32.totalorder %s33, 3
      %p198 = por %p196, %p197
      %p200 = scmp.ne.s32.totalorder %s183, %s199
      %p201 = scmp.eq.s32.totalorder %s33, 0
      %p202 = por %p200, %p201
      %s203 = ssub.s32 %s35, %s42
      %p204 = scmp.eq.s32.totalorder %s203, 0
      %s206 = sadd.s32 %s205, 1
      %s207 = scalar_select %p204, %s205, %s206
      %p210 = pneg %p204
      %p211 = scmp.eq.s32.totalorder %s27, 3
      %p212 = por %p210, %p211
      %p213 = scmp.ne.s32.totalorder %s205, %s208
      %p214 = scmp.eq.s32.totalorder %s27, 0
      %p215 = por %p213, %p214
      %p216 = scmp.ne.s32.totalorder %s205, %s208
      %p217 = scmp.eq.s32.totalorder %s32, 3
      %p218 = por %p216, %p217
      %p219 = scmp.ne.s32.totalorder %s208, %s209
      %p220 = scmp.eq.s32.totalorder %s32, 0
      %p221 = por %p219, %p220
      %p222 = scmp.ne.s32.totalorder %s208, %s209
      %p223 = scmp.eq.s32.totalorder %s33, 3
      %p224 = por %p222, %p223
      %p226 = scmp.ne.s32.totalorder %s209, %s225
      %p227 = scmp.eq.s32.totalorder %s33, 0
      %p228 = por %p226, %p227
      %s229 = ssub.s32 %s35, %s42
      %p230 = scmp.eq.s32.totalorder %s229, 0
      %s232 = sadd.s32 %s231, 1
      %s233 = scalar_select %p230, %s231, %s232
      %p236 = pneg %p230
      %p237 = scmp.eq.s32.totalorder %s27, 3
      %p238 = por %p236, %p237
      %p239 = scmp.ne.s32.totalorder %s231, %s234
      %p240 = scmp.eq.s32.totalorder %s27, 0
      %p241 = por %p239, %p240
      %p242 = scmp.ne.s32.totalorder %s231, %s234
      %p243 = scmp.eq.s32.totalorder %s32, 3
      %p244 = por %p242, %p243
      %p245 = scmp.ne.s32.totalorder %s234, %s235
      %p246 = scmp.eq.s32.totalorder %s32, 0
      %p247 = por %p245, %p246
      %p248 = scmp.ne.s32.totalorder %s234, %s235
      %p249 = scmp.eq.s32.totalorder %s33, 3
      %p250 = por %p248, %p249
      %p252 = scmp.ne.s32.totalorder %s235, %s251
      %p253 = scmp.eq.s32.totalorder %s33, 0
      %p254 = por %p252, %p253
      %s255 = ssub.s32 %s35, %s42
      %p256 = scmp.eq.s32.totalorder %s255, 0
      %s258 = sadd.s32 %s257, 1
      %s259 = scalar_select %p256, %s257, %s258
      %p262 = pneg %p256
      %p263 = scmp.eq.s32.totalorder %s27, 3
      %p264 = por %p262, %p263
      %p265 = scmp.ne.s32.totalorder %s257, %s260
      %p266 = scmp.eq.s32.totalorder %s27, 0
      %p267 = por %p265, %p266
      %p268 = scmp.ne.s32.totalorder %s257, %s260
      %p269 = scmp.eq.s32.totalorder %s32, 3
      %p270 = por %p268, %p269
      %p271 = scmp.ne.s32.totalorder %s260, %s261
      %p272 = scmp.eq.s32.totalorder %s32, 0
      %p273 = por %p271, %p272
      %p274 = scmp.ne.s32.totalorder %s260, %s261
      %p275 = scmp.eq.s32.totalorder %s33, 3
      %p276 = por %p274, %p275
      %p278 = scmp.ne.s32.totalorder %s261, %s277
      %p279 = scmp.eq.s32.totalorder %s33, 0
      %p280 = por %p278, %p279
      %s281 = ssub.s32 %s35, %s42
      %p282 = scmp.eq.s32.totalorder %s281, 0
      %s284 = sadd.s32 %s283, 1
      %s285 = scalar_select %p282, %s283, %s284
      %p288 = pneg %p282
      %p289 = scmp.eq.s32.totalorder %s27, 3
      %p290 = por %p288, %p289
      %p291 = scmp.ne.s32.totalorder %s283, %s286
      %p292 = scmp.eq.s32.totalorder %s27, 0
      %p293 = por %p291, %p292
      %p294 = scmp.ne.s32.totalorder %s283, %s286
      %p295 = scmp.eq.s32.totalorder %s32, 3
      %p296 = por %p294, %p295
      %p297 = scmp.ne.s32.totalorder %s286, %s287
      %p298 = scmp.eq.s32.totalorder %s32, 0
      %p299 = por %p297, %p298
      %p300 = scmp.ne.s32.totalorder %s286, %s287
      %p301 = scmp.eq.s32.totalorder %s33, 3
      %p302 = por %p300, %p301
      %p304 = scmp.ne.s32.totalorder %s287, %s303
      %p305 = scmp.eq.s32.totalorder %s33, 0
      %p306 = por %p304, %p305
      %s307 = ssub.s32 %s35, %s42
      %p308 = scmp.eq.s32.totalorder %s307, 0
      %s310 = sadd.s32 %s309, 1
      %s311 = scalar_select %p308, %s309, %s310
      %p314 = pneg %p308
      %p315 = scmp.eq.s32.totalorder %s27, 3
      %p316 = por %p314, %p315
      %p317 = scmp.ne.s32.totalorder %s309, %s312
      %p318 = scmp.eq.s32.totalorder %s27, 0
      %p319 = por %p317, %p318
      %p320 = scmp.ne.s32.totalorder %s309, %s312
      %p321 = scmp.eq.s32.totalorder %s32, 3
      %p322 = por %p320, %p321
      %p323 = scmp.ne.s32.totalorder %s312, %s313
      %p324 = scmp.eq.s32.totalorder %s32, 0
      %p325 = por %p323, %p324
      %p326 = scmp.ne.s32.totalorder %s312, %s313
      %p327 = scmp.eq.s32.totalorder %s33, 3
      %p328 = por %p326, %p327
      %p330 = scmp.ne.s32.totalorder %s313, %s329
      %p331 = scmp.eq.s32.totalorder %s33, 0
      %p332 = por %p330, %p331
      %s333 = ssub.s32 %s35, %s42
      %p334 = scmp.eq.s32.totalorder %s333, 0
      %s336 = sadd.s32 %s335, 1
      %s337 = scalar_select %p334, %s335, %s336
      %p340 = pneg %p334
      %p341 = scmp.eq.s32.totalorder %s27, 3
      %p342 = por %p340, %p341
      %p343 = scmp.ne.s32.totalorder %s335, %s338
      %p344 = scmp.eq.s32.totalorder %s27, 0
      %p345 = por %p343, %p344
      %p346 = scmp.ne.s32.totalorder %s335, %s338
      %p347 = scmp.eq.s32.totalorder %s32, 3
      %p348 = por %p346, %p347
      %p349 = scmp.ne.s32.totalorder %s338, %s339
      %p350 = scmp.eq.s32.totalorder %s32, 0
      %p351 = por %p349, %p350
      %p352 = scmp.ne.s32.totalorder %s338, %s339
      %p353 = scmp.eq.s32.totalorder %s33, 3
      %p354 = por %p352, %p353
      %p356 = scmp.ne.s32.totalorder %s339, %s355
      %p357 = scmp.eq.s32.totalorder %s33, 0
      %p358 = por %p356, %p357
      %s359 = ssub.s32 %s35, %s42
      %p360 = scmp.eq.s32.totalorder %s359, 0
      %s362 = sadd.s32 %s361, 1
      %s363 = scalar_select %p360, %s361, %s362
      %p366 = pneg %p360
      %p367 = scmp.eq.s32.totalorder %s27, 3
      %p368 = por %p366, %p367
      %p369 = scmp.ne.s32.totalorder %s361, %s364
      %p370 = scmp.eq.s32.totalorder %s27, 0
      %p371 = por %p369, %p370
      %p372 = scmp.ne.s32.totalorder %s361, %s364
      %p373 = scmp.eq.s32.totalorder %s32, 3
      %p374 = por %p372, %p373
      %p375 = scmp.ne.s32.totalorder %s364, %s365
      %p376 = scmp.eq.s32.totalorder %s32, 0
      %p377 = por %p375, %p376
      %p378 = scmp.ne.s32.totalorder %s364, %s365
      %p379 = scmp.eq.s32.totalorder %s33, 3
      %p380 = por %p378, %p379
      %p382 = scmp.ne.s32.totalorder %s365, %s381
      %p383 = scmp.eq.s32.totalorder %s33, 0
      %p384 = por %p382, %p383
      %s385 = ssub.s32 %s35, %s42
      %p386 = scmp.eq.s32.totalorder %s385, 0
      %s388 = sadd.s32 %s387, 1
      %s389 = scalar_select %p386, %s387, %s388
      %p392 = pneg %p386
      %p393 = scmp.eq.s32.totalorder %s27, 3
      %p394 = por %p392, %p393
      %p395 = scmp.ne.s32.totalorder %s387, %s390
      %p396 = scmp.eq.s32.totalorder %s27, 0
      %p397 = por %p395, %p396
      %p398 = scmp.ne.s32.totalorder %s387, %s390
      %p399 = scmp.eq.s32.totalorder %s32, 3
      %p400 = por %p398, %p399
      %p401 = scmp.ne.s32.totalorder %s390, %s391
      %p402 = scmp.eq.s32.totalorder %s32, 0
      %p403 = por %p401, %p402
      %p404 = scmp.ne.s32.totalorder %s390, %s391
      %p405 = scmp.eq.s32.totalorder %s33, 3
      %p406 = por %p404, %p405
      %p408 = scmp.ne.s32.totalorder %s391, %s407
      %p409 = scmp.eq.s32.totalorder %s33, 0
      %p410 = por %p408, %p409
      %s411 = ssub.s32 %s35, %s42
      %p412 = scmp.eq.s32.totalorder %s411, 0
      %s414 = sadd.s32 %s413, 1
      %s415 = scalar_select %p412, %s413, %s414
      %p418 = pneg %p412
      %p419 = scmp.eq.s32.totalorder %s27, 3
      %p420 = por %p418, %p419
      %p421 = scmp.ne.s32.totalorder %s413, %s416
      %p422 = scmp.eq.s32.totalorder %s27, 0
      %p423 = por %p421, %p422
      %p424 = scmp.ne.s32.totalorder %s413, %s416
      %p425 = scmp.eq.s32.totalorder %s32, 3
      %p426 = por %p424, %p425
      %p427 = scmp.ne.s32.totalorder %s416, %s417
      %p428 = scmp.eq.s32.totalorder %s32, 0
      %p429 = por %p427, %p428
      %p430 = scmp.ne.s32.totalorder %s416, %s417
      %p431 = scmp.eq.s32.totalorder %s33, 3
      %p432 = por %p430, %p431
      %p434 = scmp.ne.s32.totalorder %s417, %s433
      %p435 = scmp.eq.s32.totalorder %s33, 0
      %p436 = por %p434, %p435
      %s437 = ssub.s32 %s35, %s42
      %p438 = scmp.eq.s32.totalorder %s437, 0
      %s440 = sadd.s32 %s439, 1
      %s441 = scalar_select %p438, %s439, %s440
      %p444 = pneg %p438
      %p445 = scmp.eq.s32.totalorder %s27, 3
      %p446 = por %p444, %p445
      %p447 = scmp.ne.s32.totalorder %s439, %s442
      %p448 = scmp.eq.s32.totalorder %s27, 0
      %p449 = por %p447, %p448
      %p450 = scmp.ne.s32.totalorder %s439, %s442
      %p451 = scmp.eq.s32.totalorder %s32, 3
      %p452 = por %p450, %p451
      %p453 = scmp.ne.s32.totalorder %s442, %s443
      %p454 = scmp.eq.s32.totalorder %s32, 0
      %p455 = por %p453, %p454
      %p456 = scmp.ne.s32.totalorder %s442, %s443
      %p457 = scmp.eq.s32.totalorder %s33, 3
      %p458 = por %p456, %p457
      %p460 = scmp.ne.s32.totalorder %s443, %s459
      %p461 = scmp.eq.s32.totalorder %s33, 0
      %p462 = por %p460, %p461
      %s463 = ssub.s32 %s35, %s42
      %p464 = scmp.eq.s32.totalorder %s463, 0
      %s466 = sadd.s32 %s465, 1
      %s467 = scalar_select %p464, %s465, %s466
      %p470 = pneg %p464
      %p471 = scmp.eq.s32.totalorder %s27, 3
      %p472 = por %p470, %p471
      %p473 = scmp.ne.s32.totalorder %s465, %s468
      %p474 = scmp.eq.s32.totalorder %s27, 0
      %p475 = por %p473, %p474
      %p476 = scmp.ne.s32.totalorder %s465, %s468
      %p477 = scmp.eq.s32.totalorder %s32, 3
      %p478 = por %p476, %p477
      %p479 = scmp.ne.s32.totalorder %s468, %s469
      %p480 = scmp.eq.s32.totalorder %s32, 0
      %p481 = por %p479, %p480
      %p482 = scmp.ne.s32.totalorder %s468, %s469
      %p483 = scmp.eq.s32.totalorder %s33, 3
      %p484 = por %p482, %p483
      %p486 = scmp.ne.s32.totalorder %s469, %s485
      %p487 = scmp.eq.s32.totalorder %s33, 0
      %p488 = por %p486, %p487
      %s489 = ssub.s32 %s35, %s42
      %p490 = scmp.eq.s32.totalorder %s489, 0
      %s492 = sadd.s32 %s491, 1
      %s493 = scalar_select %p490, %s491, %s492
      %p496 = pneg %p490
      %p497 = scmp.eq.s32.totalorder %s27, 3
      %p498 = por %p496, %p497
      %p499 = scmp.ne.s32.totalorder %s491, %s494
      %p500 = scmp.eq.s32.totalorder %s27, 0
      %p501 = por %p499, %p500
      %p502 = scmp.ne.s32.totalorder %s491, %s494
      %p503 = scmp.eq.s32.totalorder %s32, 3
      %p504 = por %p502, %p503
      %p505 = scmp.ne.s32.totalorder %s494, %s495
      %p506 = scmp.eq.s32.totalorder %s32, 0
      %p507 = por %p505, %p506
      %p508 = scmp.ne.s32.totalorder %s494, %s495
      %p509 = scmp.eq.s32.totalorder %s33, 3
      %p510 = por %p508, %p509
      %p512 = scmp.ne.s32.totalorder %s495, %s511
      %p513 = scmp.eq.s32.totalorder %s33, 0
      %p514 = por %p512, %p513
      %s515 = ssub.s32 %s34, %s46
      %p516 = scmp.eq.s32.totalorder %s515, 0
      %s518 = sadd.s32 %s517, 1
      %s519 = scalar_select %p516, %s517, %s518
      %p522 = pneg %p516
      %p523 = scmp.eq.s32.totalorder %s27, 3
      %p524 = por %p522, %p523
      %p525 = scmp.ne.s32.totalorder %s517, %s520
      %p526 = scmp.eq.s32.totalorder %s27, 0
      %p527 = por %p525, %p526
      %p528 = scmp.ne.s32.totalorder %s517, %s520
      %p529 = scmp.eq.s32.totalorder %s32, 3
      %p530 = por %p528, %p529
      %p531 = scmp.ne.s32.totalorder %s520, %s521
      %p532 = scmp.eq.s32.totalorder %s32, 0
      %p533 = por %p531, %p532
      %p534 = scmp.ne.s32.totalorder %s520, %s521
      %p535 = scmp.eq.s32.totalorder %s33, 3
      %p536 = por %p534, %p535
      %p538 = scmp.ne.s32.totalorder %s521, %s537
      %p539 = scmp.eq.s32.totalorder %s33, 0
      %p540 = por %p538, %p539
      %p541 = scmp.le.s32.totalorder 1, %s27
      %p542 = scmp.lt.s32.totalorder %s27, 5
      %p543 = pnand %p541, %p542
      %p544 = pneg %p543
      // Predicated region
      $region9: #{tpu_custom_call.1} parent=5 // pred_check
        _
      $region10: #{tpu_custom_call.1} parent=5 // pred_check_branch
        %546 = sbr.rel (%p543) target = $region12
      $region11: #{tpu_custom_call.1} parent=5 // pred_region
        %s547 = ssub.s32 %s27, 1
      $region12: #{tpu_custom_call.1} parent=5 // pred_fallthru
        _
      %p548 = scmp.lt.s32.totalorder %s27, 4
      // Predicated region
      $region13: #{tpu_custom_call.1} parent=5 // pred_check
        %p549 = pneg %p548
      $region14: #{tpu_custom_call.1} parent=5 // pred_check_branch
        %551 = sbr.rel (%p549) target = $region16
      $region15: #{tpu_custom_call.1} parent=5 // pred_region
        // Predicated region
        $region17: #{tpu_custom_call.1} parent=15 // pred_check
          %p552 = pneg %p59
        $region18: #{tpu_custom_call.1} parent=15 // pred_check_branch
          %554 = sbr.rel (%p552) target = $region20
        $region19: #{tpu_custom_call.1} parent=15 // pred_region
          %p555 = scmp.lt.s32.totalorder %s34, 1
          %s556 = scalar_select %p555, %s34, 1
          %s557 = smul.addr %s556, 8
          %s558 = scalar_lea.vmem %s0, %s557
        $region20: #{tpu_custom_call.1} parent=15 // pred_fallthru
          _
        // Predicated region
        $region21: #{tpu_custom_call.1} parent=15 // pred_check
          %p559 = pneg %p85
        $region22: #{tpu_custom_call.1} parent=15 // pred_check_branch
          %561 = sbr.rel (%p559) target = $region24
        $region23: #{tpu_custom_call.1} parent=15 // pred_region
          %p562 = scmp.lt.s32.totalorder %s34, 1
          %s563 = scalar_select %p562, %s34, 1
          %s564 = scalar_lea.vmem %s1, %s563
        $region24: #{tpu_custom_call.1} parent=15 // pred_fallthru
          _
        // Predicated region
        $region25: #{tpu_custom_call.1} parent=15 // pred_check
          %p565 = pneg %p111
        $region26: #{tpu_custom_call.1} parent=15 // pred_check_branch
          %567 = sbr.rel (%p565) target = $region28
        $region27: #{tpu_custom_call.1} parent=15 // pred_region
          %p568 = scmp.lt.s32.totalorder %s35, 1
          %s569 = scalar_select %p568, %s35, 1
          %s570 = smul.addr %s569, 16
          %s571 = smul.addr %s570, 4
          %s572 = scalar_lea.vmem %s2, %s571
        $region28: #{tpu_custom_call.1} parent=15 // pred_fallthru
          _
        // Predicated region
        $region29: #{tpu_custom_call.1} parent=15 // pred_check
          %p573 = pneg %p137
        $region30: #{tpu_custom_call.1} parent=15 // pred_check_branch
          %575 = sbr.rel (%p573) target = $region32
        $region31: #{tpu_custom_call.1} parent=15 // pred_region
          %p576 = scmp.lt.s32.totalorder %s35, 1
          %s577 = scalar_select %p576, %s35, 1
          %s578 = smul.addr %s577, 4
          %s579 = scalar_lea.vmem %s3, %s578
        $region32: #{tpu_custom_call.1} parent=15 // pred_fallthru
          _
        // Predicated region
        $region33: #{tpu_custom_call.1} parent=15 // pred_check
          %p580 = pneg %p163
        $region34: #{tpu_custom_call.1} parent=15 // pred_check_branch
          %582 = sbr.rel (%p580) target = $region36
        $region35: #{tpu_custom_call.1} parent=15 // pred_region
          %p583 = scmp.lt.s32.totalorder %s35, 1
          %s584 = scalar_select %p583, %s35, 1
          %s585 = smul.addr %s584, 16
          %s586 = smul.addr %s585, 4
          %s587 = scalar_lea.vmem %s4, %s586
        $region36: #{tpu_custom_call.1} parent=15 // pred_fallthru
          _
        // Predicated region
        $region37: #{tpu_custom_call.1} parent=15 // pred_check
          %p588 = pneg %p189
        $region38: #{tpu_custom_call.1} parent=15 // pred_check_branch
          %590 = sbr.rel (%p588) target = $region40
        $region39: #{tpu_custom_call.1} parent=15 // pred_region
          %p591 = scmp.lt.s32.totalorder %s35, 1
          %s592 = scalar_select %p591, %s35, 1
          %s593 = smul.addr %s592, 4
          %s594 = scalar_lea.vmem %s5, %s593
        $region40: #{tpu_custom_call.1} parent=15 // pred_fallthru
          _
        // Predicated region
        $region41: #{tpu_custom_call.1} parent=15 // pred_check
          %p595 = pneg %p215
        $region42: #{tpu_custom_call.1} parent=15 // pred_check_branch
          %597 = sbr.rel (%p595) target = $region44
        $region43: #{tpu_custom_call.1} parent=15 // pred_region
          %p598 = scmp.lt.s32.totalorder %s35, 1
          %s599 = scalar_select %p598, %s35, 1
          %s600 = smul.addr %s599, 16
          %s601 = smul.addr %s600, 4
          %s602 = scalar_lea.vmem %s6, %s601
        $region44: #{tpu_custom_call.1} parent=15 // pred_fallthru
          _
        // Predicated region
        $region45: #{tpu_custom_call.1} parent=15 // pred_check
          %p603 = pneg %p241
        $region46: #{tpu_custom_call.1} parent=15 // pred_check_branch
          %605 = sbr.rel (%p603) target = $region48
        $region47: #{tpu_custom_call.1} parent=15 // pred_region
          %p606 = scmp.lt.s32.totalorder %s35, 1
          %s607 = scalar_select %p606, %s35, 1
          %s608 = smul.addr %s607, 4
          %s609 = scalar_lea.vmem %s7, %s608
        $region48: #{tpu_custom_call.1} parent=15 // pred_fallthru
          _
        // Predicated region
        $region49: #{tpu_custom_call.1} parent=15 // pred_check
          %p610 = pneg %p267
        $region50: #{tpu_custom_call.1} parent=15 // pred_check_branch
          %612 = sbr.rel (%p610) target = $region52
        $region51: #{tpu_custom_call.1} parent=15 // pred_region
          %p613 = scmp.lt.s32.totalorder %s35, 1
          %s614 = scalar_select %p613, %s35, 1
          %s615 = smul.addr %s614, 4
          %s616 = smul.addr %s615, 4
          %s617 = scalar_lea.vmem %s8, %s616
        $region52: #{tpu_custom_call.1} parent=15 // pred_fallthru
          _
        // Predicated region
        $region53: #{tpu_custom_call.1} parent=15 // pred_check
          %p618 = pneg %p293
        $region54: #{tpu_custom_call.1} parent=15 // pred_check_branch
          %620 = sbr.rel (%p618) target = $region56
        $region55: #{tpu_custom_call.1} parent=15 // pred_region
          %p621 = scmp.lt.s32.totalorder %s35, 1
          %s622 = scalar_select %p621, %s35, 1
          %s623 = scalar_lea.vmem %s9, %s622
        $region56: #{tpu_custom_call.1} parent=15 // pred_fallthru
          _
        // Predicated region
        $region57: #{tpu_custom_call.1} parent=15 // pred_check
          %p624 = pneg %p319
        $region58: #{tpu_custom_call.1} parent=15 // pred_check_branch
          %626 = sbr.rel (%p624) target = $region60
        $region59: #{tpu_custom_call.1} parent=15 // pred_region
          %p627 = scmp.lt.s32.totalorder %s35, 1
          %s628 = scalar_select %p627, %s35, 1
          %s629 = scalar_lea.vmem %s10, %s628
        $region60: #{tpu_custom_call.1} parent=15 // pred_fallthru
          _
        // Predicated region
        $region61: #{tpu_custom_call.1} parent=15 // pred_check
          %p630 = pneg %p345
        $region62: #{tpu_custom_call.1} parent=15 // pred_check_branch
          %632 = sbr.rel (%p630) target = $region64
        $region63: #{tpu_custom_call.1} parent=15 // pred_region
          %p633 = scmp.lt.s32.totalorder %s35, 1
          %s634 = scalar_select %p633, %s35, 1
          %s635 = scalar_lea.vmem %s11, %s634
        $region64: #{tpu_custom_call.1} parent=15 // pred_fallthru
          _
        // Predicated region
        $region65: #{tpu_custom_call.1} parent=15 // pred_check
          %p636 = pneg %p371
        $region66: #{tpu_custom_call.1} parent=15 // pred_check_branch
          %638 = sbr.rel (%p636) target = $region68
        $region67: #{tpu_custom_call.1} parent=15 // pred_region
          %p639 = scmp.lt.s32.totalorder %s35, 1
          %s640 = scalar_select %p639, %s35, 1
          %s641 = smul.addr %s640, 4
          %s642 = smul.addr %s641, 4
          %s643 = scalar_lea.vmem %s12, %s642
        $region68: #{tpu_custom_call.1} parent=15 // pred_fallthru
          _
        // Predicated region
        $region69: #{tpu_custom_call.1} parent=15 // pred_check
          %p644 = pneg %p397
        $region70: #{tpu_custom_call.1} parent=15 // pred_check_branch
          %646 = sbr.rel (%p644) target = $region72
        $region71: #{tpu_custom_call.1} parent=15 // pred_region
          %p647 = scmp.lt.s32.totalorder %s35, 1
          %s648 = scalar_select %p647, %s35, 1
          %s649 = scalar_lea.vmem %s13, %s648
        $region72: #{tpu_custom_call.1} parent=15 // pred_fallthru
          _
        // Predicated region
        $region73: #{tpu_custom_call.1} parent=15 // pred_check
          %p650 = pneg %p423
        $region74: #{tpu_custom_call.1} parent=15 // pred_check_branch
          %652 = sbr.rel (%p650) target = $region76
        $region75: #{tpu_custom_call.1} parent=15 // pred_region
          %p653 = scmp.lt.s32.totalorder %s35, 1
          %s654 = scalar_select %p653, %s35, 1
          %s655 = smul.addr %s654, 16
          %s656 = smul.addr %s655, 4
          %s657 = scalar_lea.vmem %s14, %s656
        $region76: #{tpu_custom_call.1} parent=15 // pred_fallthru
          _
        // Predicated region
        $region77: #{tpu_custom_call.1} parent=15 // pred_check
          %p658 = pneg %p449
        $region78: #{tpu_custom_call.1} parent=15 // pred_check_branch
          %660 = sbr.rel (%p658) target = $region80
        $region79: #{tpu_custom_call.1} parent=15 // pred_region
          %p661 = scmp.lt.s32.totalorder %s35, 1
          %s662 = scalar_select %p661, %s35, 1
          %s663 = scalar_lea.vmem %s15, %s662
        $region80: #{tpu_custom_call.1} parent=15 // pred_fallthru
          _
        // Predicated region
        $region81: #{tpu_custom_call.1} parent=15 // pred_check
          %p664 = pneg %p475
        $region82: #{tpu_custom_call.1} parent=15 // pred_check_branch
          %666 = sbr.rel (%p664) target = $region84
        $region83: #{tpu_custom_call.1} parent=15 // pred_region
          %p667 = scmp.lt.s32.totalorder %s35, 1
          %s668 = scalar_select %p667, %s35, 1
          %s669 = scalar_lea.vmem %s16, %s668
        $region84: #{tpu_custom_call.1} parent=15 // pred_fallthru
          _
        // Predicated region
        $region85: #{tpu_custom_call.1} parent=15 // pred_check
          %p670 = pneg %p501
        $region86: #{tpu_custom_call.1} parent=15 // pred_check_branch
          %672 = sbr.rel (%p670) target = $region88
        $region87: #{tpu_custom_call.1} parent=15 // pred_region
          %p673 = scmp.lt.s32.totalorder %s35, 1
          %s674 = scalar_select %p673, %s35, 1
          %s675 = scalar_lea.vmem %s17, %s674
        $region88: #{tpu_custom_call.1} parent=15 // pred_fallthru
          _
      $region16: #{tpu_custom_call.1} parent=5 // pred_fallthru
        _
      %p676 = scmp.le.s32.totalorder 1, %s27
      %p677 = scmp.lt.s32.totalorder %s27, 5
      %p678 = pnand %p676, %p677
      %p679 = pneg %p678
      // Predicated region
      $region89: #{tpu_custom_call.1} parent=5 // pred_check
        _
      $region90: #{tpu_custom_call.1} parent=5 // pred_check_branch
        %681 = sbr.rel (%p678) target = $region92
      $region91: #{tpu_custom_call.1} parent=5 // pred_region
        %s682 = ssub.s32 %s27, 1
        %p683 = scmp.lt.s32.totalorder %s36, 1
        %s684 = scalar_select %p683, %s36, 1
        %s685 = smul.addr %s684, 8
        %s686 = scalar_lea.vmem %s0, %s685
        %p687 = pneg %p65
        %p688 = pneg %p62
        %p689 = scmp.lt.s32.totalorder %s36, 1
        %s690 = scalar_select %p689, %s36, 1
        %s691 = scalar_lea.vmem %s1, %s690
        %p692 = pneg %p91
        %p693 = pneg %p88
        %p694 = scmp.lt.s32.totalorder %s37, 1
        %s695 = scalar_select %p694, %s37, 1
        %s696 = smul.addr %s695, 16
        %s697 = smul.addr %s696, 4
        %s698 = scalar_lea.vmem %s2, %s697
        %p699 = pneg %p117
        %p700 = pneg %p114
        %p701 = scmp.lt.s32.totalorder %s37, 1
        %s702 = scalar_select %p701, %s37, 1
        %s703 = smul.addr %s702, 4
        %s704 = scalar_lea.vmem %s3, %s703
        %p705 = pneg %p143
        %p706 = pneg %p140
        %p707 = scmp.lt.s32.totalorder %s37, 1
        %s708 = scalar_select %p707, %s37, 1
        %s709 = smul.addr %s708, 16
        %s710 = smul.addr %s709, 4
        %s711 = scalar_lea.vmem %s4, %s710
        %p712 = pneg %p169
        %p713 = pneg %p166
        %p714 = scmp.lt.s32.totalorder %s37, 1
        %s715 = scalar_select %p714, %s37, 1
        %s716 = smul.addr %s715, 4
        %s717 = scalar_lea.vmem %s5, %s716
        %p718 = pneg %p195
        %p719 = pneg %p192
        %p720 = scmp.lt.s32.totalorder %s37, 1
        %s721 = scalar_select %p720, %s37, 1
        %s722 = smul.addr %s721, 16
        %s723 = smul.addr %s722, 4
        %s724 = scalar_lea.vmem %s6, %s723
        %p725 = pneg %p221
        %p726 = pneg %p218
        %p727 = scmp.lt.s32.totalorder %s37, 1
        %s728 = scalar_select %p727, %s37, 1
        %s729 = smul.addr %s728, 4
        %s730 = scalar_lea.vmem %s7, %s729
        %p731 = pneg %p247
        %p732 = pneg %p244
        %p733 = scmp.lt.s32.totalorder %s37, 1
        %s734 = scalar_select %p733, %s37, 1
        %s735 = smul.addr %s734, 4
        %s736 = smul.addr %s735, 4
        %s737 = scalar_lea.vmem %s8, %s736
        %p738 = pneg %p273
        %p739 = pneg %p270
        %p740 = scmp.lt.s32.totalorder %s37, 1
        %s741 = scalar_select %p740, %s37, 1
        %s742 = scalar_lea.vmem %s9, %s741
        %p743 = pneg %p299
        %p744 = pneg %p296
        %p745 = scmp.lt.s32.totalorder %s37, 1
        %s746 = scalar_select %p745, %s37, 1
        %s747 = scalar_lea.vmem %s10, %s746
        %p748 = pneg %p325
        %p749 = pneg %p322
        %p750 = scmp.lt.s32.totalorder %s37, 1
        %s751 = scalar_select %p750, %s37, 1
        %s752 = scalar_lea.vmem %s11, %s751
        %p753 = pneg %p351
        %p754 = pneg %p348
        %p755 = scmp.lt.s32.totalorder %s37, 1
        %s756 = scalar_select %p755, %s37, 1
        %s757 = smul.addr %s756, 4
        %s758 = smul.addr %s757, 4
        %s759 = scalar_lea.vmem %s12, %s758
        %p760 = pneg %p377
        %p761 = pneg %p374
        %p762 = scmp.lt.s32.totalorder %s37, 1
        %s763 = scalar_select %p762, %s37, 1
        %s764 = scalar_lea.vmem %s13, %s763
        %p765 = pneg %p403
        %p766 = pneg %p400
        %p767 = scmp.lt.s32.totalorder %s37, 1
        %s768 = scalar_select %p767, %s37, 1
        %s769 = smul.addr %s768, 16
        %s770 = smul.addr %s769, 4
        %s771 = scalar_lea.vmem %s14, %s770
        %p772 = pneg %p429
        %p773 = pneg %p426
        %p774 = scmp.lt.s32.totalorder %s37, 1
        %s775 = scalar_select %p774, %s37, 1
        %s776 = scalar_lea.vmem %s15, %s775
        %p777 = pneg %p455
        %p778 = pneg %p452
        %p779 = scmp.lt.s32.totalorder %s37, 1
        %s780 = scalar_select %p779, %s37, 1
        %s781 = scalar_lea.vmem %s16, %s780
        %p782 = pneg %p481
        %p783 = pneg %p478
        %p784 = scmp.lt.s32.totalorder %s37, 1
        %s785 = scalar_select %p784, %s37, 1
        %s786 = scalar_lea.vmem %s17, %s785
        %p787 = pneg %p507
        %p788 = pneg %p504
        %p789 = pneg %p533
        %p790 = pneg %p530
        %s791 = sand.u32 %s520, 1
        %s792 = scalar_lea.sflag [#allocation4], %s791
        %s793 = sand.u32 %s520, 1
        %s794 = smul.addr %s793, 8
        %s795 = scalar_lea.vmem [#allocation3], %s794
        %p796 = scmp.lt.s32.totalorder %s36, 1
        %s797 = scalar_select %p796, %s36, 1
        %s798 = smul.addr %s797, 8
        %s799 = scalar_lea.vmem %s0, %s798
        %p800 = scmp.lt.s32.totalorder %s36, 1
        %s801 = scalar_select %p800, %s36, 1
        %s802 = scalar_lea.vmem %s1, %s801
        %p803 = scmp.lt.s32.totalorder %s37, 1
        %s804 = scalar_select %p803, %s37, 1
        %s805 = smul.addr %s804, 16
        %s806 = smul.addr %s805, 4
        %s807 = scalar_lea.vmem %s2, %s806
        %p808 = scmp.lt.s32.totalorder %s37, 1
        %s809 = scalar_select %p808, %s37, 1
        %s810 = smul.addr %s809, 4
        %s811 = scalar_lea.vmem %s3, %s810
        %p812 = scmp.lt.s32.totalorder %s37, 1
        %s813 = scalar_select %p812, %s37, 1
        %s814 = smul.addr %s813, 16
        %s815 = smul.addr %s814, 4
        %s816 = scalar_lea.vmem %s4, %s815
        %p817 = scmp.lt.s32.totalorder %s37, 1
        %s818 = scalar_select %p817, %s37, 1
        %s819 = smul.addr %s818, 4
        %s820 = scalar_lea.vmem %s5, %s819
        %p821 = scmp.lt.s32.totalorder %s37, 1
        %s822 = scalar_select %p821, %s37, 1
        %s823 = smul.addr %s822, 16
        %s824 = smul.addr %s823, 4
        %s825 = scalar_lea.vmem %s6, %s824
        %p826 = scmp.lt.s32.totalorder %s37, 1
        %s827 = scalar_select %p826, %s37, 1
        %s828 = smul.addr %s827, 4
        %s829 = scalar_lea.vmem %s7, %s828
        %p830 = scmp.lt.s32.totalorder %s37, 1
        %s831 = scalar_select %p830, %s37, 1
        %s832 = smul.addr %s831, 4
        %s833 = smul.addr %s832, 4
        %s834 = scalar_lea.vmem %s8, %s833
        %p835 = scmp.lt.s32.totalorder %s37, 1
        %s836 = scalar_select %p835, %s37, 1
        %s837 = scalar_lea.vmem %s9, %s836
        %p838 = scmp.lt.s32.totalorder %s37, 1
        %s839 = scalar_select %p838, %s37, 1
        %s840 = scalar_lea.vmem %s10, %s839
        %p841 = scmp.lt.s32.totalorder %s37, 1
        %s842 = scalar_select %p841, %s37, 1
        %s843 = scalar_lea.vmem %s11, %s842
        %p844 = scmp.lt.s32.totalorder %s37, 1
        %s845 = scalar_select %p844, %s37, 1
        %s846 = smul.addr %s845, 4
        %s847 = smul.addr %s846, 4
        %s848 = scalar_lea.vmem %s12, %s847
        %p849 = scmp.lt.s32.totalorder %s37, 1
        %s850 = scalar_select %p849, %s37, 1
        %s851 = scalar_lea.vmem %s13, %s850
        %p852 = scmp.lt.s32.totalorder %s37, 1
        %s853 = scalar_select %p852, %s37, 1
        %s854 = smul.addr %s853, 16
        %s855 = smul.addr %s854, 4
        %s856 = scalar_lea.vmem %s14, %s855
        %p857 = scmp.lt.s32.totalorder %s37, 1
        %s858 = scalar_select %p857, %s37, 1
        %s859 = scalar_lea.vmem %s15, %s858
        %p860 = scmp.lt.s32.totalorder %s37, 1
        %s861 = scalar_select %p860, %s37, 1
        %s862 = scalar_lea.vmem %s16, %s861
        %p863 = scmp.lt.s32.totalorder %s37, 1
        %s864 = scalar_select %p863, %s37, 1
        %s865 = scalar_lea.vmem %s17, %s864
        %p867 = scmp.eq.s32.totalorder %s37, 0
        // Predicated region
        $region93: #{tpu_custom_call.1} parent=91 // pred_check
          %p868 = pneg %p867
        $region94: #{tpu_custom_call.1} parent=91 // pred_check_branch
          %870 = sbr.rel (%p868) target = $region96
        $region95: #{tpu_custom_call.1} parent=91 // pred_region
          %v871 = vld [vmem:[%s799] sm:$0xff]
          %vm872 = vcmask 261120
          %873 = vst.msk [vmem:[#allocation2] sm:$0xff] %vm872, %v871
        $region96: #{tpu_custom_call.1} parent=91 // pred_fallthru
          _
        %v874 = vld [vmem:[#allocation2] sm:$0xff]
        %v875 = vpack.c.bf16 %v874, %v874
        %v876 = vld [vmem:[%s802] sm:$0x1]
        %v877 = vld [vmem:[%s807] sm:$0xf]
        %v878 = vld [vmem:[%s807 + $0x4] sm:$0xf]
        %v879 = vld [vmem:[%s807 + $0x8] sm:$0xf]
        %v880 = vld [vmem:[%s807 + $0xc] sm:$0xf]
        %v881 = vld [vmem:[%s811] sm:$0x1]
        %v883 = vlaneseq
        %v884 = vshrl.u32 %v883, 7
        %v885 = vsub.s32 0, %v884
        %v886 = vrot.slane %v881, %v885
        %v892 = vunpack.c.l.b16 %v877
        %v893 = vunpack.c.l.b16 %v878
        %v894 = vunpack.c.l.b16 %v879
        %v895 = vunpack.c.l.b16 %v880
        %v896 = vpack.c.b16 %v893, %v892
        %v897 = vpack.c.b16 %v895, %v894
        %vm900 = vcmask 261120
        %v902 = vsel %vm900, %v875, 0
        %904 = vmatprep.subr.bf16.mxu0 0
        %905 = vmatpush1.bf16.msra.mxu0 %v896
        %906 = vmatprep.subr.bf16.mxu0 0
        %907 = vmatpush1.bf16.msra.mxu0 %v897
        %908 = vmatprep.subr.bf16.mxu0 0
        %909 = vmatpush1.bf16.msra.mxu0 0
        %910 = vmatprep.subr.bf16.mxu0 0
        %911 = vmatpush1.bf16.msra.mxu0 0
        %912 = vmatprep.subr.bf16.mxu0 0
        %913 = vmatpush1.bf16.msra.mxu0 0
        %914 = vmatprep.subr.bf16.mxu0 0
        %915 = vmatpush1.bf16.msra.mxu0 0
        %916 = vmatprep.subr.bf16.mxu0 0
        %917 = vmatpush1.bf16.msra.mxu0 0
        %918 = vmatprep.subr.bf16.mxu0 0
        %919 = vmatpush1.bf16.msra.mxu0 0
        %920 = vmatprep.subr.bf16.mxu0 0
        %921 = vmatpush1.bf16.msra.mxu0 0
        %922 = vmatprep.subr.bf16.mxu0 0
        %923 = vmatpush1.bf16.msra.mxu0 0
        %924 = vmatprep.subr.bf16.mxu0 0
        %925 = vmatpush1.bf16.msra.mxu0 0
        %926 = vmatprep.subr.bf16.mxu0 0
        %927 = vmatpush1.bf16.msra.mxu0 0
        %928 = vmatprep.subr.bf16.mxu0 0
        %929 = vmatpush1.bf16.msra.mxu0 0
        %930 = vmatprep.subr.bf16.mxu0 0
        %931 = vmatpush1.bf16.msra.mxu0 0
        %932 = vmatprep.subr.bf16.mxu0 0
        %933 = vmatpush1.bf16.msra.mxu0 0
        %934 = vmatprep.subr.bf16.mxu0 0
        %935 = vmatpush1.bf16.msra.mxu0 0
        %936 = vmatprep.mubr.bf16.mxu0 0
        %937 = vmatmul.mubr.bf16.gmra.mrb[0].mxu0 %v902
        %v938 = vpop.f32.mrb[0].mxu0
        %v939 = vadd.f32 %v886, %v938
        %v940 = vpop.f32.mrb[0].mxu0
        %v941 = vpop.f32.mrb[0].mxu0
        %v942 = vpop.f32.mrb[0].mxu0
        %943 = vdwg.mxu0
        %v944 = vld [vmem:[%s816] sm:$0xf]
        %v945 = vld [vmem:[%s816 + $0x4] sm:$0xf]
        %v946 = vld [vmem:[%s816 + $0x8] sm:$0xf]
        %v947 = vld [vmem:[%s816 + $0xc] sm:$0xf]
        %v948 = vld [vmem:[%s820] sm:$0x1]
        %v950 = vlaneseq
        %v951 = vshrl.u32 %v950, 7
        %v952 = vsub.s32 0, %v951
        %v953 = vrot.slane %v948, %v952
        %v959 = vunpack.c.l.b16 %v944
        %v960 = vunpack.c.l.b16 %v945
        %v961 = vunpack.c.l.b16 %v946
        %v962 = vunpack.c.l.b16 %v947
        %v963 = vpack.c.b16 %v960, %v959
        %v964 = vpack.c.b16 %v962, %v961
        %967 = vmatprep.subr.bf16.mxu0 0
        %968 = vmatpush1.bf16.msra.mxu0 %v963
        %969 = vmatprep.subr.bf16.mxu0 0
        %970 = vmatpush1.bf16.msra.mxu0 %v964
        %971 = vmatprep.subr.bf16.mxu0 0
        %972 = vmatpush1.bf16.msra.mxu0 0
        %973 = vmatprep.subr.bf16.mxu0 0
        %974 = vmatpush1.bf16.msra.mxu0 0
        %975 = vmatprep.subr.bf16.mxu0 0
        %976 = vmatpush1.bf16.msra.mxu0 0
        %977 = vmatprep.subr.bf16.mxu0 0
        %978 = vmatpush1.bf16.msra.mxu0 0
        %979 = vmatprep.subr.bf16.mxu0 0
        %980 = vmatpush1.bf16.msra.mxu0 0
        %981 = vmatprep.subr.bf16.mxu0 0
        %982 = vmatpush1.bf16.msra.mxu0 0
        %983 = vmatprep.subr.bf16.mxu0 0
        %984 = vmatpush1.bf16.msra.mxu0 0
        %985 = vmatprep.subr.bf16.mxu0 0
        %986 = vmatpush1.bf16.msra.mxu0 0
        %987 = vmatprep.subr.bf16.mxu0 0
        %988 = vmatpush1.bf16.msra.mxu0 0
        %989 = vmatprep.subr.bf16.mxu0 0
        %990 = vmatpush1.bf16.msra.mxu0 0
        %991 = vmatprep.subr.bf16.mxu0 0
        %992 = vmatpush1.bf16.msra.mxu0 0
        %993 = vmatprep.subr.bf16.mxu0 0
        %994 = vmatpush1.bf16.msra.mxu0 0
        %995 = vmatprep.subr.bf16.mxu0 0
        %996 = vmatpush1.bf16.msra.mxu0 0
        %997 = vmatprep.subr.bf16.mxu0 0
        %998 = vmatpush1.bf16.msra.mxu0 0
        %999 = vmatprep.mubr.bf16.mxu0 0
        %1000 = vmatmul.mubr.bf16.gmra.mrb[0].mxu0 %v902
        %v1001 = vpop.f32.mrb[0].mxu0
        %v1002 = vadd.f32 %v953, %v1001
        %v1003 = vpop.f32.mrb[0].mxu0
        %v1004 = vpop.f32.mrb[0].mxu0
        %v1005 = vpop.f32.mrb[0].mxu0
        %1006 = vdwg.mxu0
        %v1007 = vld [vmem:[%s825] sm:$0xf]
        %v1008 = vld [vmem:[%s825 + $0x4] sm:$0xf]
        %v1009 = vld [vmem:[%s825 + $0x8] sm:$0xf]
        %v1010 = vld [vmem:[%s825 + $0xc] sm:$0xf]
        %v1011 = vld [vmem:[%s829] sm:$0x1]
        %v1013 = vlaneseq
        %v1014 = vshrl.u32 %v1013, 7
        %v1015 = vsub.s32 0, %v1014
        %v1016 = vrot.slane %v1011, %v1015
        %v1022 = vunpack.c.l.b16 %v1007
        %v1023 = vunpack.c.l.b16 %v1008
        %v1024 = vunpack.c.l.b16 %v1009
        %v1025 = vunpack.c.l.b16 %v1010
        %v1026 = vpack.c.b16 %v1023, %v1022
        %v1027 = vpack.c.b16 %v1025, %v1024
        %1030 = vmatprep.subr.bf16.mxu0 0
        %1031 = vmatpush1.bf16.msra.mxu0 %v1026
        %1032 = vmatprep.subr.bf16.mxu0 0
        %1033 = vmatpush1.bf16.msra.mxu0 %v1027
        %1034 = vmatprep.subr.bf16.mxu0 0
        %1035 = vmatpush1.bf16.msra.mxu0 0
        %1036 = vmatprep.subr.bf16.mxu0 0
        %1037 = vmatpush1.bf16.msra.mxu0 0
        %1038 = vmatprep.subr.bf16.mxu0 0
        %1039 = vmatpush1.bf16.msra.mxu0 0
        %1040 = vmatprep.subr.bf16.mxu0 0
        %1041 = vmatpush1.bf16.msra.mxu0 0
        %1042 = vmatprep.subr.bf16.mxu0 0
        %1043 = vmatpush1.bf16.msra.mxu0 0
        %1044 = vmatprep.subr.bf16.mxu0 0
        %1045 = vmatpush1.bf16.msra.mxu0 0
        %1046 = vmatprep.subr.bf16.mxu0 0
        %1047 = vmatpush1.bf16.msra.mxu0 0
        %1048 = vmatprep.subr.bf16.mxu0 0
        %1049 = vmatpush1.bf16.msra.mxu0 0
        %1050 = vmatprep.subr.bf16.mxu0 0
        %1051 = vmatpush1.bf16.msra.mxu0 0
        %1052 = vmatprep.subr.bf16.mxu0 0
        %1053 = vmatpush1.bf16.msra.mxu0 0
        %1054 = vmatprep.subr.bf16.mxu0 0
        %1055 = vmatpush1.bf16.msra.mxu0 0
        %1056 = vmatprep.subr.bf16.mxu0 0
        %1057 = vmatpush1.bf16.msra.mxu0 0
        %1058 = vmatprep.subr.bf16.mxu0 0
        %1059 = vmatpush1.bf16.msra.mxu0 0
        %1060 = vmatprep.subr.bf16.mxu0 0
        %1061 = vmatpush1.bf16.msra.mxu0 0
        %1062 = vmatprep.mubr.bf16.mxu0 0
        %1063 = vmatmul.mubr.bf16.gmra.mrb[0].mxu0 %v902
        %v1064 = vpop.f32.mrb[0].mxu0
        %v1065 = vadd.f32 %v1016, %v1064
        %v1066 = vpop.f32.mrb[0].mxu0
        %v1067 = vpop.f32.mrb[0].mxu0
        %v1068 = vpop.f32.mrb[0].mxu0
        %1069 = vdwg.mxu0
        %v1070 = vpack.c.bf16 %v939, %v939
        %v1071 = vpack.c.bf16 %v1002, %v1002
        %v1072 = vpack.c.bf16 %v1065, %v1065
        %v1074 = vlaneseq
        %v1075 = vshrl.u32 %v1074, 7
        %v1076 = vsub.s32 0, %v1075
        %v1077 = vrot.slane %v876, %v1076
        %vm1079 = vcmask 64512
        %v1081 = vsel %vm1079, %v1070, 0
        %v1084 = vsel %vm1079, %v1071, 0
        %1086 = vmatprep.subr.bf16.mxu0 0
        %1087 = vmatpush1.bf16.xpose.msra.mxu0 %v1084
        %1088 = vmatprep.subr.bf16.mxu0 0
        %1089 = vmatpush1.bf16.xpose.msra.mxu0 0
        %1090 = vmatprep.subr.bf16.mxu0 0
        %1091 = vmatpush1.bf16.xpose.msra.mxu0 0
        %1092 = vmatprep.subr.bf16.mxu0 0
        %1093 = vmatpush1.bf16.xpose.msra.mxu0 0
        %1094 = vmatprep.subr.bf16.mxu0 0
        %1095 = vmatpush1.bf16.xpose.msra.mxu0 0
        %1096 = vmatprep.subr.bf16.mxu0 0
        %1097 = vmatpush1.bf16.xpose.msra.mxu0 0
        %1098 = vmatprep.subr.bf16.mxu0 0
        %1099 = vmatpush1.bf16.xpose.msra.mxu0 0
        %1100 = vmatprep.subr.bf16.mxu0 0
        %1101 = vmatpush1.bf16.xpose.msra.mxu0 0
        %1102 = vmatprep.subr.bf16.mxu0 0
        %1103 = vmatpush1.bf16.xpose.msra.mxu0 0
        %1104 = vmatprep.subr.bf16.mxu0 0
        %1105 = vmatpush1.bf16.xpose.msra.mxu0 0
        %1106 = vmatprep.subr.bf16.mxu0 0
        %1107 = vmatpush1.bf16.xpose.msra.mxu0 0
        %1108 = vmatprep.subr.bf16.mxu0 0
        %1109 = vmatpush1.bf16.xpose.msra.mxu0 0
        %1110 = vmatprep.subr.bf16.mxu0 0
        %1111 = vmatpush1.bf16.xpose.msra.mxu0 0
        %1112 = vmatprep.subr.bf16.mxu0 0
        %1113 = vmatpush1.bf16.xpose.msra.mxu0 0
        %1114 = vmatprep.subr.bf16.mxu0 0
        %1115 = vmatpush1.bf16.xpose.msra.mxu0 0
        %1116 = vmatprep.subr.bf16.mxu0 0
        %1117 = vmatpush1.bf16.xpose.msra.mxu0 0
        %1118 = vmatprep.mubr.bf16.mxu0 0
        %1119 = vmatmul.mubr.bf16.gmra.mrb[0].mxu0 %v1081
        %v1120 = vpop.f32.mrb[0].mxu0
        %v1121 = vadd.f32 %v1077, %v1120
        %v1122 = vpop.f32.mrb[0].mxu0
        %v1123 = vpop.f32.mrb[0].mxu0
        %v1124 = vpop.f32.mrb[0].mxu0
        %1125 = vdwg.mxu0
        %v1126 = vsel %vm1079, %v1121, -inf
        %1127 = vmax.xlane.f32.xlu0 %v1126
        %v1128 = vpop.xlane.xlu0 %1127
        %v1129 = vsub.f32 %v1121, %v1128
        %v1130 = vmul.f32 %v1129, 1.442695
        %v1131 = vpow.pop %v1130
        %v1132 = vsel %vm1079, %v1131, 0.0
        %1133 = vadd.xlane.f32.xlu0 %v1132
        %v1134 = vpop.xlane.xlu0 %1133
        %v1135 = vrcp.pop %v1134
        %v1136 = vmul.f32 %v1131, %v1135
        %v1137 = vpack.c.bf16 %v1136, %v1136
        %v1139 = vsel %vm1079, %v1137, 0
        %vm1141 = vcmask 1043456
        %v1143 = vsel %vm1141, %v1072, 0
        %1145 = vmatprep.subr.bf16.mxu0 0
        %1146 = vmatpush1.bf16.msra.mxu0 %v1143
        %1147 = vmatprep.subr.bf16.mxu0 0
        %1148 = vmatpush1.bf16.msra.mxu0 0
        %1149 = vmatprep.subr.bf16.mxu0 0
        %1150 = vmatpush1.bf16.msra.mxu0 0
        %1151 = vmatprep.subr.bf16.mxu0 0
        %1152 = vmatpush1.bf16.msra.mxu0 0
        %1153 = vmatprep.subr.bf16.mxu0 0
        %1154 = vmatpush1.bf16.msra.mxu0 0
        %1155 = vmatprep.subr.bf16.mxu0 0
        %1156 = vmatpush1.bf16.msra.mxu0 0
        %1157 = vmatprep.subr.bf16.mxu0 0
        %1158 = vmatpush1.bf16.msra.mxu0 0
        %1159 = vmatprep.subr.bf16.mxu0 0
        %1160 = vmatpush1.bf16.msra.mxu0 0
        %1161 = vmatprep.subr.bf16.mxu0 0
        %1162 = vmatpush1.bf16.msra.mxu0 0
        %1163 = vmatprep.subr.bf16.mxu0 0
        %1164 = vmatpush1.bf16.msra.mxu0 0
        %1165 = vmatprep.subr.bf16.mxu0 0
        %1166 = vmatpush1.bf16.msra.mxu0 0
        %1167 = vmatprep.subr.bf16.mxu0 0
        %1168 = vmatpush1.bf16.msra.mxu0 0
        %1169 = vmatprep.subr.bf16.mxu0 0
        %1170 = vmatpush1.bf16.msra.mxu0 0
        %1171 = vmatprep.subr.bf16.mxu0 0
        %1172 = vmatpush1.bf16.msra.mxu0 0
        %1173 = vmatprep.subr.bf16.mxu0 0
        %1174 = vmatpush1.bf16.msra.mxu0 0
        %1175 = vmatprep.subr.bf16.mxu0 0
        %1176 = vmatpush1.bf16.msra.mxu0 0
        %1177 = vmatprep.mubr.bf16.mxu0 0
        %1178 = vmatmul.mubr.bf16.gmra.mrb[0].mxu0 %v1139
        %v1179 = vpop.f32.mrb[0].mxu0
        %v1180 = vadd.f32 0.0, %v1179
        %v1181 = vpop.f32.mrb[0].mxu0
        %v1182 = vpop.f32.mrb[0].mxu0
        %v1183 = vpop.f32.mrb[0].mxu0
        %1184 = vdwg.mxu0
        %s1185 = scalar_lea.vmem %s807, 16
        %v1186 = vld [vmem:[%s1185] sm:$0xf]
        %v1187 = vld [vmem:[%s1185 + $0x4] sm:$0xf]
        %v1188 = vld [vmem:[%s1185 + $0x8] sm:$0xf]
        %v1189 = vld [vmem:[%s1185 + $0xc] sm:$0xf]
        %s1190 = scalar_lea.vmem %s811, 1
        %v1191 = vld [vmem:[%s1190] sm:$0x1]
        %v1193 = vlaneseq
        %v1194 = vshrl.u32 %v1193, 7
        %v1195 = vsub.s32 0, %v1194
        %v1196 = vrot.slane %v1191, %v1195
        %v1202 = vunpack.c.l.b16 %v1186
        %v1203 = vunpack.c.l.b16 %v1187
        %v1204 = vunpack.c.l.b16 %v1188
        %v1205 = vunpack.c.l.b16 %v1189
        %v1206 = vpack.c.b16 %v1203, %v1202
        %v1207 = vpack.c.b16 %v1205, %v1204
        %1210 = vmatprep.subr.bf16.mxu0 0
        %1211 = vmatpush1.bf16.msra.mxu0 %v1206
        %1212 = vmatprep.subr.bf16.mxu0 0
        %1213 = vmatpush1.bf16.msra.mxu0 %v1207
        %1214 = vmatprep.subr.bf16.mxu0 0
        %1215 = vmatpush1.bf16.msra.mxu0 0
        %1216 = vmatprep.subr.bf16.mxu0 0
        %1217 = vmatpush1.bf16.msra.mxu0 0
        %1218 = vmatprep.subr.bf16.mxu0 0
        %1219 = vmatpush1.bf16.msra.mxu0 0
        %1220 = vmatprep.subr.bf16.mxu0 0
        %1221 = vmatpush1.bf16.msra.mxu0 0
        %1222 = vmatprep.subr.bf16.mxu0 0
        %1223 = vmatpush1.bf16.msra.mxu0 0
        %1224 = vmatprep.subr.bf16.mxu0 0
        %1225 = vmatpush1.bf16.msra.mxu0 0
        %1226 = vmatprep.subr.bf16.mxu0 0
        %1227 = vmatpush1.bf16.msra.mxu0 0
        %1228 = vmatprep.subr.bf16.mxu0 0
        %1229 = vmatpush1.bf16.msra.mxu0 0
        %1230 = vmatprep.subr.bf16.mxu0 0
        %1231 = vmatpush1.bf16.msra.mxu0 0
        %1232 = vmatprep.subr.bf16.mxu0 0
        %1233 = vmatpush1.bf16.msra.mxu0 0
        %1234 = vmatprep.subr.bf16.mxu0 0
        %1235 = vmatpush1.bf16.msra.mxu0 0
        %1236 = vmatprep.subr.bf16.mxu0 0
        %1237 = vmatpush1.bf16.msra.mxu0 0
        %1238 = vmatprep.subr.bf16.mxu0 0
        %1239 = vmatpush1.bf16.msra.mxu0 0
        %1240 = vmatprep.subr.bf16.mxu0 0
        %1241 = vmatpush1.bf16.msra.mxu0 0
        %1242 = vmatprep.mubr.bf16.mxu0 0
        %1243 = vmatmul.mubr.bf16.gmra.mrb[0].mxu0 %v902
        %v1244 = vpop.f32.mrb[0].mxu0
        %v1245 = vadd.f32 %v1196, %v1244
        %v1246 = vpop.f32.mrb[0].mxu0
        %v1247 = vpop.f32.mrb[0].mxu0
        %v1248 = vpop.f32.mrb[0].mxu0
        %1249 = vdwg.mxu0
        %s1250 = scalar_lea.vmem %s816, 16
        %v1251 = vld [vmem:[%s1250] sm:$0xf]
        %v1252 = vld [vmem:[%s1250 + $0x4] sm:$0xf]
        %v1253 = vld [vmem:[%s1250 + $0x8] sm:$0xf]
        %v1254 = vld [vmem:[%s1250 + $0xc] sm:$0xf]
        %s1255 = scalar_lea.vmem %s820, 1
        %v1256 = vld [vmem:[%s1255] sm:$0x1]
        %v1258 = vlaneseq
        %v1259 = vshrl.u32 %v1258, 7
        %v1260 = vsub.s32 0, %v1259
        %v1261 = vrot.slane %v1256, %v1260
        %v1267 = vunpack.c.l.b16 %v1251
        %v1268 = vunpack.c.l.b16 %v1252
        %v1269 = vunpack.c.l.b16 %v1253
        %v1270 = vunpack.c.l.b16 %v1254
        %v1271 = vpack.c.b16 %v1268, %v1267
        %v1272 = vpack.c.b16 %v1270, %v1269
        %1275 = vmatprep.subr.bf16.mxu0 0
        %1276 = vmatpush1.bf16.msra.mxu0 %v1271
        %1277 = vmatprep.subr.bf16.mxu0 0
        %1278 = vmatpush1.bf16.msra.mxu0 %v1272
        %1279 = vmatprep.subr.bf16.mxu0 0
        %1280 = vmatpush1.bf16.msra.mxu0 0
        %1281 = vmatprep.subr.bf16.mxu0 0
        %1282 = vmatpush1.bf16.msra.mxu0 0
        %1283 = vmatprep.subr.bf16.mxu0 0
        %1284 = vmatpush1.bf16.msra.mxu0 0
        %1285 = vmatprep.subr.bf16.mxu0 0
        %1286 = vmatpush1.bf16.msra.mxu0 0
        %1287 = vmatprep.subr.bf16.mxu0 0
        %1288 = vmatpush1.bf16.msra.mxu0 0
        %1289 = vmatprep.subr.bf16.mxu0 0
        %1290 = vmatpush1.bf16.msra.mxu0 0
        %1291 = vmatprep.subr.bf16.mxu0 0
        %1292 = vmatpush1.bf16.msra.mxu0 0
        %1293 = vmatprep.subr.bf16.mxu0 0
        %1294 = vmatpush1.bf16.msra.mxu0 0
        %1295 = vmatprep.subr.bf16.mxu0 0
        %1296 = vmatpush1.bf16.msra.mxu0 0
        %1297 = vmatprep.subr.bf16.mxu0 0
        %1298 = vmatpush1.bf16.msra.mxu0 0
        %1299 = vmatprep.subr.bf16.mxu0 0
        %1300 = vmatpush1.bf16.msra.mxu0 0
        %1301 = vmatprep.subr.bf16.mxu0 0
        %1302 = vmatpush1.bf16.msra.mxu0 0
        %1303 = vmatprep.subr.bf16.mxu0 0
        %1304 = vmatpush1.bf16.msra.mxu0 0
        %1305 = vmatprep.subr.bf16.mxu0 0
        %1306 = vmatpush1.bf16.msra.mxu0 0
        %1307 = vmatprep.mubr.bf16.mxu0 0
        %1308 = vmatmul.mubr.bf16.gmra.mrb[0].mxu0 %v902
        %v1309 = vpop.f32.mrb[0].mxu0
        %v1310 = vadd.f32 %v1261, %v1309
        %v1311 = vpop.f32.mrb[0].mxu0
        %v1312 = vpop.f32.mrb[0].mxu0
        %v1313 = vpop.f32.mrb[0].mxu0
        %1314 = vdwg.mxu0
        %s1315 = scalar_lea.vmem %s825, 16
        %v1316 = vld [vmem:[%s1315] sm:$0xf]
        %v1317 = vld [vmem:[%s1315 + $0x4] sm:$0xf]
        %v1318 = vld [vmem:[%s1315 + $0x8] sm:$0xf]
        %v1319 = vld [vmem:[%s1315 + $0xc] sm:$0xf]
        %s1320 = scalar_lea.vmem %s829, 1
        %v1321 = vld [vmem:[%s1320] sm:$0x1]
        %v1323 = vlaneseq
        %v1324 = vshrl.u32 %v1323, 7
        %v1325 = vsub.s32 0, %v1324
        %v1326 = vrot.slane %v1321, %v1325
        %v1332 = vunpack.c.l.b16 %v1316
        %v1333 = vunpack.c.l.b16 %v1317
        %v1334 = vunpack.c.l.b16 %v1318
        %v1335 = vunpack.c.l.b16 %v1319
        %v1336 = vpack.c.b16 %v1333, %v1332
        %v1337 = vpack.c.b16 %v1335, %v1334
        %1340 = vmatprep.subr.bf16.mxu0 0
        %1341 = vmatpush1.bf16.msra.mxu0 %v1336
        %1342 = vmatprep.subr.bf16.mxu0 0
        %1343 = vmatpush1.bf16.msra.mxu0 %v1337
        %1344 = vmatprep.subr.bf16.mxu0 0
        %1345 = vmatpush1.bf16.msra.mxu0 0
        %1346 = vmatprep.subr.bf16.mxu0 0
        %1347 = vmatpush1.bf16.msra.mxu0 0
        %1348 = vmatprep.subr.bf16.mxu0 0
        %1349 = vmatpush1.bf16.msra.mxu0 0
        %1350 = vmatprep.subr.bf16.mxu0 0
        %1351 = vmatpush1.bf16.msra.mxu0 0
        %1352 = vmatprep.subr.bf16.mxu0 0
        %1353 = vmatpush1.bf16.msra.mxu0 0
        %1354 = vmatprep.subr.bf16.mxu0 0
        %1355 = vmatpush1.bf16.msra.mxu0 0
        %1356 = vmatprep.subr.bf16.mxu0 0
        %1357 = vmatpush1.bf16.msra.mxu0 0
        %1358 = vmatprep.subr.bf16.mxu0 0
        %1359 = vmatpush1.bf16.msra.mxu0 0
        %1360 = vmatprep.subr.bf16.mxu0 0
        %1361 = vmatpush1.bf16.msra.mxu0 0
        %1362 = vmatprep.subr.bf16.mxu0 0
        %1363 = vmatpush1.bf16.msra.mxu0 0
        %1364 = vmatprep.subr.bf16.mxu0 0
        %1365 = vmatpush1.bf16.msra.mxu0 0
        %1366 = vmatprep.subr.bf16.mxu0 0
        %1367 = vmatpush1.bf16.msra.mxu0 0
        %1368 = vmatprep.subr.bf16.mxu0 0
        %1369 = vmatpush1.bf16.msra.mxu0 0
        %1370 = vmatprep.subr.bf16.mxu0 0
        %1371 = vmatpush1.bf16.msra.mxu0 0
        %1372 = vmatprep.mubr.bf16.mxu0 0
        %1373 = vmatmul.mubr.bf16.gmra.mrb[0].mxu0 %v902
        %v1374 = vpop.f32.mrb[0].mxu0
        %v1375 = vadd.f32 %v1326, %v1374
        %v1376 = vpop.f32.mrb[0].mxu0
        %v1377 = vpop.f32.mrb[0].mxu0
        %v1378 = vpop.f32.mrb[0].mxu0
        %1379 = vdwg.mxu0
        %v1380 = vpack.c.bf16 %v1245, %v1245
        %v1381 = vpack.c.bf16 %v1310, %v1310
        %v1382 = vpack.c.bf16 %v1375, %v1375
        %v1384 = vsel %vm1079, %v1380, 0
        %v1387 = vsel %vm1079, %v1381, 0
        %1389 = vmatprep.subr.bf16.mxu0 0
        %1390 = vmatpush1.bf16.xpose.msra.mxu0 %v1387
        %1391 = vmatprep.subr.bf16.mxu0 0
        %1392 = vmatpush1.bf16.xpose.msra.mxu0 0
        %1393 = vmatprep.subr.bf16.mxu0 0
        %1394 = vmatpush1.bf16.xpose.msra.mxu0 0
        %1395 = vmatprep.subr.bf16.mxu0 0
        %1396 = vmatpush1.bf16.xpose.msra.mxu0 0
        %1397 = vmatprep.subr.bf16.mxu0 0
        %1398 = vmatpush1.bf16.xpose.msra.mxu0 0
        %1399 = vmatprep.subr.bf16.mxu0 0
        %1400 = vmatpush1.bf16.xpose.msra.mxu0 0
        %1401 = vmatprep.subr.bf16.mxu0 0
        %1402 = vmatpush1.bf16.xpose.msra.mxu0 0
        %1403 = vmatprep.subr.bf16.mxu0 0
        %1404 = vmatpush1.bf16.xpose.msra.mxu0 0
        %1405 = vmatprep.subr.bf16.mxu0 0
        %1406 = vmatpush1.bf16.xpose.msra.mxu0 0
        %1407 = vmatprep.subr.bf16.mxu0 0
        %1408 = vmatpush1.bf16.xpose.msra.mxu0 0
        %1409 = vmatprep.subr.bf16.mxu0 0
        %1410 = vmatpush1.bf16.xpose.msra.mxu0 0
        %1411 = vmatprep.subr.bf16.mxu0 0
        %1412 = vmatpush1.bf16.xpose.msra.mxu0 0
        %1413 = vmatprep.subr.bf16.mxu0 0
        %1414 = vmatpush1.bf16.xpose.msra.mxu0 0
        %1415 = vmatprep.subr.bf16.mxu0 0
        %1416 = vmatpush1.bf16.xpose.msra.mxu0 0
        %1417 = vmatprep.subr.bf16.mxu0 0
        %1418 = vmatpush1.bf16.xpose.msra.mxu0 0
        %1419 = vmatprep.subr.bf16.mxu0 0
        %1420 = vmatpush1.bf16.xpose.msra.mxu0 0
        %1421 = vmatprep.mubr.bf16.mxu0 0
        %1422 = vmatmul.mubr.bf16.gmra.mrb[0].mxu0 %v1384
        %v1423 = vpop.f32.mrb[0].mxu0
        %v1424 = vadd.f32 %v1077, %v1423
        %v1425 = vpop.f32.mrb[0].mxu0
        %v1426 = vpop.f32.mrb[0].mxu0
        %v1427 = vpop.f32.mrb[0].mxu0
        %1428 = vdwg.mxu0
        %v1429 = vsel %vm1079, %v1424, -inf
        %1430 = vmax.xlane.f32.xlu0 %v1429
        %v1431 = vpop.xlane.xlu0 %1430
        %v1432 = vsub.f32 %v1424, %v1431
        %v1433 = vmul.f32 %v1432, 1.442695
        %v1434 = vpow.pop %v1433
        %v1435 = vsel %vm1079, %v1434, 0.0
        %1436 = vadd.xlane.f32.xlu0 %v1435
        %v1437 = vpop.xlane.xlu0 %1436
        %v1438 = vrcp.pop %v1437
        %v1439 = vmul.f32 %v1434, %v1438
        %v1440 = vpack.c.bf16 %v1439, %v1439
        %v1442 = vsel %vm1079, %v1440, 0
        %v1445 = vsel %vm1141, %v1382, 0
        %1447 = vmatprep.subr.bf16.mxu0 0
        %1448 = vmatpush1.bf16.msra.mxu0 %v1445
        %1449 = vmatprep.subr.bf16.mxu0 0
        %1450 = vmatpush1.bf16.msra.mxu0 0
        %1451 = vmatprep.subr.bf16.mxu0 0
        %1452 = vmatpush1.bf16.msra.mxu0 0
        %1453 = vmatprep.subr.bf16.mxu0 0
        %1454 = vmatpush1.bf16.msra.mxu0 0
        %1455 = vmatprep.subr.bf16.mxu0 0
        %1456 = vmatpush1.bf16.msra.mxu0 0
        %1457 = vmatprep.subr.bf16.mxu0 0
        %1458 = vmatpush1.bf16.msra.mxu0 0
        %1459 = vmatprep.subr.bf16.mxu0 0
        %1460 = vmatpush1.bf16.msra.mxu0 0
        %1461 = vmatprep.subr.bf16.mxu0 0
        %1462 = vmatpush1.bf16.msra.mxu0 0
        %1463 = vmatprep.subr.bf16.mxu0 0
        %1464 = vmatpush1.bf16.msra.mxu0 0
        %1465 = vmatprep.subr.bf16.mxu0 0
        %1466 = vmatpush1.bf16.msra.mxu0 0
        %1467 = vmatprep.subr.bf16.mxu0 0
        %1468 = vmatpush1.bf16.msra.mxu0 0
        %1469 = vmatprep.subr.bf16.mxu0 0
        %1470 = vmatpush1.bf16.msra.mxu0 0
        %1471 = vmatprep.subr.bf16.mxu0 0
        %1472 = vmatpush1.bf16.msra.mxu0 0
        %1473 = vmatprep.subr.bf16.mxu0 0
        %1474 = vmatpush1.bf16.msra.mxu0 0
        %1475 = vmatprep.subr.bf16.mxu0 0
        %1476 = vmatpush1.bf16.msra.mxu0 0
        %1477 = vmatprep.subr.bf16.mxu0 0
        %1478 = vmatpush1.bf16.msra.mxu0 0
        %1479 = vmatprep.mubr.bf16.mxu0 0
        %1480 = vmatmul.mubr.bf16.gmra.mrb[0].mxu0 %v1442
        %v1481 = vpop.f32.mrb[0].mxu0
        %v1482 = vadd.f32 0.0, %v1481
        %v1483 = vpop.f32.mrb[0].mxu0
        %v1484 = vpop.f32.mrb[0].mxu0
        %v1485 = vpop.f32.mrb[0].mxu0
        %1486 = vdwg.mxu0
        %s1487 = scalar_lea.vmem %s807, 32
        %v1488 = vld [vmem:[%s1487] sm:$0xf]
        %v1489 = vld [vmem:[%s1487 + $0x4] sm:$0xf]
        %v1490 = vld [vmem:[%s1487 + $0x8] sm:$0xf]
        %v1491 = vld [vmem:[%s1487 + $0xc] sm:$0xf]
        %s1492 = scalar_lea.vmem %s811, 2
        %v1493 = vld [vmem:[%s1492] sm:$0x1]
        %v1495 = vlaneseq
        %v1496 = vshrl.u32 %v1495, 7
        %v1497 = vsub.s32 0, %v1496
        %v1498 = vrot.slane %v1493, %v1497
        %v1504 = vunpack.c.l.b16 %v1488
        %v1505 = vunpack.c.l.b16 %v1489
        %v1506 = vunpack.c.l.b16 %v1490
        %v1507 = vunpack.c.l.b16 %v1491
        %v1508 = vpack.c.b16 %v1505, %v1504
        %v1509 = vpack.c.b16 %v1507, %v1506
        %1512 = vmatprep.subr.bf16.mxu0 0
        %1513 = vmatpush1.bf16.msra.mxu0 %v1508
        %1514 = vmatprep.subr.bf16.mxu0 0
        %1515 = vmatpush1.bf16.msra.mxu0 %v1509
        %1516 = vmatprep.subr.bf16.mxu0 0
        %1517 = vmatpush1.bf16.msra.mxu0 0
        %1518 = vmatprep.subr.bf16.mxu0 0
        %1519 = vmatpush1.bf16.msra.mxu0 0
        %1520 = vmatprep.subr.bf16.mxu0 0
        %1521 = vmatpush1.bf16.msra.mxu0 0
        %1522 = vmatprep.subr.bf16.mxu0 0
        %1523 = vmatpush1.bf16.msra.mxu0 0
        %1524 = vmatprep.subr.bf16.mxu0 0
        %1525 = vmatpush1.bf16.msra.mxu0 0
        %1526 = vmatprep.subr.bf16.mxu0 0
        %1527 = vmatpush1.bf16.msra.mxu0 0
        %1528 = vmatprep.subr.bf16.mxu0 0
        %1529 = vmatpush1.bf16.msra.mxu0 0
        %1530 = vmatprep.subr.bf16.mxu0 0
        %1531 = vmatpush1.bf16.msra.mxu0 0
        %1532 = vmatprep.subr.bf16.mxu0 0
        %1533 = vmatpush1.bf16.msra.mxu0 0
        %1534 = vmatprep.subr.bf16.mxu0 0
        %1535 = vmatpush1.bf16.msra.mxu0 0
        %1536 = vmatprep.subr.bf16.mxu0 0
        %1537 = vmatpush1.bf16.msra.mxu0 0
        %1538 = vmatprep.subr.bf16.mxu0 0
        %1539 = vmatpush1.bf16.msra.mxu0 0
        %1540 = vmatprep.subr.bf16.mxu0 0
        %1541 = vmatpush1.bf16.msra.mxu0 0
        %1542 = vmatprep.subr.bf16.mxu0 0
        %1543 = vmatpush1.bf16.msra.mxu0 0
        %1544 = vmatprep.mubr.bf16.mxu0 0
        %1545 = vmatmul.mubr.bf16.gmra.mrb[0].mxu0 %v902
        %v1546 = vpop.f32.mrb[0].mxu0
        %v1547 = vadd.f32 %v1498, %v1546
        %v1548 = vpop.f32.mrb[0].mxu0
        %v1549 = vpop.f32.mrb[0].mxu0
        %v1550 = vpop.f32.mrb[0].mxu0
        %1551 = vdwg.mxu0
        %s1552 = scalar_lea.vmem %s816, 32
        %v1553 = vld [vmem:[%s1552] sm:$0xf]
        %v1554 = vld [vmem:[%s1552 + $0x4] sm:$0xf]
        %v1555 = vld [vmem:[%s1552 + $0x8] sm:$0xf]
        %v1556 = vld [vmem:[%s1552 + $0xc] sm:$0xf]
        %s1557 = scalar_lea.vmem %s820, 2
        %v1558 = vld [vmem:[%s1557] sm:$0x1]
        %v1560 = vlaneseq
        %v1561 = vshrl.u32 %v1560, 7
        %v1562 = vsub.s32 0, %v1561
        %v1563 = vrot.slane %v1558, %v1562
        %v1569 = vunpack.c.l.b16 %v1553
        %v1570 = vunpack.c.l.b16 %v1554
        %v1571 = vunpack.c.l.b16 %v1555
        %v1572 = vunpack.c.l.b16 %v1556
        %v1573 = vpack.c.b16 %v1570, %v1569
        %v1574 = vpack.c.b16 %v1572, %v1571
        %1577 = vmatprep.subr.bf16.mxu0 0
        %1578 = vmatpush1.bf16.msra.mxu0 %v1573
        %1579 = vmatprep.subr.bf16.mxu0 0
        %1580 = vmatpush1.bf16.msra.mxu0 %v1574
        %1581 = vmatprep.subr.bf16.mxu0 0
        %1582 = vmatpush1.bf16.msra.mxu0 0
        %1583 = vmatprep.subr.bf16.mxu0 0
        %1584 = vmatpush1.bf16.msra.mxu0 0
        %1585 = vmatprep.subr.bf16.mxu0 0
        %1586 = vmatpush1.bf16.msra.mxu0 0
        %1587 = vmatprep.subr.bf16.mxu0 0
        %1588 = vmatpush1.bf16.msra.mxu0 0
        %1589 = vmatprep.subr.bf16.mxu0 0
        %1590 = vmatpush1.bf16.msra.mxu0 0
        %1591 = vmatprep.subr.bf16.mxu0 0
        %1592 = vmatpush1.bf16.msra.mxu0 0
        %1593 = vmatprep.subr.bf16.mxu0 0
        %1594 = vmatpush1.bf16.msra.mxu0 0
        %1595 = vmatprep.subr.bf16.mxu0 0
        %1596 = vmatpush1.bf16.msra.mxu0 0
        %1597 = vmatprep.subr.bf16.mxu0 0
        %1598 = vmatpush1.bf16.msra.mxu0 0
        %1599 = vmatprep.subr.bf16.mxu0 0
        %1600 = vmatpush1.bf16.msra.mxu0 0
        %1601 = vmatprep.subr.bf16.mxu0 0
        %1602 = vmatpush1.bf16.msra.mxu0 0
        %1603 = vmatprep.subr.bf16.mxu0 0
        %1604 = vmatpush1.bf16.msra.mxu0 0
        %1605 = vmatprep.subr.bf16.mxu0 0
        %1606 = vmatpush1.bf16.msra.mxu0 0
        %1607 = vmatprep.subr.bf16.mxu0 0
        %1608 = vmatpush1.bf16.msra.mxu0 0
        %1609 = vmatprep.mubr.bf16.mxu0 0
        %1610 = vmatmul.mubr.bf16.gmra.mrb[0].mxu0 %v902
        %v1611 = vpop.f32.mrb[0].mxu0
        %v1612 = vadd.f32 %v1563, %v1611
        %v1613 = vpop.f32.mrb[0].mxu0
        %v1614 = vpop.f32.mrb[0].mxu0
        %v1615 = vpop.f32.mrb[0].mxu0
        %1616 = vdwg.mxu0
        %s1617 = scalar_lea.vmem %s825, 32
        %v1618 = vld [vmem:[%s1617] sm:$0xf]
        %v1619 = vld [vmem:[%s1617 + $0x4] sm:$0xf]
        %v1620 = vld [vmem:[%s1617 + $0x8] sm:$0xf]
        %v1621 = vld [vmem:[%s1617 + $0xc] sm:$0xf]
        %s1622 = scalar_lea.vmem %s829, 2
        %v1623 = vld [vmem:[%s1622] sm:$0x1]
        %v1625 = vlaneseq
        %v1626 = vshrl.u32 %v1625, 7
        %v1627 = vsub.s32 0, %v1626
        %v1628 = vrot.slane %v1623, %v1627
        %v1634 = vunpack.c.l.b16 %v1618
        %v1635 = vunpack.c.l.b16 %v1619
        %v1636 = vunpack.c.l.b16 %v1620
        %v1637 = vunpack.c.l.b16 %v1621
        %v1638 = vpack.c.b16 %v1635, %v1634
        %v1639 = vpack.c.b16 %v1637, %v1636
        %1642 = vmatprep.subr.bf16.mxu0 0
        %1643 = vmatpush1.bf16.msra.mxu0 %v1638
        %1644 = vmatprep.subr.bf16.mxu0 0
        %1645 = vmatpush1.bf16.msra.mxu0 %v1639
        %1646 = vmatprep.subr.bf16.mxu0 0
        %1647 = vmatpush1.bf16.msra.mxu0 0
        %1648 = vmatprep.subr.bf16.mxu0 0
        %1649 = vmatpush1.bf16.msra.mxu0 0
        %1650 = vmatprep.subr.bf16.mxu0 0
        %1651 = vmatpush1.bf16.msra.mxu0 0
        %1652 = vmatprep.subr.bf16.mxu0 0
        %1653 = vmatpush1.bf16.msra.mxu0 0
        %1654 = vmatprep.subr.bf16.mxu0 0
        %1655 = vmatpush1.bf16.msra.mxu0 0
        %1656 = vmatprep.subr.bf16.mxu0 0
        %1657 = vmatpush1.bf16.msra.mxu0 0
        %1658 = vmatprep.subr.bf16.mxu0 0
        %1659 = vmatpush1.bf16.msra.mxu0 0
        %1660 = vmatprep.subr.bf16.mxu0 0
        %1661 = vmatpush1.bf16.msra.mxu0 0
        %1662 = vmatprep.subr.bf16.mxu0 0
        %1663 = vmatpush1.bf16.msra.mxu0 0
        %1664 = vmatprep.subr.bf16.mxu0 0
        %1665 = vmatpush1.bf16.msra.mxu0 0
        %1666 = vmatprep.subr.bf16.mxu0 0
        %1667 = vmatpush1.bf16.msra.mxu0 0
        %1668 = vmatprep.subr.bf16.mxu0 0
        %1669 = vmatpush1.bf16.msra.mxu0 0
        %1670 = vmatprep.subr.bf16.mxu0 0
        %1671 = vmatpush1.bf16.msra.mxu0 0
        %1672 = vmatprep.subr.bf16.mxu0 0
        %1673 = vmatpush1.bf16.msra.mxu0 0
        %1674 = vmatprep.mubr.bf16.mxu0 0
        %1675 = vmatmul.mubr.bf16.gmra.mrb[0].mxu0 %v902
        %v1676 = vpop.f32.mrb[0].mxu0
        %v1677 = vadd.f32 %v1628, %v1676
        %v1678 = vpop.f32.mrb[0].mxu0
        %v1679 = vpop.f32.mrb[0].mxu0
        %v1680 = vpop.f32.mrb[0].mxu0
        %1681 = vdwg.mxu0
        %v1682 = vpack.c.bf16 %v1547, %v1547
        %v1683 = vpack.c.bf16 %v1612, %v1612
        %v1684 = vpack.c.bf16 %v1677, %v1677
        %v1686 = vsel %vm1079, %v1682, 0
        %v1689 = vsel %vm1079, %v1683, 0
        %1691 = vmatprep.subr.bf16.mxu0 0
        %1692 = vmatpush1.bf16.xpose.msra.mxu0 %v1689
        %1693 = vmatprep.subr.bf16.mxu0 0
        %1694 = vmatpush1.bf16.xpose.msra.mxu0 0
        %1695 = vmatprep.subr.bf16.mxu0 0
        %1696 = vmatpush1.bf16.xpose.msra.mxu0 0
        %1697 = vmatprep.subr.bf16.mxu0 0
        %1698 = vmatpush1.bf16.xpose.msra.mxu0 0
        %1699 = vmatprep.subr.bf16.mxu0 0
        %1700 = vmatpush1.bf16.xpose.msra.mxu0 0
        %1701 = vmatprep.subr.bf16.mxu0 0
        %1702 = vmatpush1.bf16.xpose.msra.mxu0 0
        %1703 = vmatprep.subr.bf16.mxu0 0
        %1704 = vmatpush1.bf16.xpose.msra.mxu0 0
        %1705 = vmatprep.subr.bf16.mxu0 0
        %1706 = vmatpush1.bf16.xpose.msra.mxu0 0
        %1707 = vmatprep.subr.bf16.mxu0 0
        %1708 = vmatpush1.bf16.xpose.msra.mxu0 0
        %1709 = vmatprep.subr.bf16.mxu0 0
        %1710 = vmatpush1.bf16.xpose.msra.mxu0 0
        %1711 = vmatprep.subr.bf16.mxu0 0
        %1712 = vmatpush1.bf16.xpose.msra.mxu0 0
        %1713 = vmatprep.subr.bf16.mxu0 0
        %1714 = vmatpush1.bf16.xpose.msra.mxu0 0
        %1715 = vmatprep.subr.bf16.mxu0 0
        %1716 = vmatpush1.bf16.xpose.msra.mxu0 0
        %1717 = vmatprep.subr.bf16.mxu0 0
        %1718 = vmatpush1.bf16.xpose.msra.mxu0 0
        %1719 = vmatprep.subr.bf16.mxu0 0
        %1720 = vmatpush1.bf16.xpose.msra.mxu0 0
        %1721 = vmatprep.subr.bf16.mxu0 0
        %1722 = vmatpush1.bf16.xpose.msra.mxu0 0
        %1723 = vmatprep.mubr.bf16.mxu0 0
        %1724 = vmatmul.mubr.bf16.gmra.mrb[0].mxu0 %v1686
        %v1725 = vpop.f32.mrb[0].mxu0
        %v1726 = vadd.f32 %v1077, %v1725
        %v1727 = vpop.f32.mrb[0].mxu0
        %v1728 = vpop.f32.mrb[0].mxu0
        %v1729 = vpop.f32.mrb[0].mxu0
        %1730 = vdwg.mxu0
        %v1731 = vsel %vm1079, %v1726, -inf
        %1732 = vmax.xlane.f32.xlu0 %v1731
        %v1733 = vpop.xlane.xlu0 %1732
        %v1734 = vsub.f32 %v1726, %v1733
        %v1735 = vmul.f32 %v1734, 1.442695
        %v1736 = vpow.pop %v1735
        %v1737 = vsel %vm1079, %v1736, 0.0
        %1738 = vadd.xlane.f32.xlu0 %v1737
        %v1739 = vpop.xlane.xlu0 %1738
        %v1740 = vrcp.pop %v1739
        %v1741 = vmul.f32 %v1736, %v1740
        %v1742 = vpack.c.bf16 %v1741, %v1741
        %v1744 = vsel %vm1079, %v1742, 0
        %v1747 = vsel %vm1141, %v1684, 0
        %1749 = vmatprep.subr.bf16.mxu0 0
        %1750 = vmatpush1.bf16.msra.mxu0 %v1747
        %1751 = vmatprep.subr.bf16.mxu0 0
        %1752 = vmatpush1.bf16.msra.mxu0 0
        %1753 = vmatprep.subr.bf16.mxu0 0
        %1754 = vmatpush1.bf16.msra.mxu0 0
        %1755 = vmatprep.subr.bf16.mxu0 0
        %1756 = vmatpush1.bf16.msra.mxu0 0
        %1757 = vmatprep.subr.bf16.mxu0 0
        %1758 = vmatpush1.bf16.msra.mxu0 0
        %1759 = vmatprep.subr.bf16.mxu0 0
        %1760 = vmatpush1.bf16.msra.mxu0 0
        %1761 = vmatprep.subr.bf16.mxu0 0
        %1762 = vmatpush1.bf16.msra.mxu0 0
        %1763 = vmatprep.subr.bf16.mxu0 0
        %1764 = vmatpush1.bf16.msra.mxu0 0
        %1765 = vmatprep.subr.bf16.mxu0 0
        %1766 = vmatpush1.bf16.msra.mxu0 0
        %1767 = vmatprep.subr.bf16.mxu0 0
        %1768 = vmatpush1.bf16.msra.mxu0 0
        %1769 = vmatprep.subr.bf16.mxu0 0
        %1770 = vmatpush1.bf16.msra.mxu0 0
        %1771 = vmatprep.subr.bf16.mxu0 0
        %1772 = vmatpush1.bf16.msra.mxu0 0
        %1773 = vmatprep.subr.bf16.mxu0 0
        %1774 = vmatpush1.bf16.msra.mxu0 0
        %1775 = vmatprep.subr.bf16.mxu0 0
        %1776 = vmatpush1.bf16.msra.mxu0 0
        %1777 = vmatprep.subr.bf16.mxu0 0
        %1778 = vmatpush1.bf16.msra.mxu0 0
        %1779 = vmatprep.subr.bf16.mxu0 0
        %1780 = vmatpush1.bf16.msra.mxu0 0
        %1781 = vmatprep.mubr.bf16.mxu0 0
        %1782 = vmatmul.mubr.bf16.gmra.mrb[0].mxu0 %v1744
        %v1783 = vpop.f32.mrb[0].mxu0
        %v1784 = vadd.f32 0.0, %v1783
        %v1785 = vpop.f32.mrb[0].mxu0
        %v1786 = vpop.f32.mrb[0].mxu0
        %v1787 = vpop.f32.mrb[0].mxu0
        %1788 = vdwg.mxu0
        %s1789 = scalar_lea.vmem %s807, 48
        %v1790 = vld [vmem:[%s1789] sm:$0xf]
        %v1791 = vld [vmem:[%s1789 + $0x4] sm:$0xf]
        %v1792 = vld [vmem:[%s1789 + $0x8] sm:$0xf]
        %v1793 = vld [vmem:[%s1789 + $0xc] sm:$0xf]
        %s1794 = scalar_lea.vmem %s811, 3
        %v1795 = vld [vmem:[%s1794] sm:$0x1]
        %v1797 = vlaneseq
        %v1798 = vshrl.u32 %v1797, 7
        %v1799 = vsub.s32 0, %v1798
        %v1800 = vrot.slane %v1795, %v1799
        %v1806 = vunpack.c.l.b16 %v1790
        %v1807 = vunpack.c.l.b16 %v1791
        %v1808 = vunpack.c.l.b16 %v1792
        %v1809 = vunpack.c.l.b16 %v1793
        %v1810 = vpack.c.b16 %v1807, %v1806
        %v1811 = vpack.c.b16 %v1809, %v1808
        %1814 = vmatprep.subr.bf16.mxu0 0
        %1815 = vmatpush1.bf16.msra.mxu0 %v1810
        %1816 = vmatprep.subr.bf16.mxu0 0
        %1817 = vmatpush1.bf16.msra.mxu0 %v1811
        %1818 = vmatprep.subr.bf16.mxu0 0
        %1819 = vmatpush1.bf16.msra.mxu0 0
        %1820 = vmatprep.subr.bf16.mxu0 0
        %1821 = vmatpush1.bf16.msra.mxu0 0
        %1822 = vmatprep.subr.bf16.mxu0 0
        %1823 = vmatpush1.bf16.msra.mxu0 0
        %1824 = vmatprep.subr.bf16.mxu0 0
        %1825 = vmatpush1.bf16.msra.mxu0 0
        %1826 = vmatprep.subr.bf16.mxu0 0
        %1827 = vmatpush1.bf16.msra.mxu0 0
        %1828 = vmatprep.subr.bf16.mxu0 0
        %1829 = vmatpush1.bf16.msra.mxu0 0
        %1830 = vmatprep.subr.bf16.mxu0 0
        %1831 = vmatpush1.bf16.msra.mxu0 0
        %1832 = vmatprep.subr.bf16.mxu0 0
        %1833 = vmatpush1.bf16.msra.mxu0 0
        %1834 = vmatprep.subr.bf16.mxu0 0
        %1835 = vmatpush1.bf16.msra.mxu0 0
        %1836 = vmatprep.subr.bf16.mxu0 0
        %1837 = vmatpush1.bf16.msra.mxu0 0
        %1838 = vmatprep.subr.bf16.mxu0 0
        %1839 = vmatpush1.bf16.msra.mxu0 0
        %1840 = vmatprep.subr.bf16.mxu0 0
        %1841 = vmatpush1.bf16.msra.mxu0 0
        %1842 = vmatprep.subr.bf16.mxu0 0
        %1843 = vmatpush1.bf16.msra.mxu0 0
        %1844 = vmatprep.subr.bf16.mxu0 0
        %1845 = vmatpush1.bf16.msra.mxu0 0
        %1846 = vmatprep.mubr.bf16.mxu0 0
        %1847 = vmatmul.mubr.bf16.gmra.mrb[0].mxu0 %v902
        %v1848 = vpop.f32.mrb[0].mxu0
        %v1849 = vadd.f32 %v1800, %v1848
        %v1850 = vpop.f32.mrb[0].mxu0
        %v1851 = vpop.f32.mrb[0].mxu0
        %v1852 = vpop.f32.mrb[0].mxu0
        %1853 = vdwg.mxu0
        %s1854 = scalar_lea.vmem %s816, 48
        %v1855 = vld [vmem:[%s1854] sm:$0xf]
        %v1856 = vld [vmem:[%s1854 + $0x4] sm:$0xf]
        %v1857 = vld [vmem:[%s1854 + $0x8] sm:$0xf]
        %v1858 = vld [vmem:[%s1854 + $0xc] sm:$0xf]
        %s1859 = scalar_lea.vmem %s820, 3
        %v1860 = vld [vmem:[%s1859] sm:$0x1]
        %v1862 = vlaneseq
        %v1863 = vshrl.u32 %v1862, 7
        %v1864 = vsub.s32 0, %v1863
        %v1865 = vrot.slane %v1860, %v1864
        %v1871 = vunpack.c.l.b16 %v1855
        %v1872 = vunpack.c.l.b16 %v1856
        %v1873 = vunpack.c.l.b16 %v1857
        %v1874 = vunpack.c.l.b16 %v1858
        %v1875 = vpack.c.b16 %v1872, %v1871
        %v1876 = vpack.c.b16 %v1874, %v1873
        %1879 = vmatprep.subr.bf16.mxu0 0
        %1880 = vmatpush1.bf16.msra.mxu0 %v1875
        %1881 = vmatprep.subr.bf16.mxu0 0
        %1882 = vmatpush1.bf16.msra.mxu0 %v1876
        %1883 = vmatprep.subr.bf16.mxu0 0
        %1884 = vmatpush1.bf16.msra.mxu0 0
        %1885 = vmatprep.subr.bf16.mxu0 0
        %1886 = vmatpush1.bf16.msra.mxu0 0
        %1887 = vmatprep.subr.bf16.mxu0 0
        %1888 = vmatpush1.bf16.msra.mxu0 0
        %1889 = vmatprep.subr.bf16.mxu0 0
        %1890 = vmatpush1.bf16.msra.mxu0 0
        %1891 = vmatprep.subr.bf16.mxu0 0
        %1892 = vmatpush1.bf16.msra.mxu0 0
        %1893 = vmatprep.subr.bf16.mxu0 0
        %1894 = vmatpush1.bf16.msra.mxu0 0
        %1895 = vmatprep.subr.bf16.mxu0 0
        %1896 = vmatpush1.bf16.msra.mxu0 0
        %1897 = vmatprep.subr.bf16.mxu0 0
        %1898 = vmatpush1.bf16.msra.mxu0 0
        %1899 = vmatprep.subr.bf16.mxu0 0
        %1900 = vmatpush1.bf16.msra.mxu0 0
        %1901 = vmatprep.subr.bf16.mxu0 0
        %1902 = vmatpush1.bf16.msra.mxu0 0
        %1903 = vmatprep.subr.bf16.mxu0 0
        %1904 = vmatpush1.bf16.msra.mxu0 0
        %1905 = vmatprep.subr.bf16.mxu0 0
        %1906 = vmatpush1.bf16.msra.mxu0 0
        %1907 = vmatprep.subr.bf16.mxu0 0
        %1908 = vmatpush1.bf16.msra.mxu0 0
        %1909 = vmatprep.subr.bf16.mxu0 0
        %1910 = vmatpush1.bf16.msra.mxu0 0
        %1911 = vmatprep.mubr.bf16.mxu0 0
        %1912 = vmatmul.mubr.bf16.gmra.mrb[0].mxu0 %v902
        %v1913 = vpop.f32.mrb[0].mxu0
        %v1914 = vadd.f32 %v1865, %v1913
        %v1915 = vpop.f32.mrb[0].mxu0
        %v1916 = vpop.f32.mrb[0].mxu0
        %v1917 = vpop.f32.mrb[0].mxu0
        %1918 = vdwg.mxu0
        %s1919 = scalar_lea.vmem %s825, 48
        %v1920 = vld [vmem:[%s1919] sm:$0xf]
        %v1921 = vld [vmem:[%s1919 + $0x4] sm:$0xf]
        %v1922 = vld [vmem:[%s1919 + $0x8] sm:$0xf]
        %v1923 = vld [vmem:[%s1919 + $0xc] sm:$0xf]
        %s1924 = scalar_lea.vmem %s829, 3
        %v1925 = vld [vmem:[%s1924] sm:$0x1]
        %v1927 = vlaneseq
        %v1928 = vshrl.u32 %v1927, 7
        %v1929 = vsub.s32 0, %v1928
        %v1930 = vrot.slane %v1925, %v1929
        %v1936 = vunpack.c.l.b16 %v1920
        %v1937 = vunpack.c.l.b16 %v1921
        %v1938 = vunpack.c.l.b16 %v1922
        %v1939 = vunpack.c.l.b16 %v1923
        %v1940 = vpack.c.b16 %v1937, %v1936
        %v1941 = vpack.c.b16 %v1939, %v1938
        %1944 = vmatprep.subr.bf16.mxu0 0
        %1945 = vmatpush1.bf16.msra.mxu0 %v1940
        %1946 = vmatprep.subr.bf16.mxu0 0
        %1947 = vmatpush1.bf16.msra.mxu0 %v1941
        %1948 = vmatprep.subr.bf16.mxu0 0
        %1949 = vmatpush1.bf16.msra.mxu0 0
        %1950 = vmatprep.subr.bf16.mxu0 0
        %1951 = vmatpush1.bf16.msra.mxu0 0
        %1952 = vmatprep.subr.bf16.mxu0 0
        %1953 = vmatpush1.bf16.msra.mxu0 0
        %1954 = vmatprep.subr.bf16.mxu0 0
        %1955 = vmatpush1.bf16.msra.mxu0 0
        %1956 = vmatprep.subr.bf16.mxu0 0
        %1957 = vmatpush1.bf16.msra.mxu0 0
        %1958 = vmatprep.subr.bf16.mxu0 0
        %1959 = vmatpush1.bf16.msra.mxu0 0
        %1960 = vmatprep.subr.bf16.mxu0 0
        %1961 = vmatpush1.bf16.msra.mxu0 0
        %1962 = vmatprep.subr.bf16.mxu0 0
        %1963 = vmatpush1.bf16.msra.mxu0 0
        %1964 = vmatprep.subr.bf16.mxu0 0
        %1965 = vmatpush1.bf16.msra.mxu0 0
        %1966 = vmatprep.subr.bf16.mxu0 0
        %1967 = vmatpush1.bf16.msra.mxu0 0
        %1968 = vmatprep.subr.bf16.mxu0 0
        %1969 = vmatpush1.bf16.msra.mxu0 0
        %1970 = vmatprep.subr.bf16.mxu0 0
        %1971 = vmatpush1.bf16.msra.mxu0 0
        %1972 = vmatprep.subr.bf16.mxu0 0
        %1973 = vmatpush1.bf16.msra.mxu0 0
        %1974 = vmatprep.subr.bf16.mxu0 0
        %1975 = vmatpush1.bf16.msra.mxu0 0
        %1976 = vmatprep.mubr.bf16.mxu0 0
        %1977 = vmatmul.mubr.bf16.gmra.mrb[0].mxu0 %v902
        %v1978 = vpop.f32.mrb[0].mxu0
        %v1979 = vadd.f32 %v1930, %v1978
        %v1980 = vpop.f32.mrb[0].mxu0
        %v1981 = vpop.f32.mrb[0].mxu0
        %v1982 = vpop.f32.mrb[0].mxu0
        %1983 = vdwg.mxu0
        %v1984 = vpack.c.bf16 %v1849, %v1849
        %v1985 = vpack.c.bf16 %v1914, %v1914
        %v1986 = vpack.c.bf16 %v1979, %v1979
        %v1988 = vsel %vm1079, %v1984, 0
        %v1991 = vsel %vm1079, %v1985, 0
        %1993 = vmatprep.subr.bf16.mxu0 0
        %1994 = vmatpush1.bf16.xpose.msra.mxu0 %v1991
        %1995 = vmatprep.subr.bf16.mxu0 0
        %1996 = vmatpush1.bf16.xpose.msra.mxu0 0
        %1997 = vmatprep.subr.bf16.mxu0 0
        %1998 = vmatpush1.bf16.xpose.msra.mxu0 0
        %1999 = vmatprep.subr.bf16.mxu0 0
        %2000 = vmatpush1.bf16.xpose.msra.mxu0 0
        %2001 = vmatprep.subr.bf16.mxu0 0
        %2002 = vmatpush1.bf16.xpose.msra.mxu0 0
        %2003 = vmatprep.subr.bf16.mxu0 0
        %2004 = vmatpush1.bf16.xpose.msra.mxu0 0
        %2005 = vmatprep.subr.bf16.mxu0 0
        %2006 = vmatpush1.bf16.xpose.msra.mxu0 0
        %2007 = vmatprep.subr.bf16.mxu0 0
        %2008 = vmatpush1.bf16.xpose.msra.mxu0 0
        %2009 = vmatprep.subr.bf16.mxu0 0
        %2010 = vmatpush1.bf16.xpose.msra.mxu0 0
        %2011 = vmatprep.subr.bf16.mxu0 0
        %2012 = vmatpush1.bf16.xpose.msra.mxu0 0
        %2013 = vmatprep.subr.bf16.mxu0 0
        %2014 = vmatpush1.bf16.xpose.msra.mxu0 0
        %2015 = vmatprep.subr.bf16.mxu0 0
        %2016 = vmatpush1.bf16.xpose.msra.mxu0 0
        %2017 = vmatprep.subr.bf16.mxu0 0
        %2018 = vmatpush1.bf16.xpose.msra.mxu0 0
        %2019 = vmatprep.subr.bf16.mxu0 0
        %2020 = vmatpush1.bf16.xpose.msra.mxu0 0
        %2021 = vmatprep.subr.bf16.mxu0 0
        %2022 = vmatpush1.bf16.xpose.msra.mxu0 0
        %2023 = vmatprep.subr.bf16.mxu0 0
        %2024 = vmatpush1.bf16.xpose.msra.mxu0 0
        %2025 = vmatprep.mubr.bf16.mxu0 0
        %2026 = vmatmul.mubr.bf16.gmra.mrb[0].mxu0 %v1988
        %v2027 = vpop.f32.mrb[0].mxu0
        %v2028 = vadd.f32 %v1077, %v2027
        %v2029 = vpop.f32.mrb[0].mxu0
        %v2030 = vpop.f32.mrb[0].mxu0
        %v2031 = vpop.f32.mrb[0].mxu0
        %2032 = vdwg.mxu0
        %v2033 = vsel %vm1079, %v2028, -inf
        %2034 = vmax.xlane.f32.xlu0 %v2033
        %v2035 = vpop.xlane.xlu0 %2034
        %v2036 = vsub.f32 %v2028, %v2035
        %v2037 = vmul.f32 %v2036, 1.442695
        %v2038 = vpow.pop %v2037
        %v2039 = vsel %vm1079, %v2038, 0.0
        %2040 = vadd.xlane.f32.xlu0 %v2039
        %v2041 = vpop.xlane.xlu0 %2040
        %v2042 = vrcp.pop %v2041
        %v2043 = vmul.f32 %v2038, %v2042
        %v2044 = vpack.c.bf16 %v2043, %v2043
        %v2046 = vsel %vm1079, %v2044, 0
        %v2049 = vsel %vm1141, %v1986, 0
        %2051 = vmatprep.subr.bf16.mxu0 0
        %2052 = vmatpush1.bf16.msra.mxu0 %v2049
        %2053 = vmatprep.subr.bf16.mxu0 0
        %2054 = vmatpush1.bf16.msra.mxu0 0
        %2055 = vmatprep.subr.bf16.mxu0 0
        %2056 = vmatpush1.bf16.msra.mxu0 0
        %2057 = vmatprep.subr.bf16.mxu0 0
        %2058 = vmatpush1.bf16.msra.mxu0 0
        %2059 = vmatprep.subr.bf16.mxu0 0
        %2060 = vmatpush1.bf16.msra.mxu0 0
        %2061 = vmatprep.subr.bf16.mxu0 0
        %2062 = vmatpush1.bf16.msra.mxu0 0
        %2063 = vmatprep.subr.bf16.mxu0 0
        %2064 = vmatpush1.bf16.msra.mxu0 0
        %2065 = vmatprep.subr.bf16.mxu0 0
        %2066 = vmatpush1.bf16.msra.mxu0 0
        %2067 = vmatprep.subr.bf16.mxu0 0
        %2068 = vmatpush1.bf16.msra.mxu0 0
        %2069 = vmatprep.subr.bf16.mxu0 0
        %2070 = vmatpush1.bf16.msra.mxu0 0
        %2071 = vmatprep.subr.bf16.mxu0 0
        %2072 = vmatpush1.bf16.msra.mxu0 0
        %2073 = vmatprep.subr.bf16.mxu0 0
        %2074 = vmatpush1.bf16.msra.mxu0 0
        %2075 = vmatprep.subr.bf16.mxu0 0
        %2076 = vmatpush1.bf16.msra.mxu0 0
        %2077 = vmatprep.subr.bf16.mxu0 0
        %2078 = vmatpush1.bf16.msra.mxu0 0
        %2079 = vmatprep.subr.bf16.mxu0 0
        %2080 = vmatpush1.bf16.msra.mxu0 0
        %2081 = vmatprep.subr.bf16.mxu0 0
        %2082 = vmatpush1.bf16.msra.mxu0 0
        %2083 = vmatprep.mubr.bf16.mxu0 0
        %2084 = vmatmul.mubr.bf16.gmra.mrb[0].mxu0 %v2046
        %v2085 = vpop.f32.mrb[0].mxu0
        %v2086 = vadd.f32 0.0, %v2085
        %v2087 = vpop.f32.mrb[0].mxu0
        %v2088 = vpop.f32.mrb[0].mxu0
        %v2089 = vpop.f32.mrb[0].mxu0
        %2090 = vdwg.mxu0
        %2092 = vrot.lane.b32.xlu0 %v1482, 8
        %v2093 = vpop.permute.xlu0 %2092
        %2096 = vrot.lane.b32.xlu0 %v1784, 16
        %v2097 = vpop.permute.xlu0 %2096
        %2100 = vrot.lane.b32.xlu0 %v2086, 24
        %v2101 = vpop.permute.xlu0 %2100
        %v2103 = vsel %vm1079, %v1180, %v2093
        %vm2104 = vcmask 130048
        %v2105 = vsel %vm2104, %v2103, %v2097
        %vm2106 = vcmask 195584
        %v2107 = vsel %vm2106, %v2105, %v2101
        %v2108 = vpack.c.bf16 %v2107, %v2107
        %v2109 = vld [vmem:[%s834] sm:$0xf]
        %v2110 = vld [vmem:[%s834 + $0x4] sm:$0xf]
        %v2111 = vld [vmem:[%s834 + $0x8] sm:$0xf]
        %v2112 = vld [vmem:[%s834 + $0xc] sm:$0xf]
        %v2113 = vld [vmem:[%s837] sm:$0x1]
        %v2115 = vlaneseq
        %v2116 = vshrl.u32 %v2115, 7
        %v2117 = vsub.s32 0, %v2116
        %v2118 = vrot.slane %v2113, %v2117
        %v2124 = vunpack.c.l.b16 %v2109
        %v2125 = vunpack.c.l.b16 %v2110
        %v2126 = vunpack.c.l.b16 %v2111
        %v2127 = vunpack.c.l.b16 %v2112
        %v2128 = vpack.c.b16 %v2125, %v2124
        %v2129 = vpack.c.b16 %v2127, %v2126
        %v2133 = vsel %vm900, %v2108, 0
        %2135 = vmatprep.subr.bf16.mxu0 0
        %2136 = vmatpush1.bf16.msra.mxu0 %v2128
        %2137 = vmatprep.subr.bf16.mxu0 0
        %2138 = vmatpush1.bf16.msra.mxu0 %v2129
        %2139 = vmatprep.subr.bf16.mxu0 0
        %2140 = vmatpush1.bf16.msra.mxu0 0
        %2141 = vmatprep.subr.bf16.mxu0 0
        %2142 = vmatpush1.bf16.msra.mxu0 0
        %2143 = vmatprep.subr.bf16.mxu0 0
        %2144 = vmatpush1.bf16.msra.mxu0 0
        %2145 = vmatprep.subr.bf16.mxu0 0
        %2146 = vmatpush1.bf16.msra.mxu0 0
        %2147 = vmatprep.subr.bf16.mxu0 0
        %2148 = vmatpush1.bf16.msra.mxu0 0
        %2149 = vmatprep.subr.bf16.mxu0 0
        %2150 = vmatpush1.bf16.msra.mxu0 0
        %2151 = vmatprep.subr.bf16.mxu0 0
        %2152 = vmatpush1.bf16.msra.mxu0 0
        %2153 = vmatprep.subr.bf16.mxu0 0
        %2154 = vmatpush1.bf16.msra.mxu0 0
        %2155 = vmatprep.subr.bf16.mxu0 0
        %2156 = vmatpush1.bf16.msra.mxu0 0
        %2157 = vmatprep.subr.bf16.mxu0 0
        %2158 = vmatpush1.bf16.msra.mxu0 0
        %2159 = vmatprep.subr.bf16.mxu0 0
        %2160 = vmatpush1.bf16.msra.mxu0 0
        %2161 = vmatprep.subr.bf16.mxu0 0
        %2162 = vmatpush1.bf16.msra.mxu0 0
        %2163 = vmatprep.subr.bf16.mxu0 0
        %2164 = vmatpush1.bf16.msra.mxu0 0
        %2165 = vmatprep.subr.bf16.mxu0 0
        %2166 = vmatpush1.bf16.msra.mxu0 0
        %2167 = vmatprep.mubr.bf16.mxu0 0
        %2168 = vmatmul.mubr.bf16.gmra.mrb[0].mxu0 %v2133
        %v2169 = vpop.f32.mrb[0].mxu0
        %v2170 = vadd.f32 %v2118, %v2169
        %v2171 = vpop.f32.mrb[0].mxu0
        %v2172 = vpop.f32.mrb[0].mxu0
        %v2173 = vpop.f32.mrb[0].mxu0
        %2174 = vdwg.mxu0
        %v2175 = vadd.f32 %v874, %v2170
        %v2176 = vld [vmem:[%s840] sm:$0x1]
        %v2177 = vld [vmem:[%s843] sm:$0x1]
        %v2178 = vsel %vm900, %v2175, 0.0
        %2179 = vadd.xlane.f32.xlu0 %v2178
        %v2180 = vpop.xlane.xlu0 %2179
        %v2181 = vrcp.pop 32.0
        %v2182 = vmul.f32 %v2180, %v2181
        %v2183 = vsub.f32 %v2175, %v2182
        %v2184 = vmul.f32 %v2183, %v2183
        %v2185 = vsel %vm900, %v2184, 0.0
        %2186 = vadd.xlane.f32.xlu0 %v2185
        %v2187 = vpop.xlane.xlu0 %2186
        %v2188 = vmul.f32 %v2187, %v2181
        %v2189 = vadd.f32 %v2188, 1e-05
        %v2190 = vrsqrt.pop %v2189
        %v2191 = vmul.f32 %v2183, %v2190
        %v2193 = vlaneseq
        %v2194 = vshrl.u32 %v2193, 7
        %v2195 = vsub.s32 0, %v2194
        %v2196 = vrot.slane %v2176, %v2195
        %v2198 = vmul.f32 %v2191, %v2196
        %v2200 = vlaneseq
        %v2201 = vshrl.u32 %v2200, 7
        %v2202 = vsub.s32 0, %v2201
        %v2203 = vrot.slane %v2177, %v2202
        %v2205 = vadd.f32 %v2198, %v2203
        %v2206 = vpack.c.bf16 %v2205, %v2205
        %v2207 = vld [vmem:[%s848] sm:$0xf]
        %v2208 = vld [vmem:[%s848 + $0x4] sm:$0xf]
        %v2209 = vld [vmem:[%s848 + $0x8] sm:$0xf]
        %v2210 = vld [vmem:[%s848 + $0xc] sm:$0xf]
        %v2211 = vld [vmem:[%s851] sm:$0x1]
        %v2213 = vlaneseq
        %v2214 = vshrl.u32 %v2213, 7
        %v2215 = vsub.s32 0, %v2214
        %v2216 = vrot.slane %v2211, %v2215
        %v2222 = vunpack.c.l.b16 %v2207
        %v2223 = vunpack.c.l.b16 %v2208
        %v2224 = vunpack.c.l.b16 %v2209
        %v2225 = vunpack.c.l.b16 %v2210
        %v2226 = vpack.c.b16 %v2223, %v2222
        %v2227 = vpack.c.b16 %v2225, %v2224
        %v2231 = vsel %vm900, %v2206, 0
        %2233 = vmatprep.subr.bf16.mxu0 0
        %2234 = vmatpush1.bf16.msra.mxu0 %v2226
        %2235 = vmatprep.subr.bf16.mxu0 0
        %2236 = vmatpush1.bf16.msra.mxu0 %v2227
        %2237 = vmatprep.subr.bf16.mxu0 0
        %2238 = vmatpush1.bf16.msra.mxu0 0
        %2239 = vmatprep.subr.bf16.mxu0 0
        %2240 = vmatpush1.bf16.msra.mxu0 0
        %2241 = vmatprep.subr.bf16.mxu0 0
        %2242 = vmatpush1.bf16.msra.mxu0 0
        %2243 = vmatprep.subr.bf16.mxu0 0
        %2244 = vmatpush1.bf16.msra.mxu0 0
        %2245 = vmatprep.subr.bf16.mxu0 0
        %2246 = vmatpush1.bf16.msra.mxu0 0
        %2247 = vmatprep.subr.bf16.mxu0 0
        %2248 = vmatpush1.bf16.msra.mxu0 0
        %2249 = vmatprep.subr.bf16.mxu0 0
        %2250 = vmatpush1.bf16.msra.mxu0 0
        %2251 = vmatprep.subr.bf16.mxu0 0
        %2252 = vmatpush1.bf16.msra.mxu0 0
        %2253 = vmatprep.subr.bf16.mxu0 0
        %2254 = vmatpush1.bf16.msra.mxu0 0
        %2255 = vmatprep.subr.bf16.mxu0 0
        %2256 = vmatpush1.bf16.msra.mxu0 0
        %2257 = vmatprep.subr.bf16.mxu0 0
        %2258 = vmatpush1.bf16.msra.mxu0 0
        %2259 = vmatprep.subr.bf16.mxu0 0
        %2260 = vmatpush1.bf16.msra.mxu0 0
        %2261 = vmatprep.subr.bf16.mxu0 0
        %2262 = vmatpush1.bf16.msra.mxu0 0
        %2263 = vmatprep.subr.bf16.mxu0 0
        %2264 = vmatpush1.bf16.msra.mxu0 0
        %2265 = vmatprep.mubr.bf16.mxu0 0
        %2266 = vmatmul.mubr.bf16.gmra.mrb[0].mxu0 %v2231
        %v2267 = vpop.f32.mrb[0].mxu0
        %v2268 = vadd.f32 %v2216, %v2267
        %v2269 = vpop.f32.mrb[0].mxu0
        %v2270 = vpop.f32.mrb[0].mxu0
        %v2271 = vpop.f32.mrb[0].mxu0
        %2272 = vdwg.mxu0
        %v2273 = vmax.f32 %v2268, 0.0
        %v2274 = vpack.c.bf16 %v2273, %v2273
        %v2275 = vld [vmem:[%s856] sm:$0xf]
        %v2276 = vld [vmem:[%s856 + $0x4] sm:$0xf]
        %v2277 = vld [vmem:[%s856 + $0x8] sm:$0xf]
        %v2278 = vld [vmem:[%s856 + $0xc] sm:$0xf]
        %v2279 = vld [vmem:[%s856 + $0x10] sm:$0xf]
        %v2280 = vld [vmem:[%s856 + $0x14] sm:$0xf]
        %v2281 = vld [vmem:[%s856 + $0x18] sm:$0xf]
        %v2282 = vld [vmem:[%s856 + $0x1c] sm:$0xf]
        %v2283 = vld [vmem:[%s856 + $0x20] sm:$0xf]
        %v2284 = vld [vmem:[%s856 + $0x24] sm:$0xf]
        %v2285 = vld [vmem:[%s856 + $0x28] sm:$0xf]
        %v2286 = vld [vmem:[%s856 + $0x2c] sm:$0xf]
        %v2287 = vld [vmem:[%s856 + $0x30] sm:$0xf]
        %v2288 = vld [vmem:[%s856 + $0x34] sm:$0xf]
        %v2289 = vld [vmem:[%s856 + $0x38] sm:$0xf]
        %v2290 = vld [vmem:[%s856 + $0x3c] sm:$0xf]
        %v2291 = vld [vmem:[%s859] sm:$0x1]
        %v2293 = vlaneseq
        %v2294 = vshrl.u32 %v2293, 7
        %v2295 = vsub.s32 0, %v2294
        %v2296 = vrot.slane %v2291, %v2295
        %v2314 = vunpack.c.l.b16 %v2275
        %v2315 = vunpack.c.l.b16 %v2276
        %v2316 = vunpack.c.l.b16 %v2277
        %v2317 = vunpack.c.l.b16 %v2278
        %v2318 = vunpack.c.l.b16 %v2279
        %v2319 = vunpack.c.l.b16 %v2280
        %v2320 = vunpack.c.l.b16 %v2281
        %v2321 = vunpack.c.l.b16 %v2282
        %v2322 = vunpack.c.l.b16 %v2283
        %v2323 = vunpack.c.l.b16 %v2284
        %v2324 = vunpack.c.l.b16 %v2285
        %v2325 = vunpack.c.l.b16 %v2286
        %v2326 = vunpack.c.l.b16 %v2287
        %v2327 = vunpack.c.l.b16 %v2288
        %v2328 = vunpack.c.l.b16 %v2289
        %v2329 = vunpack.c.l.b16 %v2290
        %v2330 = vpack.c.b16 %v2315, %v2314
        %v2331 = vpack.c.b16 %v2317, %v2316
        %v2332 = vpack.c.b16 %v2319, %v2318
        %v2333 = vpack.c.b16 %v2321, %v2320
        %v2334 = vpack.c.b16 %v2323, %v2322
        %v2335 = vpack.c.b16 %v2325, %v2324
        %v2336 = vpack.c.b16 %v2327, %v2326
        %v2337 = vpack.c.b16 %v2329, %v2328
        %2346 = vmatprep.subr.bf16.mxu0 0
        %2347 = vmatpush1.bf16.msra.mxu0 %v2330
        %2348 = vmatprep.subr.bf16.mxu0 0
        %2349 = vmatpush1.bf16.msra.mxu0 %v2331
        %2350 = vmatprep.subr.bf16.mxu0 0
        %2351 = vmatpush1.bf16.msra.mxu0 %v2332
        %2352 = vmatprep.subr.bf16.mxu0 0
        %2353 = vmatpush1.bf16.msra.mxu0 %v2333
        %2354 = vmatprep.subr.bf16.mxu0 0
        %2355 = vmatpush1.bf16.msra.mxu0 %v2334
        %2356 = vmatprep.subr.bf16.mxu0 0
        %2357 = vmatpush1.bf16.msra.mxu0 %v2335
        %2358 = vmatprep.subr.bf16.mxu0 0
        %2359 = vmatpush1.bf16.msra.mxu0 %v2336
        %2360 = vmatprep.subr.bf16.mxu0 0
        %2361 = vmatpush1.bf16.msra.mxu0 %v2337
        %2362 = vmatprep.subr.bf16.mxu0 0
        %2363 = vmatpush1.bf16.msra.mxu0 0
        %2364 = vmatprep.subr.bf16.mxu0 0
        %2365 = vmatpush1.bf16.msra.mxu0 0
        %2366 = vmatprep.subr.bf16.mxu0 0
        %2367 = vmatpush1.bf16.msra.mxu0 0
        %2368 = vmatprep.subr.bf16.mxu0 0
        %2369 = vmatpush1.bf16.msra.mxu0 0
        %2370 = vmatprep.subr.bf16.mxu0 0
        %2371 = vmatpush1.bf16.msra.mxu0 0
        %2372 = vmatprep.subr.bf16.mxu0 0
        %2373 = vmatpush1.bf16.msra.mxu0 0
        %2374 = vmatprep.subr.bf16.mxu0 0
        %2375 = vmatpush1.bf16.msra.mxu0 0
        %2376 = vmatprep.subr.bf16.mxu0 0
        %2377 = vmatpush1.bf16.msra.mxu0 0
        %2378 = vmatprep.mubr.bf16.mxu0 0
        %2379 = vmatmul.mubr.bf16.gmra.mrb[0].mxu0 %v2274
        %v2380 = vpop.f32.mrb[0].mxu0
        %v2381 = vadd.f32 %v2296, %v2380
        %v2382 = vpop.f32.mrb[0].mxu0
        %v2383 = vpop.f32.mrb[0].mxu0
        %v2384 = vpop.f32.mrb[0].mxu0
        %2385 = vdwg.mxu0
        %v2386 = vadd.f32 %v2205, %v2381
        %v2387 = vld [vmem:[%s862] sm:$0x1]
        %v2388 = vld [vmem:[%s865] sm:$0x1]
        %v2389 = vsel %vm900, %v2386, 0.0
        %2390 = vadd.xlane.f32.xlu0 %v2389
        %v2391 = vpop.xlane.xlu0 %2390
        %v2392 = vmul.f32 %v2391, %v2181
        %v2393 = vsub.f32 %v2386, %v2392
        %v2394 = vmul.f32 %v2393, %v2393
        %v2395 = vsel %vm900, %v2394, 0.0
        %2396 = vadd.xlane.f32.xlu0 %v2395
        %v2397 = vpop.xlane.xlu0 %2396
        %v2398 = vmul.f32 %v2397, %v2181
        %v2399 = vadd.f32 %v2398, 1e-05
        %v2400 = vrsqrt.pop %v2399
        %v2401 = vmul.f32 %v2393, %v2400
        %v2403 = vlaneseq
        %v2404 = vshrl.u32 %v2403, 7
        %v2405 = vsub.s32 0, %v2404
        %v2406 = vrot.slane %v2387, %v2405
        %v2408 = vmul.f32 %v2401, %v2406
        %v2410 = vlaneseq
        %v2411 = vshrl.u32 %v2410, 7
        %v2412 = vsub.s32 0, %v2411
        %v2413 = vrot.slane %v2388, %v2412
        %v2415 = vadd.f32 %v2408, %v2413
        %2416 = vst.msk [vmem:[#allocation2] sm:$0xff] %vm900, %v2415
        %p2417 = scmp.eq.s32.totalorder %s37, 1
        // Predicated region
        $region97: #{tpu_custom_call.1} parent=91 // pred_check
          %p2418 = pneg %p2417
        $region98: #{tpu_custom_call.1} parent=91 // pred_check_branch
          %2420 = sbr.rel (%p2418) target = $region100
        $region99: #{tpu_custom_call.1} parent=91 // pred_region
          %v2421 = vld [vmem:[#allocation2] sm:$0xff]
          %2422 = vst.msk [vmem:[%s795] sm:$0xff] %vm900, %v2421
        $region100: #{tpu_custom_call.1} parent=91 // pred_fallthru
          _
        %s2423 = sand.u32 %s520, 1
        %s2424 = scalar_lea.sflag [#allocation4], %s2423
        %s2425 = sand.u32 %s520, 1
        %s2426 = smul.addr %s2425, 8
        %s2427 = scalar_lea.vmem [#allocation3], %s2426
        // Predicated region
        $region101: #{tpu_custom_call.1} parent=91 // pred_check
          %p2428 = pneg %p530
        $region102: #{tpu_custom_call.1} parent=91 // pred_check_branch
          %2430 = sbr.rel (%p2428) target = $region104
        $region103: #{tpu_custom_call.1} parent=91 // pred_region
          %s2432 = ssub.s32 128, 128
          %2433 = vsyncadd %s2424, %s2432
          %s2434 = smul.addr %s36, 128
          %s2435 = scalar_lea.hbm %s18, %s2434
          %s2437 = sshll.u32 %s2427, 4
          %s2438 = int_to_ptr.vmem [resolvable:$true] %s2437
          %2440 = dma.vmem_to_hbm [thread:$0]  %s2438, 128, %s2435, %s2424
        $region104: #{tpu_custom_call.1} parent=91 // pred_fallthru
          _
      $region92: #{tpu_custom_call.1} parent=5 // pred_fallthru
        _
      %p2441 = scmp.le.s32.totalorder 2, %s27
      // Predicated region
      $region105: #{tpu_custom_call.1} parent=5 // pred_check
        %p2442 = pneg %p2441
      $region106: #{tpu_custom_call.1} parent=5 // pred_check_branch
        %2444 = sbr.rel (%p2442) target = $region108
      $region107: #{tpu_custom_call.1} parent=5 // pred_region
        %s2445 = ssub.s32 %s27, 2
        // Predicated region
        $region109: #{tpu_custom_call.1} parent=107 // pred_check
          %p2446 = pneg %p536
        $region110: #{tpu_custom_call.1} parent=107 // pred_check_branch
          %2448 = sbr.rel (%p2446) target = $region112
        $region111: #{tpu_custom_call.1} parent=107 // pred_region
          %s2449 = sand.u32 %s521, 1
          %s2450 = scalar_lea.sflag [#allocation4], %s2449
          %s2451 = sand.u32 %s521, 1
          %s2452 = smul.addr %s2451, 8
          %s2453 = scalar_lea.vmem [#allocation3], %s2452
          %2454 = dma.done %s2450, 128
        $region112: #{tpu_custom_call.1} parent=107 // pred_fallthru
          _
      $region108: #{tpu_custom_call.1} parent=5 // pred_fallthru
        _
    $region6: #{tpu_custom_call.1} parent=1 // loop_footer
      %s31 = sadd.s32 1, %s27
    $region7: #{tpu_custom_call.1} parent=1 // loop_footer_branch
      %26 = sbr.rel target = $region3
    $region8: #{tpu_custom_call.1} parent=1 // loop_exit
      _
    %2455 = vsyncpa [#allocation4], 1
    %s2456 = scalar_lea.sflag [#allocation4], 1
    %2457 = vsyncpa %s2456, 1

</llo_original>
